<compile_context>
chip_gen: v7x
topology: tpu7x:2x2x1
jax: 0.10.0
libtpu: 0.0.40
codegen_flags: <defaults>
</compile_context>

<pallas_src>
import functools
import math

import jax
import jax.numpy as jnp
from jax import lax
from jax.experimental import pallas as pl
from jax.experimental.pallas import tpu as pltpu


# ---------------------------------------------------------------------------
# Fused kernel: depthwise conv + GroupNorm + 1x1 convs + GELU + shortcut + add
# ---------------------------------------------------------------------------
def convnext_fused_kernel(x_ref, dww_ref, msk_ref, dwb_ref, gnw_ref, gnb_ref,
                          w1t_ref, b1_ref, w2t_ref, b2_ref, wst_ref, bs_ref,
                          o_ref, *, H, W, K):
    HW = H * W
    pad = K // 2
    x = x_ref[0]                                    # (C, H*W) f32, one image

    # --- depthwise KxK conv ('same' padding) via lane rolls + border masks --
    acc = jnp.zeros_like(x)
    for kh in range(K):
        for kw in range(K):
            t = kh * K + kw
            s = (kh - pad) * W + (kw - pad)         # flattened-pixel shift
            shifted = pltpu.roll(x, shift=(-s) % HW, axis=1)   # shifted[c,p] = x[c,p+s]
            acc = acc + shifted * msk_ref[t] * dww_ref[t]      # (C,HW)*(1,HW)*(C,1)
    acc = acc + dwb_ref[...]                        # (C,1) conv bias

    # --- GroupNorm(num_groups=1): normalize over (C,H,W) per sample ---------
    mean = jnp.mean(acc)
    var = jnp.mean((acc - mean) ** 2)               # biased variance (PyTorch)
    g = (acc - mean) * lax.rsqrt(var + 1e-5) * gnw_ref[...] + gnb_ref[...]

    # --- pointwise path: bf16-in / f32-acc matmuls on the MXU ---------------
    h = jnp.dot(w1t_ref[...], g.astype(jnp.bfloat16),
                preferred_element_type=jnp.float32) + b1_ref[...]
    h = 0.5 * h * (1.0 + lax.erf(h * 0.7071067811865476))       # exact GELU
    res = jnp.dot(w2t_ref[...], h.astype(jnp.bfloat16),
                  preferred_element_type=jnp.float32) + b2_ref[...]
    sc = jnp.dot(wst_ref[...], x.astype(jnp.bfloat16),
                 preferred_element_type=jnp.float32) + bs_ref[...]
    o_ref[0] = res + sc                             # lane-dense (Cout, H*W) store


# ---------------------------------------------------------------------------
# Wrapper
# ---------------------------------------------------------------------------
def convnext_block(x_nchw, params, *, kernel_size=7):
    (dw_w, dw_b, gn_w, gn_b, w1, b1, w2, b2, ws, bs) = params
    N, C, H, W = x_nchw.shape
    D = w1.shape[1]
    Cout = w2.shape[1]
    K = kernel_size
    pad = K // 2
    HW = H * W

    # Free reshape: NCHW -> (N, C, H*W).  No transpose, no padding pass.
    x2 = x_nchw.reshape(N, C, HW).astype(jnp.float32)

    # Per-tap depthwise weights (K*K, C, 1) and 'same'-padding masks (K*K, 1, HW).
    dwr = jnp.transpose(dw_w.reshape(C, K * K), (1, 0)).reshape(K * K, C, 1)
    dwr = dwr.astype(jnp.float32)
    hh = jnp.arange(H)[:, None]
    ww = jnp.arange(W)[None, :]
    masks = []
    for kh in range(K):
        dy = kh - pad
        row_ok = (hh + dy >= 0) & (hh + dy < H)
        for kw in range(K):
            dx = kw - pad
            col_ok = (ww + dx >= 0) & (ww + dx < W)
            masks.append((row_ok & col_ok).reshape(1, HW))
    masks = jnp.stack(masks, axis=0).astype(jnp.float32)        # (K*K, 1, HW)

    # bf16 weights for the MXU matmuls (accumulation stays f32 in-kernel).
    w1t = jnp.transpose(w1).astype(jnp.bfloat16)                # (D, C)
    w2t = jnp.transpose(w2).astype(jnp.bfloat16)                # (Cout, D)
    wst = jnp.transpose(ws).astype(jnp.bfloat16)                # (Cout, C)

    dwb2 = dw_b.reshape(C, 1).astype(jnp.float32)
    gnw2 = gn_w.reshape(C, 1).astype(jnp.float32)
    gnb2 = gn_b.reshape(C, 1).astype(jnp.float32)
    b12 = b1.reshape(D, 1).astype(jnp.float32)
    b22 = b2.reshape(Cout, 1).astype(jnp.float32)
    bs2 = bs.reshape(Cout, 1).astype(jnp.float32)

    out3 = pl.pallas_call(
        functools.partial(convnext_fused_kernel, H=H, W=W, K=K),
        out_shape=jax.ShapeDtypeStruct((N, Cout, HW), jnp.float32),
        grid=(N,),
        in_specs=[
            pl.BlockSpec((1, C, HW), lambda n: (n, 0, 0)),       # x (one image)
            pl.BlockSpec((K * K, C, 1), lambda n: (0, 0, 0)),    # dw weights (resident)
            pl.BlockSpec((K * K, 1, HW), lambda n: (0, 0, 0)),   # border masks (resident)
            pl.BlockSpec((C, 1), lambda n: (0, 0)),              # dw bias
            pl.BlockSpec((C, 1), lambda n: (0, 0)),              # gn weight
            pl.BlockSpec((C, 1), lambda n: (0, 0)),              # gn bias
            pl.BlockSpec((D, C), lambda n: (0, 0)),              # W1^T (bf16)
            pl.BlockSpec((D, 1), lambda n: (0, 0)),              # b1
            pl.BlockSpec((Cout, D), lambda n: (0, 0)),           # W2^T (bf16)
            pl.BlockSpec((Cout, 1), lambda n: (0, 0)),           # b2
            pl.BlockSpec((Cout, C), lambda n: (0, 0)),           # Ws^T (bf16)
            pl.BlockSpec((Cout, 1), lambda n: (0, 0)),           # bs
        ],
        out_specs=pl.BlockSpec((1, Cout, HW), lambda n: (n, 0, 0)),
        compiler_params=pltpu.CompilerParams(dimension_semantics=("parallel",)),
    )(x2, dwr, masks, dwb2, gnw2, gnb2, w1t, b12, w2t, b22, wst, bs2)

    # Free reshape back to NCHW.
    return out3.reshape(N, Cout, H, W)


# ---------------------------------------------------------------------------
# Pure-JAX reference (for sanity checking the Pallas kernel)
# ---------------------------------------------------------------------------
def convnext_block_ref(x_nchw, params, *, kernel_size=7):
    (dw_w, dw_b, gn_w, gn_b, w1, b1, w2, b2, ws, bs) = params
    N, C, H, W = x_nchw.shape
    prec = lax.Precision.HIGHEST
    dw_oihw = dw_w[:, None, :, :]                   # (C,1,K,K)
    y = lax.conv_general_dilated(
        x_nchw, dw_oihw, (1, 1), "SAME", feature_group_count=C,
        dimension_numbers=("NCHW", "OIHW", "NCHW"),
        precision=prec) + dw_b[None, :, None, None]
    mean = y.mean(axis=(1, 2, 3), keepdims=True)
    var = ((y - mean) ** 2).mean(axis=(1, 2, 3), keepdims=True)
    g = (y - mean) / jnp.sqrt(var + 1e-5) * gn_w[None, :, None, None] + gn_b[None, :, None, None]
    h = jnp.einsum("nchw,cd->ndhw", g, w1, precision=prec) + b1[None, :, None, None]
    h = 0.5 * h * (1.0 + lax.erf(h / math.sqrt(2.0)))
    res = jnp.einsum("ndhw,do->nohw", h, w2, precision=prec) + b2[None, :, None, None]
    sc = jnp.einsum("nchw,co->nohw", x_nchw, ws, precision=prec) + bs[None, :, None, None]
    return res + sc


# ---------------------------------------------------------------------------
if __name__ == "__main__":
    # Small shapes consistent with the module's forward.
    N, C_in, H, W = 2, 4, 16, 16
    C_out = 8
    K = 7
    expansion = 4
    D = C_in * expansion

    key = jax.random.PRNGKey(0)
    ks = jax.random.split(key, 11)
    s = 0.1
    dw_w = (jax.random.normal(ks[0], (C_in, K, K)) * s).astype(jnp.float32)
    dw_b = (jax.random.normal(ks[1], (C_in,)) * s).astype(jnp.float32)
    gn_w = (1.0 + jax.random.normal(ks[2], (C_in,)) * s).astype(jnp.float32)
    gn_b = (jax.random.normal(ks[3], (C_in,)) * s).astype(jnp.float32)
    w1 = (jax.random.normal(ks[4], (C_in, D)) * s).astype(jnp.float32)
    b1 = (jax.random.normal(ks[5], (D,)) * s).astype(jnp.float32)
    w2 = (jax.random.normal(ks[6], (D, C_out)) * s).astype(jnp.float32)
    b2 = (jax.random.normal(ks[7], (C_out,)) * s).astype(jnp.float32)
    ws = (jax.random.normal(ks[8], (C_in, C_out)) * s).astype(jnp.float32)
    bs = (jax.random.normal(ks[9], (C_out,)) * s).astype(jnp.float32)
    params = (dw_w, dw_b, gn_w, gn_b, w1, b1, w2, b2, ws, bs)

    x = jax.random.normal(ks[10], (N, C_in, H, W), dtype=jnp.float32)

    out = jax.jit(functools.partial(convnext_block, kernel_size=K))(x, params)
    out = jax.block_until_ready(out)

    ref = convnext_block_ref(x, params, kernel_size=K)
    assert out.shape == (N, C_out, H, W), out.shape
    # bf16 matmul inputs (f32 accumulation) -> tolerance loosened vs f32-HIGHEST ref.
    assert jnp.allclose(out, ref, atol=3e-2, rtol=3e-2), float(jnp.max(jnp.abs(out - ref)))

    print("KERNEL_OK")
</pallas_src>

<mosaic_0001>
module attributes {stable_mosaic.version = 11 : i64} {
  func.func @convnext_fused_kernel(%arg0: i32, %arg1: memref<1x4x256xf32, #tpu.memory_space<vmem>>, %arg2: memref<49x4x1xf32, #tpu.memory_space<vmem>>, %arg3: memref<49x1x256xf32, #tpu.memory_space<vmem>>, %arg4: memref<4x1xf32, #tpu.memory_space<vmem>>, %arg5: memref<4x1xf32, #tpu.memory_space<vmem>>, %arg6: memref<4x1xf32, #tpu.memory_space<vmem>>, %arg7: memref<16x4xbf16, #tpu.memory_space<vmem>>, %arg8: memref<16x1xf32, #tpu.memory_space<vmem>>, %arg9: memref<8x16xbf16, #tpu.memory_space<vmem>>, %arg10: memref<8x1xf32, #tpu.memory_space<vmem>>, %arg11: memref<8x4xbf16, #tpu.memory_space<vmem>>, %arg12: memref<8x1xf32, #tpu.memory_space<vmem>>, %arg13: memref<1x8x256xf32, #tpu.memory_space<vmem>>) attributes {dimension_semantics = [#tpu.dimension_semantics<parallel>], iteration_bounds = array<i64: 2>, scalar_prefetch = 0 : i64, scratch_operands = 0 : i64, tpu.core_type = #tpu.core_type<tc>, window_params = [{transform_indices = @transform_0, window_bounds = array<i64: 1, 4, 256>}, {pipeline_mode = #tpu.pipeline_mode<synchronous>, transform_indices = @transform_1, window_bounds = array<i64: 49, 4, 1>}, {pipeline_mode = #tpu.pipeline_mode<synchronous>, transform_indices = @transform_2, window_bounds = array<i64: 49, 1, 256>}, {pipeline_mode = #tpu.pipeline_mode<synchronous>, transform_indices = @transform_3, window_bounds = array<i64: 4, 1>}, {pipeline_mode = #tpu.pipeline_mode<synchronous>, transform_indices = @transform_4, window_bounds = array<i64: 4, 1>}, {pipeline_mode = #tpu.pipeline_mode<synchronous>, transform_indices = @transform_5, window_bounds = array<i64: 4, 1>}, {pipeline_mode = #tpu.pipeline_mode<synchronous>, transform_indices = @transform_6, window_bounds = array<i64: 16, 4>}, {pipeline_mode = #tpu.pipeline_mode<synchronous>, transform_indices = @transform_7, window_bounds = array<i64: 16, 1>}, {pipeline_mode = #tpu.pipeline_mode<synchronous>, transform_indices = @transform_8, window_bounds = array<i64: 8, 16>}, {pipeline_mode = #tpu.pipeline_mode<synchronous>, transform_indices = @transform_9, window_bounds = array<i64: 8, 1>}, {pipeline_mode = #tpu.pipeline_mode<synchronous>, transform_indices = @transform_10, window_bounds = array<i64: 8, 4>}, {pipeline_mode = #tpu.pipeline_mode<synchronous>, transform_indices = @transform_11, window_bounds = array<i64: 8, 1>}, {transform_indices = @transform_12, window_bounds = array<i64: 1, 8, 256>}]} {
    %c0 = arith.constant 0 : index
    %c0_0 = arith.constant 0 : index
    %c0_1 = arith.constant 0 : index
    %0 = vector.load %arg1[%c0, %c0_0, %c0_1] : memref<1x4x256xf32, #tpu.memory_space<vmem>>, vector<1x4x256xf32>
    %1 = vector.shape_cast %0 : vector<1x4x256xf32> to vector<4x256xf32>
    %cst = arith.constant 0.000000e+00 : f32
    %2 = vector.broadcast %cst : f32 to vector<4x256xf32>
    %c51_i32 = arith.constant 51 : i32
    %3 = tpu.dynamic_rotate %1 by %c51_i32 dim 1 : vector<4x256xf32>, i32 -> vector<4x256xf32>
    %c0_2 = arith.constant 0 : index
    %c0_3 = arith.constant 0 : index
    %c0_4 = arith.constant 0 : index
    %4 = vector.load %arg3[%c0_2, %c0_3, %c0_4] : memref<49x1x256xf32, #tpu.memory_space<vmem>>, vector<1x1x256xf32>
    %5 = vector.shape_cast %4 : vector<1x1x256xf32> to vector<1x256xf32>
    %6 = vector.broadcast %5 : vector<1x256xf32> to vector<4x256xf32>
    %7 = arith.mulf %3, %6 : vector<4x256xf32>
    %c0_5 = arith.constant 0 : index
    %c0_6 = arith.constant 0 : index
    %c0_7 = arith.constant 0 : index
    %8 = vector.load %arg2[%c0_5, %c0_6, %c0_7] : memref<49x4x1xf32, #tpu.memory_space<vmem>>, vector<1x4x1xf32>
    %9 = vector.shape_cast %8 : vector<1x4x1xf32> to vector<4x1xf32>
    %10 = vector.broadcast %9 : vector<4x1xf32> to vector<4x256xf32>
    %11 = arith.mulf %7, %10 : vector<4x256xf32>
    %12 = arith.addf %2, %11 : vector<4x256xf32>
    %c50_i32 = arith.constant 50 : i32
    %13 = tpu.dynamic_rotate %1 by %c50_i32 dim 1 : vector<4x256xf32>, i32 -> vector<4x256xf32>
    %c1 = arith.constant 1 : index
    %c0_8 = arith.constant 0 : index
    %c0_9 = arith.constant 0 : index
    %14 = vector.load %arg3[%c1, %c0_8, %c0_9] : memref<49x1x256xf32, #tpu.memory_space<vmem>>, vector<1x1x256xf32>
    %15 = vector.shape_cast %14 : vector<1x1x256xf32> to vector<1x256xf32>
    %16 = vector.broadcast %15 : vector<1x256xf32> to vector<4x256xf32>
    %17 = arith.mulf %13, %16 : vector<4x256xf32>
    %c1_10 = arith.constant 1 : index
    %c0_11 = arith.constant 0 : index
    %c0_12 = arith.constant 0 : index
    %18 = vector.load %arg2[%c1_10, %c0_11, %c0_12] : memref<49x4x1xf32, #tpu.memory_space<vmem>>, vector<1x4x1xf32>
    %19 = vector.shape_cast %18 : vector<1x4x1xf32> to vector<4x1xf32>
    %20 = vector.broadcast %19 : vector<4x1xf32> to vector<4x256xf32>
    %21 = arith.mulf %17, %20 : vector<4x256xf32>
    %22 = arith.addf %12, %21 : vector<4x256xf32>
    %c49_i32 = arith.constant 49 : i32
    %23 = tpu.dynamic_rotate %1 by %c49_i32 dim 1 : vector<4x256xf32>, i32 -> vector<4x256xf32>
    %c2 = arith.constant 2 : index
    %c0_13 = arith.constant 0 : index
    %c0_14 = arith.constant 0 : index
    %24 = vector.load %arg3[%c2, %c0_13, %c0_14] : memref<49x1x256xf32, #tpu.memory_space<vmem>>, vector<1x1x256xf32>
    %25 = vector.shape_cast %24 : vector<1x1x256xf32> to vector<1x256xf32>
    %26 = vector.broadcast %25 : vector<1x256xf32> to vector<4x256xf32>
    %27 = arith.mulf %23, %26 : vector<4x256xf32>
    %c2_15 = arith.constant 2 : index
    %c0_16 = arith.constant 0 : index
    %c0_17 = arith.constant 0 : index
    %28 = vector.load %arg2[%c2_15, %c0_16, %c0_17] : memref<49x4x1xf32, #tpu.memory_space<vmem>>, vector<1x4x1xf32>
    %29 = vector.shape_cast %28 : vector<1x4x1xf32> to vector<4x1xf32>
    %30 = vector.broadcast %29 : vector<4x1xf32> to vector<4x256xf32>
    %31 = arith.mulf %27, %30 : vector<4x256xf32>
    %32 = arith.addf %22, %31 : vector<4x256xf32>
    %c48_i32 = arith.constant 48 : i32
    %33 = tpu.dynamic_rotate %1 by %c48_i32 dim 1 : vector<4x256xf32>, i32 -> vector<4x256xf32>
    %c3 = arith.constant 3 : index
    %c0_18 = arith.constant 0 : index
    %c0_19 = arith.constant 0 : index
    %34 = vector.load %arg3[%c3, %c0_18, %c0_19] : memref<49x1x256xf32, #tpu.memory_space<vmem>>, vector<1x1x256xf32>
    %35 = vector.shape_cast %34 : vector<1x1x256xf32> to vector<1x256xf32>
    %36 = vector.broadcast %35 : vector<1x256xf32> to vector<4x256xf32>
    %37 = arith.mulf %33, %36 : vector<4x256xf32>
    %c3_20 = arith.constant 3 : index
    %c0_21 = arith.constant 0 : index
    %c0_22 = arith.constant 0 : index
    %38 = vector.load %arg2[%c3_20, %c0_21, %c0_22] : memref<49x4x1xf32, #tpu.memory_space<vmem>>, vector<1x4x1xf32>
    %39 = vector.shape_cast %38 : vector<1x4x1xf32> to vector<4x1xf32>
    %40 = vector.broadcast %39 : vector<4x1xf32> to vector<4x256xf32>
    %41 = arith.mulf %37, %40 : vector<4x256xf32>
    %42 = arith.addf %32, %41 : vector<4x256xf32>
    %c47_i32 = arith.constant 47 : i32
    %43 = tpu.dynamic_rotate %1 by %c47_i32 dim 1 : vector<4x256xf32>, i32 -> vector<4x256xf32>
    %c4 = arith.constant 4 : index
    %c0_23 = arith.constant 0 : index
    %c0_24 = arith.constant 0 : index
    %44 = vector.load %arg3[%c4, %c0_23, %c0_24] : memref<49x1x256xf32, #tpu.memory_space<vmem>>, vector<1x1x256xf32>
    %45 = vector.shape_cast %44 : vector<1x1x256xf32> to vector<1x256xf32>
    %46 = vector.broadcast %45 : vector<1x256xf32> to vector<4x256xf32>
    %47 = arith.mulf %43, %46 : vector<4x256xf32>
    %c4_25 = arith.constant 4 : index
    %c0_26 = arith.constant 0 : index
    %c0_27 = arith.constant 0 : index
    %48 = vector.load %arg2[%c4_25, %c0_26, %c0_27] : memref<49x4x1xf32, #tpu.memory_space<vmem>>, vector<1x4x1xf32>
    %49 = vector.shape_cast %48 : vector<1x4x1xf32> to vector<4x1xf32>
    %50 = vector.broadcast %49 : vector<4x1xf32> to vector<4x256xf32>
    %51 = arith.mulf %47, %50 : vector<4x256xf32>
    %52 = arith.addf %42, %51 : vector<4x256xf32>
    %c46_i32 = arith.constant 46 : i32
    %53 = tpu.dynamic_rotate %1 by %c46_i32 dim 1 : vector<4x256xf32>, i32 -> vector<4x256xf32>
    %c5 = arith.constant 5 : index
    %c0_28 = arith.constant 0 : index
    %c0_29 = arith.constant 0 : index
    %54 = vector.load %arg3[%c5, %c0_28, %c0_29] : memref<49x1x256xf32, #tpu.memory_space<vmem>>, vector<1x1x256xf32>
    %55 = vector.shape_cast %54 : vector<1x1x256xf32> to vector<1x256xf32>
    %56 = vector.broadcast %55 : vector<1x256xf32> to vector<4x256xf32>
    %57 = arith.mulf %53, %56 : vector<4x256xf32>
    %c5_30 = arith.constant 5 : index
    %c0_31 = arith.constant 0 : index
    %c0_32 = arith.constant 0 : index
    %58 = vector.load %arg2[%c5_30, %c0_31, %c0_32] : memref<49x4x1xf32, #tpu.memory_space<vmem>>, vector<1x4x1xf32>
    %59 = vector.shape_cast %58 : vector<1x4x1xf32> to vector<4x1xf32>
    %60 = vector.broadcast %59 : vector<4x1xf32> to vector<4x256xf32>
    %61 = arith.mulf %57, %60 : vector<4x256xf32>
    %62 = arith.addf %52, %61 : vector<4x256xf32>
    %c45_i32 = arith.constant 45 : i32
    %63 = tpu.dynamic_rotate %1 by %c45_i32 dim 1 : vector<4x256xf32>, i32 -> vector<4x256xf32>
    %c6 = arith.constant 6 : index
    %c0_33 = arith.constant 0 : index
    %c0_34 = arith.constant 0 : index
    %64 = vector.load %arg3[%c6, %c0_33, %c0_34] : memref<49x1x256xf32, #tpu.memory_space<vmem>>, vector<1x1x256xf32>
    %65 = vector.shape_cast %64 : vector<1x1x256xf32> to vector<1x256xf32>
    %66 = vector.broadcast %65 : vector<1x256xf32> to vector<4x256xf32>
    %67 = arith.mulf %63, %66 : vector<4x256xf32>
    %c6_35 = arith.constant 6 : index
    %c0_36 = arith.constant 0 : index
    %c0_37 = arith.constant 0 : index
    %68 = vector.load %arg2[%c6_35, %c0_36, %c0_37] : memref<49x4x1xf32, #tpu.memory_space<vmem>>, vector<1x4x1xf32>
    %69 = vector.shape_cast %68 : vector<1x4x1xf32> to vector<4x1xf32>
    %70 = vector.broadcast %69 : vector<4x1xf32> to vector<4x256xf32>
    %71 = arith.mulf %67, %70 : vector<4x256xf32>
    %72 = arith.addf %62, %71 : vector<4x256xf32>
    %c35_i32 = arith.constant 35 : i32
    %73 = tpu.dynamic_rotate %1 by %c35_i32 dim 1 : vector<4x256xf32>, i32 -> vector<4x256xf32>
    %c7 = arith.constant 7 : index
    %c0_38 = arith.constant 0 : index
    %c0_39 = arith.constant 0 : index
    %74 = vector.load %arg3[%c7, %c0_38, %c0_39] : memref<49x1x256xf32, #tpu.memory_space<vmem>>, vector<1x1x256xf32>
    %75 = vector.shape_cast %74 : vector<1x1x256xf32> to vector<1x256xf32>
    %76 = vector.broadcast %75 : vector<1x256xf32> to vector<4x256xf32>
    %77 = arith.mulf %73, %76 : vector<4x256xf32>
    %c7_40 = arith.constant 7 : index
    %c0_41 = arith.constant 0 : index
    %c0_42 = arith.constant 0 : index
    %78 = vector.load %arg2[%c7_40, %c0_41, %c0_42] : memref<49x4x1xf32, #tpu.memory_space<vmem>>, vector<1x4x1xf32>
    %79 = vector.shape_cast %78 : vector<1x4x1xf32> to vector<4x1xf32>
    %80 = vector.broadcast %79 : vector<4x1xf32> to vector<4x256xf32>
    %81 = arith.mulf %77, %80 : vector<4x256xf32>
    %82 = arith.addf %72, %81 : vector<4x256xf32>
    %c34_i32 = arith.constant 34 : i32
    %83 = tpu.dynamic_rotate %1 by %c34_i32 dim 1 : vector<4x256xf32>, i32 -> vector<4x256xf32>
    %c8 = arith.constant 8 : index
    %c0_43 = arith.constant 0 : index
    %c0_44 = arith.constant 0 : index
    %84 = vector.load %arg3[%c8, %c0_43, %c0_44] : memref<49x1x256xf32, #tpu.memory_space<vmem>>, vector<1x1x256xf32>
    %85 = vector.shape_cast %84 : vector<1x1x256xf32> to vector<1x256xf32>
    %86 = vector.broadcast %85 : vector<1x256xf32> to vector<4x256xf32>
    %87 = arith.mulf %83, %86 : vector<4x256xf32>
    %c8_45 = arith.constant 8 : index
    %c0_46 = arith.constant 0 : index
    %c0_47 = arith.constant 0 : index
    %88 = vector.load %arg2[%c8_45, %c0_46, %c0_47] : memref<49x4x1xf32, #tpu.memory_space<vmem>>, vector<1x4x1xf32>
    %89 = vector.shape_cast %88 : vector<1x4x1xf32> to vector<4x1xf32>
    %90 = vector.broadcast %89 : vector<4x1xf32> to vector<4x256xf32>
    %91 = arith.mulf %87, %90 : vector<4x256xf32>
    %92 = arith.addf %82, %91 : vector<4x256xf32>
    %c33_i32 = arith.constant 33 : i32
    %93 = tpu.dynamic_rotate %1 by %c33_i32 dim 1 : vector<4x256xf32>, i32 -> vector<4x256xf32>
    %c9 = arith.constant 9 : index
    %c0_48 = arith.constant 0 : index
    %c0_49 = arith.constant 0 : index
    %94 = vector.load %arg3[%c9, %c0_48, %c0_49] : memref<49x1x256xf32, #tpu.memory_space<vmem>>, vector<1x1x256xf32>
    %95 = vector.shape_cast %94 : vector<1x1x256xf32> to vector<1x256xf32>
    %96 = vector.broadcast %95 : vector<1x256xf32> to vector<4x256xf32>
    %97 = arith.mulf %93, %96 : vector<4x256xf32>
    %c9_50 = arith.constant 9 : index
    %c0_51 = arith.constant 0 : index
    %c0_52 = arith.constant 0 : index
    %98 = vector.load %arg2[%c9_50, %c0_51, %c0_52] : memref<49x4x1xf32, #tpu.memory_space<vmem>>, vector<1x4x1xf32>
    %99 = vector.shape_cast %98 : vector<1x4x1xf32> to vector<4x1xf32>
    %100 = vector.broadcast %99 : vector<4x1xf32> to vector<4x256xf32>
    %101 = arith.mulf %97, %100 : vector<4x256xf32>
    %102 = arith.addf %92, %101 : vector<4x256xf32>
    %c32_i32 = arith.constant 32 : i32
    %103 = tpu.dynamic_rotate %1 by %c32_i32 dim 1 : vector<4x256xf32>, i32 -> vector<4x256xf32>
    %c10 = arith.constant 10 : index
    %c0_53 = arith.constant 0 : index
    %c0_54 = arith.constant 0 : index
    %104 = vector.load %arg3[%c10, %c0_53, %c0_54] : memref<49x1x256xf32, #tpu.memory_space<vmem>>, vector<1x1x256xf32>
    %105 = vector.shape_cast %104 : vector<1x1x256xf32> to vector<1x256xf32>
    %106 = vector.broadcast %105 : vector<1x256xf32> to vector<4x256xf32>
    %107 = arith.mulf %103, %106 : vector<4x256xf32>
    %c10_55 = arith.constant 10 : index
    %c0_56 = arith.constant 0 : index
    %c0_57 = arith.constant 0 : index
    %108 = vector.load %arg2[%c10_55, %c0_56, %c0_57] : memref<49x4x1xf32, #tpu.memory_space<vmem>>, vector<1x4x1xf32>
    %109 = vector.shape_cast %108 : vector<1x4x1xf32> to vector<4x1xf32>
    %110 = vector.broadcast %109 : vector<4x1xf32> to vector<4x256xf32>
    %111 = arith.mulf %107, %110 : vector<4x256xf32>
    %112 = arith.addf %102, %111 : vector<4x256xf32>
    %c31_i32 = arith.constant 31 : i32
    %113 = tpu.dynamic_rotate %1 by %c31_i32 dim 1 : vector<4x256xf32>, i32 -> vector<4x256xf32>
    %c11 = arith.constant 11 : index
    %c0_58 = arith.constant 0 : index
    %c0_59 = arith.constant 0 : index
    %114 = vector.load %arg3[%c11, %c0_58, %c0_59] : memref<49x1x256xf32, #tpu.memory_space<vmem>>, vector<1x1x256xf32>
    %115 = vector.shape_cast %114 : vector<1x1x256xf32> to vector<1x256xf32>
    %116 = vector.broadcast %115 : vector<1x256xf32> to vector<4x256xf32>
    %117 = arith.mulf %113, %116 : vector<4x256xf32>
    %c11_60 = arith.constant 11 : index
    %c0_61 = arith.constant 0 : index
    %c0_62 = arith.constant 0 : index
    %118 = vector.load %arg2[%c11_60, %c0_61, %c0_62] : memref<49x4x1xf32, #tpu.memory_space<vmem>>, vector<1x4x1xf32>
    %119 = vector.shape_cast %118 : vector<1x4x1xf32> to vector<4x1xf32>
    %120 = vector.broadcast %119 : vector<4x1xf32> to vector<4x256xf32>
    %121 = arith.mulf %117, %120 : vector<4x256xf32>
    %122 = arith.addf %112, %121 : vector<4x256xf32>
    %c30_i32 = arith.constant 30 : i32
    %123 = tpu.dynamic_rotate %1 by %c30_i32 dim 1 : vector<4x256xf32>, i32 -> vector<4x256xf32>
    %c12 = arith.constant 12 : index
    %c0_63 = arith.constant 0 : index
    %c0_64 = arith.constant 0 : index
    %124 = vector.load %arg3[%c12, %c0_63, %c0_64] : memref<49x1x256xf32, #tpu.memory_space<vmem>>, vector<1x1x256xf32>
    %125 = vector.shape_cast %124 : vector<1x1x256xf32> to vector<1x256xf32>
    %126 = vector.broadcast %125 : vector<1x256xf32> to vector<4x256xf32>
    %127 = arith.mulf %123, %126 : vector<4x256xf32>
    %c12_65 = arith.constant 12 : index
    %c0_66 = arith.constant 0 : index
    %c0_67 = arith.constant 0 : index
    %128 = vector.load %arg2[%c12_65, %c0_66, %c0_67] : memref<49x4x1xf32, #tpu.memory_space<vmem>>, vector<1x4x1xf32>
    %129 = vector.shape_cast %128 : vector<1x4x1xf32> to vector<4x1xf32>
    %130 = vector.broadcast %129 : vector<4x1xf32> to vector<4x256xf32>
    %131 = arith.mulf %127, %130 : vector<4x256xf32>
    %132 = arith.addf %122, %131 : vector<4x256xf32>
    %c29_i32 = arith.constant 29 : i32
    %133 = tpu.dynamic_rotate %1 by %c29_i32 dim 1 : vector<4x256xf32>, i32 -> vector<4x256xf32>
    %c13 = arith.constant 13 : index
    %c0_68 = arith.constant 0 : index
    %c0_69 = arith.constant 0 : index
    %134 = vector.load %arg3[%c13, %c0_68, %c0_69] : memref<49x1x256xf32, #tpu.memory_space<vmem>>, vector<1x1x256xf32>
    %135 = vector.shape_cast %134 : vector<1x1x256xf32> to vector<1x256xf32>
    %136 = vector.broadcast %135 : vector<1x256xf32> to vector<4x256xf32>
    %137 = arith.mulf %133, %136 : vector<4x256xf32>
    %c13_70 = arith.constant 13 : index
    %c0_71 = arith.constant 0 : index
    %c0_72 = arith.constant 0 : index
    %138 = vector.load %arg2[%c13_70, %c0_71, %c0_72] : memref<49x4x1xf32, #tpu.memory_space<vmem>>, vector<1x4x1xf32>
    %139 = vector.shape_cast %138 : vector<1x4x1xf32> to vector<4x1xf32>
    %140 = vector.broadcast %139 : vector<4x1xf32> to vector<4x256xf32>
    %141 = arith.mulf %137, %140 : vector<4x256xf32>
    %142 = arith.addf %132, %141 : vector<4x256xf32>
    %c19_i32 = arith.constant 19 : i32
    %143 = tpu.dynamic_rotate %1 by %c19_i32 dim 1 : vector<4x256xf32>, i32 -> vector<4x256xf32>
    %c14 = arith.constant 14 : index
    %c0_73 = arith.constant 0 : index
    %c0_74 = arith.constant 0 : index
    %144 = vector.load %arg3[%c14, %c0_73, %c0_74] : memref<49x1x256xf32, #tpu.memory_space<vmem>>, vector<1x1x256xf32>
    %145 = vector.shape_cast %144 : vector<1x1x256xf32> to vector<1x256xf32>
    %146 = vector.broadcast %145 : vector<1x256xf32> to vector<4x256xf32>
    %147 = arith.mulf %143, %146 : vector<4x256xf32>
    %c14_75 = arith.constant 14 : index
    %c0_76 = arith.constant 0 : index
    %c0_77 = arith.constant 0 : index
    %148 = vector.load %arg2[%c14_75, %c0_76, %c0_77] : memref<49x4x1xf32, #tpu.memory_space<vmem>>, vector<1x4x1xf32>
    %149 = vector.shape_cast %148 : vector<1x4x1xf32> to vector<4x1xf32>
    %150 = vector.broadcast %149 : vector<4x1xf32> to vector<4x256xf32>
    %151 = arith.mulf %147, %150 : vector<4x256xf32>
    %152 = arith.addf %142, %151 : vector<4x256xf32>
    %c18_i32 = arith.constant 18 : i32
    %153 = tpu.dynamic_rotate %1 by %c18_i32 dim 1 : vector<4x256xf32>, i32 -> vector<4x256xf32>
    %c15 = arith.constant 15 : index
    %c0_78 = arith.constant 0 : index
    %c0_79 = arith.constant 0 : index
    %154 = vector.load %arg3[%c15, %c0_78, %c0_79] : memref<49x1x256xf32, #tpu.memory_space<vmem>>, vector<1x1x256xf32>
    %155 = vector.shape_cast %154 : vector<1x1x256xf32> to vector<1x256xf32>
    %156 = vector.broadcast %155 : vector<1x256xf32> to vector<4x256xf32>
    %157 = arith.mulf %153, %156 : vector<4x256xf32>
    %c15_80 = arith.constant 15 : index
    %c0_81 = arith.constant 0 : index
    %c0_82 = arith.constant 0 : index
    %158 = vector.load %arg2[%c15_80, %c0_81, %c0_82] : memref<49x4x1xf32, #tpu.memory_space<vmem>>, vector<1x4x1xf32>
    %159 = vector.shape_cast %158 : vector<1x4x1xf32> to vector<4x1xf32>
    %160 = vector.broadcast %159 : vector<4x1xf32> to vector<4x256xf32>
    %161 = arith.mulf %157, %160 : vector<4x256xf32>
    %162 = arith.addf %152, %161 : vector<4x256xf32>
    %c17_i32 = arith.constant 17 : i32
    %163 = tpu.dynamic_rotate %1 by %c17_i32 dim 1 : vector<4x256xf32>, i32 -> vector<4x256xf32>
    %c16 = arith.constant 16 : index
    %c0_83 = arith.constant 0 : index
    %c0_84 = arith.constant 0 : index
    %164 = vector.load %arg3[%c16, %c0_83, %c0_84] : memref<49x1x256xf32, #tpu.memory_space<vmem>>, vector<1x1x256xf32>
    %165 = vector.shape_cast %164 : vector<1x1x256xf32> to vector<1x256xf32>
    %166 = vector.broadcast %165 : vector<1x256xf32> to vector<4x256xf32>
    %167 = arith.mulf %163, %166 : vector<4x256xf32>
    %c16_85 = arith.constant 16 : index
    %c0_86 = arith.constant 0 : index
    %c0_87 = arith.constant 0 : index
    %168 = vector.load %arg2[%c16_85, %c0_86, %c0_87] : memref<49x4x1xf32, #tpu.memory_space<vmem>>, vector<1x4x1xf32>
    %169 = vector.shape_cast %168 : vector<1x4x1xf32> to vector<4x1xf32>
    %170 = vector.broadcast %169 : vector<4x1xf32> to vector<4x256xf32>
    %171 = arith.mulf %167, %170 : vector<4x256xf32>
    %172 = arith.addf %162, %171 : vector<4x256xf32>
    %c16_i32 = arith.constant 16 : i32
    %173 = tpu.dynamic_rotate %1 by %c16_i32 dim 1 : vector<4x256xf32>, i32 -> vector<4x256xf32>
    %c17 = arith.constant 17 : index
    %c0_88 = arith.constant 0 : index
    %c0_89 = arith.constant 0 : index
    %174 = vector.load %arg3[%c17, %c0_88, %c0_89] : memref<49x1x256xf32, #tpu.memory_space<vmem>>, vector<1x1x256xf32>
    %175 = vector.shape_cast %174 : vector<1x1x256xf32> to vector<1x256xf32>
    %176 = vector.broadcast %175 : vector<1x256xf32> to vector<4x256xf32>
    %177 = arith.mulf %173, %176 : vector<4x256xf32>
    %c17_90 = arith.constant 17 : index
    %c0_91 = arith.constant 0 : index
    %c0_92 = arith.constant 0 : index
    %178 = vector.load %arg2[%c17_90, %c0_91, %c0_92] : memref<49x4x1xf32, #tpu.memory_space<vmem>>, vector<1x4x1xf32>
    %179 = vector.shape_cast %178 : vector<1x4x1xf32> to vector<4x1xf32>
    %180 = vector.broadcast %179 : vector<4x1xf32> to vector<4x256xf32>
    %181 = arith.mulf %177, %180 : vector<4x256xf32>
    %182 = arith.addf %172, %181 : vector<4x256xf32>
    %c15_i32 = arith.constant 15 : i32
    %183 = tpu.dynamic_rotate %1 by %c15_i32 dim 1 : vector<4x256xf32>, i32 -> vector<4x256xf32>
    %c18 = arith.constant 18 : index
    %c0_93 = arith.constant 0 : index
    %c0_94 = arith.constant 0 : index
    %184 = vector.load %arg3[%c18, %c0_93, %c0_94] : memref<49x1x256xf32, #tpu.memory_space<vmem>>, vector<1x1x256xf32>
    %185 = vector.shape_cast %184 : vector<1x1x256xf32> to vector<1x256xf32>
    %186 = vector.broadcast %185 : vector<1x256xf32> to vector<4x256xf32>
    %187 = arith.mulf %183, %186 : vector<4x256xf32>
    %c18_95 = arith.constant 18 : index
    %c0_96 = arith.constant 0 : index
    %c0_97 = arith.constant 0 : index
    %188 = vector.load %arg2[%c18_95, %c0_96, %c0_97] : memref<49x4x1xf32, #tpu.memory_space<vmem>>, vector<1x4x1xf32>
    %189 = vector.shape_cast %188 : vector<1x4x1xf32> to vector<4x1xf32>
    %190 = vector.broadcast %189 : vector<4x1xf32> to vector<4x256xf32>
    %191 = arith.mulf %187, %190 : vector<4x256xf32>
    %192 = arith.addf %182, %191 : vector<4x256xf32>
    %c14_i32 = arith.constant 14 : i32
    %193 = tpu.dynamic_rotate %1 by %c14_i32 dim 1 : vector<4x256xf32>, i32 -> vector<4x256xf32>
    %c19 = arith.constant 19 : index
    %c0_98 = arith.constant 0 : index
    %c0_99 = arith.constant 0 : index
    %194 = vector.load %arg3[%c19, %c0_98, %c0_99] : memref<49x1x256xf32, #tpu.memory_space<vmem>>, vector<1x1x256xf32>
    %195 = vector.shape_cast %194 : vector<1x1x256xf32> to vector<1x256xf32>
    %196 = vector.broadcast %195 : vector<1x256xf32> to vector<4x256xf32>
    %197 = arith.mulf %193, %196 : vector<4x256xf32>
    %c19_100 = arith.constant 19 : index
    %c0_101 = arith.constant 0 : index
    %c0_102 = arith.constant 0 : index
    %198 = vector.load %arg2[%c19_100, %c0_101, %c0_102] : memref<49x4x1xf32, #tpu.memory_space<vmem>>, vector<1x4x1xf32>
    %199 = vector.shape_cast %198 : vector<1x4x1xf32> to vector<4x1xf32>
    %200 = vector.broadcast %199 : vector<4x1xf32> to vector<4x256xf32>
    %201 = arith.mulf %197, %200 : vector<4x256xf32>
    %202 = arith.addf %192, %201 : vector<4x256xf32>
    %c13_i32 = arith.constant 13 : i32
    %203 = tpu.dynamic_rotate %1 by %c13_i32 dim 1 : vector<4x256xf32>, i32 -> vector<4x256xf32>
    %c20 = arith.constant 20 : index
    %c0_103 = arith.constant 0 : index
    %c0_104 = arith.constant 0 : index
    %204 = vector.load %arg3[%c20, %c0_103, %c0_104] : memref<49x1x256xf32, #tpu.memory_space<vmem>>, vector<1x1x256xf32>
    %205 = vector.shape_cast %204 : vector<1x1x256xf32> to vector<1x256xf32>
    %206 = vector.broadcast %205 : vector<1x256xf32> to vector<4x256xf32>
    %207 = arith.mulf %203, %206 : vector<4x256xf32>
    %c20_105 = arith.constant 20 : index
    %c0_106 = arith.constant 0 : index
    %c0_107 = arith.constant 0 : index
    %208 = vector.load %arg2[%c20_105, %c0_106, %c0_107] : memref<49x4x1xf32, #tpu.memory_space<vmem>>, vector<1x4x1xf32>
    %209 = vector.shape_cast %208 : vector<1x4x1xf32> to vector<4x1xf32>
    %210 = vector.broadcast %209 : vector<4x1xf32> to vector<4x256xf32>
    %211 = arith.mulf %207, %210 : vector<4x256xf32>
    %212 = arith.addf %202, %211 : vector<4x256xf32>
    %c3_i32 = arith.constant 3 : i32
    %213 = tpu.dynamic_rotate %1 by %c3_i32 dim 1 : vector<4x256xf32>, i32 -> vector<4x256xf32>
    %c21 = arith.constant 21 : index
    %c0_108 = arith.constant 0 : index
    %c0_109 = arith.constant 0 : index
    %214 = vector.load %arg3[%c21, %c0_108, %c0_109] : memref<49x1x256xf32, #tpu.memory_space<vmem>>, vector<1x1x256xf32>
    %215 = vector.shape_cast %214 : vector<1x1x256xf32> to vector<1x256xf32>
    %216 = vector.broadcast %215 : vector<1x256xf32> to vector<4x256xf32>
    %217 = arith.mulf %213, %216 : vector<4x256xf32>
    %c21_110 = arith.constant 21 : index
    %c0_111 = arith.constant 0 : index
    %c0_112 = arith.constant 0 : index
    %218 = vector.load %arg2[%c21_110, %c0_111, %c0_112] : memref<49x4x1xf32, #tpu.memory_space<vmem>>, vector<1x4x1xf32>
    %219 = vector.shape_cast %218 : vector<1x4x1xf32> to vector<4x1xf32>
    %220 = vector.broadcast %219 : vector<4x1xf32> to vector<4x256xf32>
    %221 = arith.mulf %217, %220 : vector<4x256xf32>
    %222 = arith.addf %212, %221 : vector<4x256xf32>
    %c2_i32 = arith.constant 2 : i32
    %223 = tpu.dynamic_rotate %1 by %c2_i32 dim 1 : vector<4x256xf32>, i32 -> vector<4x256xf32>
    %c22 = arith.constant 22 : index
    %c0_113 = arith.constant 0 : index
    %c0_114 = arith.constant 0 : index
    %224 = vector.load %arg3[%c22, %c0_113, %c0_114] : memref<49x1x256xf32, #tpu.memory_space<vmem>>, vector<1x1x256xf32>
    %225 = vector.shape_cast %224 : vector<1x1x256xf32> to vector<1x256xf32>
    %226 = vector.broadcast %225 : vector<1x256xf32> to vector<4x256xf32>
    %227 = arith.mulf %223, %226 : vector<4x256xf32>
    %c22_115 = arith.constant 22 : index
    %c0_116 = arith.constant 0 : index
    %c0_117 = arith.constant 0 : index
    %228 = vector.load %arg2[%c22_115, %c0_116, %c0_117] : memref<49x4x1xf32, #tpu.memory_space<vmem>>, vector<1x4x1xf32>
    %229 = vector.shape_cast %228 : vector<1x4x1xf32> to vector<4x1xf32>
    %230 = vector.broadcast %229 : vector<4x1xf32> to vector<4x256xf32>
    %231 = arith.mulf %227, %230 : vector<4x256xf32>
    %232 = arith.addf %222, %231 : vector<4x256xf32>
    %c1_i32 = arith.constant 1 : i32
    %233 = tpu.dynamic_rotate %1 by %c1_i32 dim 1 : vector<4x256xf32>, i32 -> vector<4x256xf32>
    %c23 = arith.constant 23 : index
    %c0_118 = arith.constant 0 : index
    %c0_119 = arith.constant 0 : index
    %234 = vector.load %arg3[%c23, %c0_118, %c0_119] : memref<49x1x256xf32, #tpu.memory_space<vmem>>, vector<1x1x256xf32>
    %235 = vector.shape_cast %234 : vector<1x1x256xf32> to vector<1x256xf32>
    %236 = vector.broadcast %235 : vector<1x256xf32> to vector<4x256xf32>
    %237 = arith.mulf %233, %236 : vector<4x256xf32>
    %c23_120 = arith.constant 23 : index
    %c0_121 = arith.constant 0 : index
    %c0_122 = arith.constant 0 : index
    %238 = vector.load %arg2[%c23_120, %c0_121, %c0_122] : memref<49x4x1xf32, #tpu.memory_space<vmem>>, vector<1x4x1xf32>
    %239 = vector.shape_cast %238 : vector<1x4x1xf32> to vector<4x1xf32>
    %240 = vector.broadcast %239 : vector<4x1xf32> to vector<4x256xf32>
    %241 = arith.mulf %237, %240 : vector<4x256xf32>
    %242 = arith.addf %232, %241 : vector<4x256xf32>
    %c0_i32 = arith.constant 0 : i32
    %243 = tpu.dynamic_rotate %1 by %c0_i32 dim 1 : vector<4x256xf32>, i32 -> vector<4x256xf32>
    %c24 = arith.constant 24 : index
    %c0_123 = arith.constant 0 : index
    %c0_124 = arith.constant 0 : index
    %244 = vector.load %arg3[%c24, %c0_123, %c0_124] : memref<49x1x256xf32, #tpu.memory_space<vmem>>, vector<1x1x256xf32>
    %245 = vector.shape_cast %244 : vector<1x1x256xf32> to vector<1x256xf32>
    %246 = vector.broadcast %245 : vector<1x256xf32> to vector<4x256xf32>
    %247 = arith.mulf %243, %246 : vector<4x256xf32>
    %c24_125 = arith.constant 24 : index
    %c0_126 = arith.constant 0 : index
    %c0_127 = arith.constant 0 : index
    %248 = vector.load %arg2[%c24_125, %c0_126, %c0_127] : memref<49x4x1xf32, #tpu.memory_space<vmem>>, vector<1x4x1xf32>
    %249 = vector.shape_cast %248 : vector<1x4x1xf32> to vector<4x1xf32>
    %250 = vector.broadcast %249 : vector<4x1xf32> to vector<4x256xf32>
    %251 = arith.mulf %247, %250 : vector<4x256xf32>
    %252 = arith.addf %242, %251 : vector<4x256xf32>
    %c255_i32 = arith.constant 255 : i32
    %253 = tpu.dynamic_rotate %1 by %c255_i32 dim 1 : vector<4x256xf32>, i32 -> vector<4x256xf32>
    %c25 = arith.constant 25 : index
    %c0_128 = arith.constant 0 : index
    %c0_129 = arith.constant 0 : index
    %254 = vector.load %arg3[%c25, %c0_128, %c0_129] : memref<49x1x256xf32, #tpu.memory_space<vmem>>, vector<1x1x256xf32>
    %255 = vector.shape_cast %254 : vector<1x1x256xf32> to vector<1x256xf32>
    %256 = vector.broadcast %255 : vector<1x256xf32> to vector<4x256xf32>
    %257 = arith.mulf %253, %256 : vector<4x256xf32>
    %c25_130 = arith.constant 25 : index
    %c0_131 = arith.constant 0 : index
    %c0_132 = arith.constant 0 : index
    %258 = vector.load %arg2[%c25_130, %c0_131, %c0_132] : memref<49x4x1xf32, #tpu.memory_space<vmem>>, vector<1x4x1xf32>
    %259 = vector.shape_cast %258 : vector<1x4x1xf32> to vector<4x1xf32>
    %260 = vector.broadcast %259 : vector<4x1xf32> to vector<4x256xf32>
    %261 = arith.mulf %257, %260 : vector<4x256xf32>
    %262 = arith.addf %252, %261 : vector<4x256xf32>
    %c254_i32 = arith.constant 254 : i32
    %263 = tpu.dynamic_rotate %1 by %c254_i32 dim 1 : vector<4x256xf32>, i32 -> vector<4x256xf32>
    %c26 = arith.constant 26 : index
    %c0_133 = arith.constant 0 : index
    %c0_134 = arith.constant 0 : index
    %264 = vector.load %arg3[%c26, %c0_133, %c0_134] : memref<49x1x256xf32, #tpu.memory_space<vmem>>, vector<1x1x256xf32>
    %265 = vector.shape_cast %264 : vector<1x1x256xf32> to vector<1x256xf32>
    %266 = vector.broadcast %265 : vector<1x256xf32> to vector<4x256xf32>
    %267 = arith.mulf %263, %266 : vector<4x256xf32>
    %c26_135 = arith.constant 26 : index
    %c0_136 = arith.constant 0 : index
    %c0_137 = arith.constant 0 : index
    %268 = vector.load %arg2[%c26_135, %c0_136, %c0_137] : memref<49x4x1xf32, #tpu.memory_space<vmem>>, vector<1x4x1xf32>
    %269 = vector.shape_cast %268 : vector<1x4x1xf32> to vector<4x1xf32>
    %270 = vector.broadcast %269 : vector<4x1xf32> to vector<4x256xf32>
    %271 = arith.mulf %267, %270 : vector<4x256xf32>
    %272 = arith.addf %262, %271 : vector<4x256xf32>
    %c253_i32 = arith.constant 253 : i32
    %273 = tpu.dynamic_rotate %1 by %c253_i32 dim 1 : vector<4x256xf32>, i32 -> vector<4x256xf32>
    %c27 = arith.constant 27 : index
    %c0_138 = arith.constant 0 : index
    %c0_139 = arith.constant 0 : index
    %274 = vector.load %arg3[%c27, %c0_138, %c0_139] : memref<49x1x256xf32, #tpu.memory_space<vmem>>, vector<1x1x256xf32>
    %275 = vector.shape_cast %274 : vector<1x1x256xf32> to vector<1x256xf32>
    %276 = vector.broadcast %275 : vector<1x256xf32> to vector<4x256xf32>
    %277 = arith.mulf %273, %276 : vector<4x256xf32>
    %c27_140 = arith.constant 27 : index
    %c0_141 = arith.constant 0 : index
    %c0_142 = arith.constant 0 : index
    %278 = vector.load %arg2[%c27_140, %c0_141, %c0_142] : memref<49x4x1xf32, #tpu.memory_space<vmem>>, vector<1x4x1xf32>
    %279 = vector.shape_cast %278 : vector<1x4x1xf32> to vector<4x1xf32>
    %280 = vector.broadcast %279 : vector<4x1xf32> to vector<4x256xf32>
    %281 = arith.mulf %277, %280 : vector<4x256xf32>
    %282 = arith.addf %272, %281 : vector<4x256xf32>
    %c243_i32 = arith.constant 243 : i32
    %283 = tpu.dynamic_rotate %1 by %c243_i32 dim 1 : vector<4x256xf32>, i32 -> vector<4x256xf32>
    %c28 = arith.constant 28 : index
    %c0_143 = arith.constant 0 : index
    %c0_144 = arith.constant 0 : index
    %284 = vector.load %arg3[%c28, %c0_143, %c0_144] : memref<49x1x256xf32, #tpu.memory_space<vmem>>, vector<1x1x256xf32>
    %285 = vector.shape_cast %284 : vector<1x1x256xf32> to vector<1x256xf32>
    %286 = vector.broadcast %285 : vector<1x256xf32> to vector<4x256xf32>
    %287 = arith.mulf %283, %286 : vector<4x256xf32>
    %c28_145 = arith.constant 28 : index
    %c0_146 = arith.constant 0 : index
    %c0_147 = arith.constant 0 : index
    %288 = vector.load %arg2[%c28_145, %c0_146, %c0_147] : memref<49x4x1xf32, #tpu.memory_space<vmem>>, vector<1x4x1xf32>
    %289 = vector.shape_cast %288 : vector<1x4x1xf32> to vector<4x1xf32>
    %290 = vector.broadcast %289 : vector<4x1xf32> to vector<4x256xf32>
    %291 = arith.mulf %287, %290 : vector<4x256xf32>
    %292 = arith.addf %282, %291 : vector<4x256xf32>
    %c242_i32 = arith.constant 242 : i32
    %293 = tpu.dynamic_rotate %1 by %c242_i32 dim 1 : vector<4x256xf32>, i32 -> vector<4x256xf32>
    %c29 = arith.constant 29 : index
    %c0_148 = arith.constant 0 : index
    %c0_149 = arith.constant 0 : index
    %294 = vector.load %arg3[%c29, %c0_148, %c0_149] : memref<49x1x256xf32, #tpu.memory_space<vmem>>, vector<1x1x256xf32>
    %295 = vector.shape_cast %294 : vector<1x1x256xf32> to vector<1x256xf32>
    %296 = vector.broadcast %295 : vector<1x256xf32> to vector<4x256xf32>
    %297 = arith.mulf %293, %296 : vector<4x256xf32>
    %c29_150 = arith.constant 29 : index
    %c0_151 = arith.constant 0 : index
    %c0_152 = arith.constant 0 : index
    %298 = vector.load %arg2[%c29_150, %c0_151, %c0_152] : memref<49x4x1xf32, #tpu.memory_space<vmem>>, vector<1x4x1xf32>
    %299 = vector.shape_cast %298 : vector<1x4x1xf32> to vector<4x1xf32>
    %300 = vector.broadcast %299 : vector<4x1xf32> to vector<4x256xf32>
    %301 = arith.mulf %297, %300 : vector<4x256xf32>
    %302 = arith.addf %292, %301 : vector<4x256xf32>
    %c241_i32 = arith.constant 241 : i32
    %303 = tpu.dynamic_rotate %1 by %c241_i32 dim 1 : vector<4x256xf32>, i32 -> vector<4x256xf32>
    %c30 = arith.constant 30 : index
    %c0_153 = arith.constant 0 : index
    %c0_154 = arith.constant 0 : index
    %304 = vector.load %arg3[%c30, %c0_153, %c0_154] : memref<49x1x256xf32, #tpu.memory_space<vmem>>, vector<1x1x256xf32>
    %305 = vector.shape_cast %304 : vector<1x1x256xf32> to vector<1x256xf32>
    %306 = vector.broadcast %305 : vector<1x256xf32> to vector<4x256xf32>
    %307 = arith.mulf %303, %306 : vector<4x256xf32>
    %c30_155 = arith.constant 30 : index
    %c0_156 = arith.constant 0 : index
    %c0_157 = arith.constant 0 : index
    %308 = vector.load %arg2[%c30_155, %c0_156, %c0_157] : memref<49x4x1xf32, #tpu.memory_space<vmem>>, vector<1x4x1xf32>
    %309 = vector.shape_cast %308 : vector<1x4x1xf32> to vector<4x1xf32>
    %310 = vector.broadcast %309 : vector<4x1xf32> to vector<4x256xf32>
    %311 = arith.mulf %307, %310 : vector<4x256xf32>
    %312 = arith.addf %302, %311 : vector<4x256xf32>
    %c240_i32 = arith.constant 240 : i32
    %313 = tpu.dynamic_rotate %1 by %c240_i32 dim 1 : vector<4x256xf32>, i32 -> vector<4x256xf32>
    %c31 = arith.constant 31 : index
    %c0_158 = arith.constant 0 : index
    %c0_159 = arith.constant 0 : index
    %314 = vector.load %arg3[%c31, %c0_158, %c0_159] : memref<49x1x256xf32, #tpu.memory_space<vmem>>, vector<1x1x256xf32>
    %315 = vector.shape_cast %314 : vector<1x1x256xf32> to vector<1x256xf32>
    %316 = vector.broadcast %315 : vector<1x256xf32> to vector<4x256xf32>
    %317 = arith.mulf %313, %316 : vector<4x256xf32>
    %c31_160 = arith.constant 31 : index
    %c0_161 = arith.constant 0 : index
    %c0_162 = arith.constant 0 : index
    %318 = vector.load %arg2[%c31_160, %c0_161, %c0_162] : memref<49x4x1xf32, #tpu.memory_space<vmem>>, vector<1x4x1xf32>
    %319 = vector.shape_cast %318 : vector<1x4x1xf32> to vector<4x1xf32>
    %320 = vector.broadcast %319 : vector<4x1xf32> to vector<4x256xf32>
    %321 = arith.mulf %317, %320 : vector<4x256xf32>
    %322 = arith.addf %312, %321 : vector<4x256xf32>
    %c239_i32 = arith.constant 239 : i32
    %323 = tpu.dynamic_rotate %1 by %c239_i32 dim 1 : vector<4x256xf32>, i32 -> vector<4x256xf32>
    %c32 = arith.constant 32 : index
    %c0_163 = arith.constant 0 : index
    %c0_164 = arith.constant 0 : index
    %324 = vector.load %arg3[%c32, %c0_163, %c0_164] : memref<49x1x256xf32, #tpu.memory_space<vmem>>, vector<1x1x256xf32>
    %325 = vector.shape_cast %324 : vector<1x1x256xf32> to vector<1x256xf32>
    %326 = vector.broadcast %325 : vector<1x256xf32> to vector<4x256xf32>
    %327 = arith.mulf %323, %326 : vector<4x256xf32>
    %c32_165 = arith.constant 32 : index
    %c0_166 = arith.constant 0 : index
    %c0_167 = arith.constant 0 : index
    %328 = vector.load %arg2[%c32_165, %c0_166, %c0_167] : memref<49x4x1xf32, #tpu.memory_space<vmem>>, vector<1x4x1xf32>
    %329 = vector.shape_cast %328 : vector<1x4x1xf32> to vector<4x1xf32>
    %330 = vector.broadcast %329 : vector<4x1xf32> to vector<4x256xf32>
    %331 = arith.mulf %327, %330 : vector<4x256xf32>
    %332 = arith.addf %322, %331 : vector<4x256xf32>
    %c238_i32 = arith.constant 238 : i32
    %333 = tpu.dynamic_rotate %1 by %c238_i32 dim 1 : vector<4x256xf32>, i32 -> vector<4x256xf32>
    %c33 = arith.constant 33 : index
    %c0_168 = arith.constant 0 : index
    %c0_169 = arith.constant 0 : index
    %334 = vector.load %arg3[%c33, %c0_168, %c0_169] : memref<49x1x256xf32, #tpu.memory_space<vmem>>, vector<1x1x256xf32>
    %335 = vector.shape_cast %334 : vector<1x1x256xf32> to vector<1x256xf32>
    %336 = vector.broadcast %335 : vector<1x256xf32> to vector<4x256xf32>
    %337 = arith.mulf %333, %336 : vector<4x256xf32>
    %c33_170 = arith.constant 33 : index
    %c0_171 = arith.constant 0 : index
    %c0_172 = arith.constant 0 : index
    %338 = vector.load %arg2[%c33_170, %c0_171, %c0_172] : memref<49x4x1xf32, #tpu.memory_space<vmem>>, vector<1x4x1xf32>
    %339 = vector.shape_cast %338 : vector<1x4x1xf32> to vector<4x1xf32>
    %340 = vector.broadcast %339 : vector<4x1xf32> to vector<4x256xf32>
    %341 = arith.mulf %337, %340 : vector<4x256xf32>
    %342 = arith.addf %332, %341 : vector<4x256xf32>
    %c237_i32 = arith.constant 237 : i32
    %343 = tpu.dynamic_rotate %1 by %c237_i32 dim 1 : vector<4x256xf32>, i32 -> vector<4x256xf32>
    %c34 = arith.constant 34 : index
    %c0_173 = arith.constant 0 : index
    %c0_174 = arith.constant 0 : index
    %344 = vector.load %arg3[%c34, %c0_173, %c0_174] : memref<49x1x256xf32, #tpu.memory_space<vmem>>, vector<1x1x256xf32>
    %345 = vector.shape_cast %344 : vector<1x1x256xf32> to vector<1x256xf32>
    %346 = vector.broadcast %345 : vector<1x256xf32> to vector<4x256xf32>
    %347 = arith.mulf %343, %346 : vector<4x256xf32>
    %c34_175 = arith.constant 34 : index
    %c0_176 = arith.constant 0 : index
    %c0_177 = arith.constant 0 : index
    %348 = vector.load %arg2[%c34_175, %c0_176, %c0_177] : memref<49x4x1xf32, #tpu.memory_space<vmem>>, vector<1x4x1xf32>
    %349 = vector.shape_cast %348 : vector<1x4x1xf32> to vector<4x1xf32>
    %350 = vector.broadcast %349 : vector<4x1xf32> to vector<4x256xf32>
    %351 = arith.mulf %347, %350 : vector<4x256xf32>
    %352 = arith.addf %342, %351 : vector<4x256xf32>
    %c227_i32 = arith.constant 227 : i32
    %353 = tpu.dynamic_rotate %1 by %c227_i32 dim 1 : vector<4x256xf32>, i32 -> vector<4x256xf32>
    %c35 = arith.constant 35 : index
    %c0_178 = arith.constant 0 : index
    %c0_179 = arith.constant 0 : index
    %354 = vector.load %arg3[%c35, %c0_178, %c0_179] : memref<49x1x256xf32, #tpu.memory_space<vmem>>, vector<1x1x256xf32>
    %355 = vector.shape_cast %354 : vector<1x1x256xf32> to vector<1x256xf32>
    %356 = vector.broadcast %355 : vector<1x256xf32> to vector<4x256xf32>
    %357 = arith.mulf %353, %356 : vector<4x256xf32>
    %c35_180 = arith.constant 35 : index
    %c0_181 = arith.constant 0 : index
    %c0_182 = arith.constant 0 : index
    %358 = vector.load %arg2[%c35_180, %c0_181, %c0_182] : memref<49x4x1xf32, #tpu.memory_space<vmem>>, vector<1x4x1xf32>
    %359 = vector.shape_cast %358 : vector<1x4x1xf32> to vector<4x1xf32>
    %360 = vector.broadcast %359 : vector<4x1xf32> to vector<4x256xf32>
    %361 = arith.mulf %357, %360 : vector<4x256xf32>
    %362 = arith.addf %352, %361 : vector<4x256xf32>
    %c226_i32 = arith.constant 226 : i32
    %363 = tpu.dynamic_rotate %1 by %c226_i32 dim 1 : vector<4x256xf32>, i32 -> vector<4x256xf32>
    %c36 = arith.constant 36 : index
    %c0_183 = arith.constant 0 : index
    %c0_184 = arith.constant 0 : index
    %364 = vector.load %arg3[%c36, %c0_183, %c0_184] : memref<49x1x256xf32, #tpu.memory_space<vmem>>, vector<1x1x256xf32>
    %365 = vector.shape_cast %364 : vector<1x1x256xf32> to vector<1x256xf32>
    %366 = vector.broadcast %365 : vector<1x256xf32> to vector<4x256xf32>
    %367 = arith.mulf %363, %366 : vector<4x256xf32>
    %c36_185 = arith.constant 36 : index
    %c0_186 = arith.constant 0 : index
    %c0_187 = arith.constant 0 : index
    %368 = vector.load %arg2[%c36_185, %c0_186, %c0_187] : memref<49x4x1xf32, #tpu.memory_space<vmem>>, vector<1x4x1xf32>
    %369 = vector.shape_cast %368 : vector<1x4x1xf32> to vector<4x1xf32>
    %370 = vector.broadcast %369 : vector<4x1xf32> to vector<4x256xf32>
    %371 = arith.mulf %367, %370 : vector<4x256xf32>
    %372 = arith.addf %362, %371 : vector<4x256xf32>
    %c225_i32 = arith.constant 225 : i32
    %373 = tpu.dynamic_rotate %1 by %c225_i32 dim 1 : vector<4x256xf32>, i32 -> vector<4x256xf32>
    %c37 = arith.constant 37 : index
    %c0_188 = arith.constant 0 : index
    %c0_189 = arith.constant 0 : index
    %374 = vector.load %arg3[%c37, %c0_188, %c0_189] : memref<49x1x256xf32, #tpu.memory_space<vmem>>, vector<1x1x256xf32>
    %375 = vector.shape_cast %374 : vector<1x1x256xf32> to vector<1x256xf32>
    %376 = vector.broadcast %375 : vector<1x256xf32> to vector<4x256xf32>
    %377 = arith.mulf %373, %376 : vector<4x256xf32>
    %c37_190 = arith.constant 37 : index
    %c0_191 = arith.constant 0 : index
    %c0_192 = arith.constant 0 : index
    %378 = vector.load %arg2[%c37_190, %c0_191, %c0_192] : memref<49x4x1xf32, #tpu.memory_space<vmem>>, vector<1x4x1xf32>
    %379 = vector.shape_cast %378 : vector<1x4x1xf32> to vector<4x1xf32>
    %380 = vector.broadcast %379 : vector<4x1xf32> to vector<4x256xf32>
    %381 = arith.mulf %377, %380 : vector<4x256xf32>
    %382 = arith.addf %372, %381 : vector<4x256xf32>
    %c224_i32 = arith.constant 224 : i32
    %383 = tpu.dynamic_rotate %1 by %c224_i32 dim 1 : vector<4x256xf32>, i32 -> vector<4x256xf32>
    %c38 = arith.constant 38 : index
    %c0_193 = arith.constant 0 : index
    %c0_194 = arith.constant 0 : index
    %384 = vector.load %arg3[%c38, %c0_193, %c0_194] : memref<49x1x256xf32, #tpu.memory_space<vmem>>, vector<1x1x256xf32>
    %385 = vector.shape_cast %384 : vector<1x1x256xf32> to vector<1x256xf32>
    %386 = vector.broadcast %385 : vector<1x256xf32> to vector<4x256xf32>
    %387 = arith.mulf %383, %386 : vector<4x256xf32>
    %c38_195 = arith.constant 38 : index
    %c0_196 = arith.constant 0 : index
    %c0_197 = arith.constant 0 : index
    %388 = vector.load %arg2[%c38_195, %c0_196, %c0_197] : memref<49x4x1xf32, #tpu.memory_space<vmem>>, vector<1x4x1xf32>
    %389 = vector.shape_cast %388 : vector<1x4x1xf32> to vector<4x1xf32>
    %390 = vector.broadcast %389 : vector<4x1xf32> to vector<4x256xf32>
    %391 = arith.mulf %387, %390 : vector<4x256xf32>
    %392 = arith.addf %382, %391 : vector<4x256xf32>
    %c223_i32 = arith.constant 223 : i32
    %393 = tpu.dynamic_rotate %1 by %c223_i32 dim 1 : vector<4x256xf32>, i32 -> vector<4x256xf32>
    %c39 = arith.constant 39 : index
    %c0_198 = arith.constant 0 : index
    %c0_199 = arith.constant 0 : index
    %394 = vector.load %arg3[%c39, %c0_198, %c0_199] : memref<49x1x256xf32, #tpu.memory_space<vmem>>, vector<1x1x256xf32>
    %395 = vector.shape_cast %394 : vector<1x1x256xf32> to vector<1x256xf32>
    %396 = vector.broadcast %395 : vector<1x256xf32> to vector<4x256xf32>
    %397 = arith.mulf %393, %396 : vector<4x256xf32>
    %c39_200 = arith.constant 39 : index
    %c0_201 = arith.constant 0 : index
    %c0_202 = arith.constant 0 : index
    %398 = vector.load %arg2[%c39_200, %c0_201, %c0_202] : memref<49x4x1xf32, #tpu.memory_space<vmem>>, vector<1x4x1xf32>
    %399 = vector.shape_cast %398 : vector<1x4x1xf32> to vector<4x1xf32>
    %400 = vector.broadcast %399 : vector<4x1xf32> to vector<4x256xf32>
    %401 = arith.mulf %397, %400 : vector<4x256xf32>
    %402 = arith.addf %392, %401 : vector<4x256xf32>
    %c222_i32 = arith.constant 222 : i32
    %403 = tpu.dynamic_rotate %1 by %c222_i32 dim 1 : vector<4x256xf32>, i32 -> vector<4x256xf32>
    %c40 = arith.constant 40 : index
    %c0_203 = arith.constant 0 : index
    %c0_204 = arith.constant 0 : index
    %404 = vector.load %arg3[%c40, %c0_203, %c0_204] : memref<49x1x256xf32, #tpu.memory_space<vmem>>, vector<1x1x256xf32>
    %405 = vector.shape_cast %404 : vector<1x1x256xf32> to vector<1x256xf32>
    %406 = vector.broadcast %405 : vector<1x256xf32> to vector<4x256xf32>
    %407 = arith.mulf %403, %406 : vector<4x256xf32>
    %c40_205 = arith.constant 40 : index
    %c0_206 = arith.constant 0 : index
    %c0_207 = arith.constant 0 : index
    %408 = vector.load %arg2[%c40_205, %c0_206, %c0_207] : memref<49x4x1xf32, #tpu.memory_space<vmem>>, vector<1x4x1xf32>
    %409 = vector.shape_cast %408 : vector<1x4x1xf32> to vector<4x1xf32>
    %410 = vector.broadcast %409 : vector<4x1xf32> to vector<4x256xf32>
    %411 = arith.mulf %407, %410 : vector<4x256xf32>
    %412 = arith.addf %402, %411 : vector<4x256xf32>
    %c221_i32 = arith.constant 221 : i32
    %413 = tpu.dynamic_rotate %1 by %c221_i32 dim 1 : vector<4x256xf32>, i32 -> vector<4x256xf32>
    %c41 = arith.constant 41 : index
    %c0_208 = arith.constant 0 : index
    %c0_209 = arith.constant 0 : index
    %414 = vector.load %arg3[%c41, %c0_208, %c0_209] : memref<49x1x256xf32, #tpu.memory_space<vmem>>, vector<1x1x256xf32>
    %415 = vector.shape_cast %414 : vector<1x1x256xf32> to vector<1x256xf32>
    %416 = vector.broadcast %415 : vector<1x256xf32> to vector<4x256xf32>
    %417 = arith.mulf %413, %416 : vector<4x256xf32>
    %c41_210 = arith.constant 41 : index
    %c0_211 = arith.constant 0 : index
    %c0_212 = arith.constant 0 : index
    %418 = vector.load %arg2[%c41_210, %c0_211, %c0_212] : memref<49x4x1xf32, #tpu.memory_space<vmem>>, vector<1x4x1xf32>
    %419 = vector.shape_cast %418 : vector<1x4x1xf32> to vector<4x1xf32>
    %420 = vector.broadcast %419 : vector<4x1xf32> to vector<4x256xf32>
    %421 = arith.mulf %417, %420 : vector<4x256xf32>
    %422 = arith.addf %412, %421 : vector<4x256xf32>
    %c211_i32 = arith.constant 211 : i32
    %423 = tpu.dynamic_rotate %1 by %c211_i32 dim 1 : vector<4x256xf32>, i32 -> vector<4x256xf32>
    %c42 = arith.constant 42 : index
    %c0_213 = arith.constant 0 : index
    %c0_214 = arith.constant 0 : index
    %424 = vector.load %arg3[%c42, %c0_213, %c0_214] : memref<49x1x256xf32, #tpu.memory_space<vmem>>, vector<1x1x256xf32>
    %425 = vector.shape_cast %424 : vector<1x1x256xf32> to vector<1x256xf32>
    %426 = vector.broadcast %425 : vector<1x256xf32> to vector<4x256xf32>
    %427 = arith.mulf %423, %426 : vector<4x256xf32>
    %c42_215 = arith.constant 42 : index
    %c0_216 = arith.constant 0 : index
    %c0_217 = arith.constant 0 : index
    %428 = vector.load %arg2[%c42_215, %c0_216, %c0_217] : memref<49x4x1xf32, #tpu.memory_space<vmem>>, vector<1x4x1xf32>
    %429 = vector.shape_cast %428 : vector<1x4x1xf32> to vector<4x1xf32>
    %430 = vector.broadcast %429 : vector<4x1xf32> to vector<4x256xf32>
    %431 = arith.mulf %427, %430 : vector<4x256xf32>
    %432 = arith.addf %422, %431 : vector<4x256xf32>
    %c210_i32 = arith.constant 210 : i32
    %433 = tpu.dynamic_rotate %1 by %c210_i32 dim 1 : vector<4x256xf32>, i32 -> vector<4x256xf32>
    %c43 = arith.constant 43 : index
    %c0_218 = arith.constant 0 : index
    %c0_219 = arith.constant 0 : index
    %434 = vector.load %arg3[%c43, %c0_218, %c0_219] : memref<49x1x256xf32, #tpu.memory_space<vmem>>, vector<1x1x256xf32>
    %435 = vector.shape_cast %434 : vector<1x1x256xf32> to vector<1x256xf32>
    %436 = vector.broadcast %435 : vector<1x256xf32> to vector<4x256xf32>
    %437 = arith.mulf %433, %436 : vector<4x256xf32>
    %c43_220 = arith.constant 43 : index
    %c0_221 = arith.constant 0 : index
    %c0_222 = arith.constant 0 : index
    %438 = vector.load %arg2[%c43_220, %c0_221, %c0_222] : memref<49x4x1xf32, #tpu.memory_space<vmem>>, vector<1x4x1xf32>
    %439 = vector.shape_cast %438 : vector<1x4x1xf32> to vector<4x1xf32>
    %440 = vector.broadcast %439 : vector<4x1xf32> to vector<4x256xf32>
    %441 = arith.mulf %437, %440 : vector<4x256xf32>
    %442 = arith.addf %432, %441 : vector<4x256xf32>
    %c209_i32 = arith.constant 209 : i32
    %443 = tpu.dynamic_rotate %1 by %c209_i32 dim 1 : vector<4x256xf32>, i32 -> vector<4x256xf32>
    %c44 = arith.constant 44 : index
    %c0_223 = arith.constant 0 : index
    %c0_224 = arith.constant 0 : index
    %444 = vector.load %arg3[%c44, %c0_223, %c0_224] : memref<49x1x256xf32, #tpu.memory_space<vmem>>, vector<1x1x256xf32>
    %445 = vector.shape_cast %444 : vector<1x1x256xf32> to vector<1x256xf32>
    %446 = vector.broadcast %445 : vector<1x256xf32> to vector<4x256xf32>
    %447 = arith.mulf %443, %446 : vector<4x256xf32>
    %c44_225 = arith.constant 44 : index
    %c0_226 = arith.constant 0 : index
    %c0_227 = arith.constant 0 : index
    %448 = vector.load %arg2[%c44_225, %c0_226, %c0_227] : memref<49x4x1xf32, #tpu.memory_space<vmem>>, vector<1x4x1xf32>
    %449 = vector.shape_cast %448 : vector<1x4x1xf32> to vector<4x1xf32>
    %450 = vector.broadcast %449 : vector<4x1xf32> to vector<4x256xf32>
    %451 = arith.mulf %447, %450 : vector<4x256xf32>
    %452 = arith.addf %442, %451 : vector<4x256xf32>
    %c208_i32 = arith.constant 208 : i32
    %453 = tpu.dynamic_rotate %1 by %c208_i32 dim 1 : vector<4x256xf32>, i32 -> vector<4x256xf32>
    %c45 = arith.constant 45 : index
    %c0_228 = arith.constant 0 : index
    %c0_229 = arith.constant 0 : index
    %454 = vector.load %arg3[%c45, %c0_228, %c0_229] : memref<49x1x256xf32, #tpu.memory_space<vmem>>, vector<1x1x256xf32>
    %455 = vector.shape_cast %454 : vector<1x1x256xf32> to vector<1x256xf32>
    %456 = vector.broadcast %455 : vector<1x256xf32> to vector<4x256xf32>
    %457 = arith.mulf %453, %456 : vector<4x256xf32>
    %c45_230 = arith.constant 45 : index
    %c0_231 = arith.constant 0 : index
    %c0_232 = arith.constant 0 : index
    %458 = vector.load %arg2[%c45_230, %c0_231, %c0_232] : memref<49x4x1xf32, #tpu.memory_space<vmem>>, vector<1x4x1xf32>
    %459 = vector.shape_cast %458 : vector<1x4x1xf32> to vector<4x1xf32>
    %460 = vector.broadcast %459 : vector<4x1xf32> to vector<4x256xf32>
    %461 = arith.mulf %457, %460 : vector<4x256xf32>
    %462 = arith.addf %452, %461 : vector<4x256xf32>
    %c207_i32 = arith.constant 207 : i32
    %463 = tpu.dynamic_rotate %1 by %c207_i32 dim 1 : vector<4x256xf32>, i32 -> vector<4x256xf32>
    %c46 = arith.constant 46 : index
    %c0_233 = arith.constant 0 : index
    %c0_234 = arith.constant 0 : index
    %464 = vector.load %arg3[%c46, %c0_233, %c0_234] : memref<49x1x256xf32, #tpu.memory_space<vmem>>, vector<1x1x256xf32>
    %465 = vector.shape_cast %464 : vector<1x1x256xf32> to vector<1x256xf32>
    %466 = vector.broadcast %465 : vector<1x256xf32> to vector<4x256xf32>
    %467 = arith.mulf %463, %466 : vector<4x256xf32>
    %c46_235 = arith.constant 46 : index
    %c0_236 = arith.constant 0 : index
    %c0_237 = arith.constant 0 : index
    %468 = vector.load %arg2[%c46_235, %c0_236, %c0_237] : memref<49x4x1xf32, #tpu.memory_space<vmem>>, vector<1x4x1xf32>
    %469 = vector.shape_cast %468 : vector<1x4x1xf32> to vector<4x1xf32>
    %470 = vector.broadcast %469 : vector<4x1xf32> to vector<4x256xf32>
    %471 = arith.mulf %467, %470 : vector<4x256xf32>
    %472 = arith.addf %462, %471 : vector<4x256xf32>
    %c206_i32 = arith.constant 206 : i32
    %473 = tpu.dynamic_rotate %1 by %c206_i32 dim 1 : vector<4x256xf32>, i32 -> vector<4x256xf32>
    %c47 = arith.constant 47 : index
    %c0_238 = arith.constant 0 : index
    %c0_239 = arith.constant 0 : index
    %474 = vector.load %arg3[%c47, %c0_238, %c0_239] : memref<49x1x256xf32, #tpu.memory_space<vmem>>, vector<1x1x256xf32>
    %475 = vector.shape_cast %474 : vector<1x1x256xf32> to vector<1x256xf32>
    %476 = vector.broadcast %475 : vector<1x256xf32> to vector<4x256xf32>
    %477 = arith.mulf %473, %476 : vector<4x256xf32>
    %c47_240 = arith.constant 47 : index
    %c0_241 = arith.constant 0 : index
    %c0_242 = arith.constant 0 : index
    %478 = vector.load %arg2[%c47_240, %c0_241, %c0_242] : memref<49x4x1xf32, #tpu.memory_space<vmem>>, vector<1x4x1xf32>
    %479 = vector.shape_cast %478 : vector<1x4x1xf32> to vector<4x1xf32>
    %480 = vector.broadcast %479 : vector<4x1xf32> to vector<4x256xf32>
    %481 = arith.mulf %477, %480 : vector<4x256xf32>
    %482 = arith.addf %472, %481 : vector<4x256xf32>
    %c205_i32 = arith.constant 205 : i32
    %483 = tpu.dynamic_rotate %1 by %c205_i32 dim 1 : vector<4x256xf32>, i32 -> vector<4x256xf32>
    %c48 = arith.constant 48 : index
    %c0_243 = arith.constant 0 : index
    %c0_244 = arith.constant 0 : index
    %484 = vector.load %arg3[%c48, %c0_243, %c0_244] : memref<49x1x256xf32, #tpu.memory_space<vmem>>, vector<1x1x256xf32>
    %485 = vector.shape_cast %484 : vector<1x1x256xf32> to vector<1x256xf32>
    %486 = vector.broadcast %485 : vector<1x256xf32> to vector<4x256xf32>
    %487 = arith.mulf %483, %486 : vector<4x256xf32>
    %c48_245 = arith.constant 48 : index
    %c0_246 = arith.constant 0 : index
    %c0_247 = arith.constant 0 : index
    %488 = vector.load %arg2[%c48_245, %c0_246, %c0_247] : memref<49x4x1xf32, #tpu.memory_space<vmem>>, vector<1x4x1xf32>
    %489 = vector.shape_cast %488 : vector<1x4x1xf32> to vector<4x1xf32>
    %490 = vector.broadcast %489 : vector<4x1xf32> to vector<4x256xf32>
    %491 = arith.mulf %487, %490 : vector<4x256xf32>
    %492 = arith.addf %482, %491 : vector<4x256xf32>
    %c0_248 = arith.constant 0 : index
    %c0_249 = arith.constant 0 : index
    %493 = vector.load %arg4[%c0_248, %c0_249] : memref<4x1xf32, #tpu.memory_space<vmem>>, vector<4x1xf32>
    %494 = vector.broadcast %493 : vector<4x1xf32> to vector<4x256xf32>
    %495 = arith.addf %492, %494 : vector<4x256xf32>
    %496 = vector.shape_cast %495 : vector<4x256xf32> to vector<1x4x256xf32>
    %cst_250 = arith.constant dense<0.000000e+00> : vector<1xf32>
    %497 = vector.multi_reduction <add>, %496, %cst_250 [1, 2] : vector<1x4x256xf32> to vector<1xf32>
    %498 = vector.shape_cast %497 : vector<1xf32> to vector<1x1x1xf32>
    %499 = vector.extract %498[0, 0, 0] : f32 from vector<1x1x1xf32>
    %cst_251 = arith.constant 1.024000e+03 : f32
    %500 = arith.divf %499, %cst_251 : f32
    %501 = vector.broadcast %500 : f32 to vector<4x256xf32>
    %502 = arith.subf %495, %501 : vector<4x256xf32>
    %503 = arith.mulf %502, %502 : vector<4x256xf32>
    %504 = vector.shape_cast %503 : vector<4x256xf32> to vector<1x4x256xf32>
    %cst_252 = arith.constant dense<0.000000e+00> : vector<1xf32>
    %505 = vector.multi_reduction <add>, %504, %cst_252 [1, 2] : vector<1x4x256xf32> to vector<1xf32>
    %506 = vector.shape_cast %505 : vector<1xf32> to vector<1x1x1xf32>
    %507 = vector.extract %506[0, 0, 0] : f32 from vector<1x1x1xf32>
    %cst_253 = arith.constant 1.024000e+03 : f32
    %508 = arith.divf %507, %cst_253 : f32
    %509 = vector.broadcast %500 : f32 to vector<4x256xf32>
    %510 = arith.subf %495, %509 : vector<4x256xf32>
    %cst_254 = arith.constant 9.99999974E-6 : f32
    %511 = arith.addf %508, %cst_254 : f32
    %512 = math.rsqrt %511 : f32
    %513 = vector.broadcast %512 : f32 to vector<4x256xf32>
    %514 = arith.mulf %510, %513 : vector<4x256xf32>
    %c0_255 = arith.constant 0 : index
    %c0_256 = arith.constant 0 : index
    %515 = vector.load %arg5[%c0_255, %c0_256] : memref<4x1xf32, #tpu.memory_space<vmem>>, vector<4x1xf32>
    %516 = vector.broadcast %515 : vector<4x1xf32> to vector<4x256xf32>
    %517 = arith.mulf %514, %516 : vector<4x256xf32>
    %c0_257 = arith.constant 0 : index
    %c0_258 = arith.constant 0 : index
    %518 = vector.load %arg6[%c0_257, %c0_258] : memref<4x1xf32, #tpu.memory_space<vmem>>, vector<4x1xf32>
    %519 = vector.broadcast %518 : vector<4x1xf32> to vector<4x256xf32>
    %520 = arith.addf %517, %519 : vector<4x256xf32>
    %c0_259 = arith.constant 0 : index
    %c0_260 = arith.constant 0 : index
    %521 = vector.load %arg7[%c0_259, %c0_260] : memref<16x4xbf16, #tpu.memory_space<vmem>>, vector<16x4xbf16>
    %522 = arith.truncf %520 : vector<4x256xf32> to vector<4x256xbf16>
    %cst_261 = arith.constant dense<0.000000e+00> : vector<16x256xf32>
    %523 = tpu.matmul %521, %522, %cst_261 {dimension_numbers = #tpu.dot_dimension_numbers<[1], [0], [0], [1], [0, 0, 1, 1], [], []>} : vector<16x4xbf16>, vector<4x256xbf16>, vector<16x256xf32> -> vector<16x256xf32>
    %c0_262 = arith.constant 0 : index
    %c0_263 = arith.constant 0 : index
    %524 = vector.load %arg8[%c0_262, %c0_263] : memref<16x1xf32, #tpu.memory_space<vmem>>, vector<16x1xf32>
    %525 = vector.broadcast %524 : vector<16x1xf32> to vector<16x256xf32>
    %526 = arith.addf %523, %525 : vector<16x256xf32>
    %cst_264 = arith.constant 5.000000e-01 : f32
    %527 = vector.broadcast %cst_264 : f32 to vector<16x256xf32>
    %528 = arith.mulf %527, %526 : vector<16x256xf32>
    %cst_265 = arith.constant 0.707106769 : f32
    %529 = vector.broadcast %cst_265 : f32 to vector<16x256xf32>
    %530 = arith.mulf %526, %529 : vector<16x256xf32>
    %531 = math.erf %530 : vector<16x256xf32>
    %cst_266 = arith.constant 1.000000e+00 : f32
    %532 = vector.broadcast %cst_266 : f32 to vector<16x256xf32>
    %533 = arith.addf %532, %531 : vector<16x256xf32>
    %534 = arith.mulf %528, %533 : vector<16x256xf32>
    %c0_267 = arith.constant 0 : index
    %c0_268 = arith.constant 0 : index
    %535 = vector.load %arg9[%c0_267, %c0_268] : memref<8x16xbf16, #tpu.memory_space<vmem>>, vector<8x16xbf16>
    %536 = arith.truncf %534 : vector<16x256xf32> to vector<16x256xbf16>
    %cst_269 = arith.constant dense<0.000000e+00> : vector<8x256xf32>
    %537 = tpu.matmul %535, %536, %cst_269 {dimension_numbers = #tpu.dot_dimension_numbers<[1], [0], [0], [1], [0, 0, 1, 1], [], []>} : vector<8x16xbf16>, vector<16x256xbf16>, vector<8x256xf32> -> vector<8x256xf32>
    %c0_270 = arith.constant 0 : index
    %c0_271 = arith.constant 0 : index
    %538 = vector.load %arg10[%c0_270, %c0_271] : memref<8x1xf32, #tpu.memory_space<vmem>>, vector<8x1xf32>
    %539 = vector.broadcast %538 : vector<8x1xf32> to vector<8x256xf32>
    %540 = arith.addf %537, %539 : vector<8x256xf32>
    %c0_272 = arith.constant 0 : index
    %c0_273 = arith.constant 0 : index
    %541 = vector.load %arg11[%c0_272, %c0_273] : memref<8x4xbf16, #tpu.memory_space<vmem>>, vector<8x4xbf16>
    %542 = arith.truncf %1 : vector<4x256xf32> to vector<4x256xbf16>
    %cst_274 = arith.constant dense<0.000000e+00> : vector<8x256xf32>
    %543 = tpu.matmul %541, %542, %cst_274 {dimension_numbers = #tpu.dot_dimension_numbers<[1], [0], [0], [1], [0, 0, 1, 1], [], []>} : vector<8x4xbf16>, vector<4x256xbf16>, vector<8x256xf32> -> vector<8x256xf32>
    %c0_275 = arith.constant 0 : index
    %c0_276 = arith.constant 0 : index
    %544 = vector.load %arg12[%c0_275, %c0_276] : memref<8x1xf32, #tpu.memory_space<vmem>>, vector<8x1xf32>
    %545 = vector.broadcast %544 : vector<8x1xf32> to vector<8x256xf32>
    %546 = arith.addf %543, %545 : vector<8x256xf32>
    %547 = arith.addf %540, %546 : vector<8x256xf32>
    %c0_277 = arith.constant 0 : index
    %c0_278 = arith.constant 0 : index
    %c0_279 = arith.constant 0 : index
    %548 = vector.load %arg13[%c0_277, %c0_278, %c0_279] : memref<1x8x256xf32, #tpu.memory_space<vmem>>, vector<1x8x256xf32>
    %549 = vector.shape_cast %548 : vector<1x8x256xf32> to vector<8x256xf32>
    %550 = vector.shape_cast %547 : vector<8x256xf32> to vector<1x8x256xf32>
    tpu.vector_store %arg13[%c0_277, %c0_278, %c0_279], %550 {strides = array<i32>} : memref<1x8x256xf32, #tpu.memory_space<vmem>>, vector<1x8x256xf32>,
    return
  }
  func.func @transform_0(%arg0: i32) -> (i32, i32, i32) {
    %c0_i32 = arith.constant 0 : i32
    %c0_i32_0 = arith.constant 0 : i32
    %c0_i32_1 = arith.constant 0 : i32
    return %arg0, %c0_i32, %c0_i32_0 : i32, i32, i32
  }
  func.func @transform_1(%arg0: i32) -> (i32, i32, i32) {
    %c0_i32 = arith.constant 0 : i32
    %c0_i32_0 = arith.constant 0 : i32
    %c0_i32_1 = arith.constant 0 : i32
    %c0_i32_2 = arith.constant 0 : i32
    return %c0_i32, %c0_i32_0, %c0_i32_1 : i32, i32, i32
  }
  func.func @transform_2(%arg0: i32) -> (i32, i32, i32) {
    %c0_i32 = arith.constant 0 : i32
    %c0_i32_0 = arith.constant 0 : i32
    %c0_i32_1 = arith.constant 0 : i32
    %c0_i32_2 = arith.constant 0 : i32
    return %c0_i32, %c0_i32_0, %c0_i32_1 : i32, i32, i32
  }
  func.func @transform_3(%arg0: i32) -> (i32, i32) {
    %c0_i32 = arith.constant 0 : i32
    %c0_i32_0 = arith.constant 0 : i32
    %c0_i32_1 = arith.constant 0 : i32
    return %c0_i32, %c0_i32_0 : i32, i32
  }
  func.func @transform_4(%arg0: i32) -> (i32, i32) {
    %c0_i32 = arith.constant 0 : i32
    %c0_i32_0 = arith.constant 0 : i32
    %c0_i32_1 = arith.constant 0 : i32
    return %c0_i32, %c0_i32_0 : i32, i32
  }
  func.func @transform_5(%arg0: i32) -> (i32, i32) {
    %c0_i32 = arith.constant 0 : i32
    %c0_i32_0 = arith.constant 0 : i32
    %c0_i32_1 = arith.constant 0 : i32
    return %c0_i32, %c0_i32_0 : i32, i32
  }
  func.func @transform_6(%arg0: i32) -> (i32, i32) {
    %c0_i32 = arith.constant 0 : i32
    %c0_i32_0 = arith.constant 0 : i32
    %c0_i32_1 = arith.constant 0 : i32
    return %c0_i32, %c0_i32_0 : i32, i32
  }
  func.func @transform_7(%arg0: i32) -> (i32, i32) {
    %c0_i32 = arith.constant 0 : i32
    %c0_i32_0 = arith.constant 0 : i32
    %c0_i32_1 = arith.constant 0 : i32
    return %c0_i32, %c0_i32_0 : i32, i32
  }
  func.func @transform_8(%arg0: i32) -> (i32, i32) {
    %c0_i32 = arith.constant 0 : i32
    %c0_i32_0 = arith.constant 0 : i32
    %c0_i32_1 = arith.constant 0 : i32
    return %c0_i32, %c0_i32_0 : i32, i32
  }
  func.func @transform_9(%arg0: i32) -> (i32, i32) {
    %c0_i32 = arith.constant 0 : i32
    %c0_i32_0 = arith.constant 0 : i32
    %c0_i32_1 = arith.constant 0 : i32
    return %c0_i32, %c0_i32_0 : i32, i32
  }
  func.func @transform_10(%arg0: i32) -> (i32, i32) {
    %c0_i32 = arith.constant 0 : i32
    %c0_i32_0 = arith.constant 0 : i32
    %c0_i32_1 = arith.constant 0 : i32
    return %c0_i32, %c0_i32_0 : i32, i32
  }
  func.func @transform_11(%arg0: i32) -> (i32, i32) {
    %c0_i32 = arith.constant 0 : i32
    %c0_i32_0 = arith.constant 0 : i32
    %c0_i32_1 = arith.constant 0 : i32
    return %c0_i32, %c0_i32_0 : i32, i32
  }
  func.func @transform_12(%arg0: i32) -> (i32, i32, i32) {
    %c0_i32 = arith.constant 0 : i32
    %c0_i32_0 = arith.constant 0 : i32
    %c0_i32_1 = arith.constant 0 : i32
    return %arg0, %c0_i32, %c0_i32_0 : i32, i32, i32
  }
}

</mosaic_0001>

<llo_original>
// kernel: convnext_block.1
$region0: #{convnext_block.1}
  #allocation0 [shape = 'u32[]', space=smem, size = 0x4, offset = 0x4, fixed_abs, tag = 'smem constant byte address 0x4 - core index']
  #allocation1 [shape = 'u32[144,128]{1,0:T(1,128)}', space=vmem, size = 0x12000, scoped, tag = 'internal scratch']
  %s0 = inlined_call_operand.vmem [shape: f32[2,4,256], index: 0, kind: input, shape index: {}]
  %s1 = inlined_call_operand.vmem [shape: f32[49,4,1], index: 1, kind: input, shape index: {}]
  %s2 = inlined_call_operand.vmem [shape: f32[49,1,256], index: 2, kind: input, shape index: {}]
  %s3 = inlined_call_operand.vmem [shape: f32[4,1], index: 3, kind: input, shape index: {}]
  %s4 = inlined_call_operand.vmem [shape: f32[4,1], index: 4, kind: input, shape index: {}]
  %s5 = inlined_call_operand.vmem [shape: f32[4,1], index: 5, kind: input, shape index: {}]
  %s6 = inlined_call_operand.vmem [shape: bf16[16,4], index: 6, kind: input, shape index: {}]
  %s7 = inlined_call_operand.vmem [shape: f32[16,1], index: 7, kind: input, shape index: {}]
  %s8 = inlined_call_operand.vmem [shape: bf16[8,16], index: 8, kind: input, shape index: {}]
  %s9 = inlined_call_operand.vmem [shape: f32[8,1], index: 9, kind: input, shape index: {}]
  %s10 = inlined_call_operand.vmem [shape: bf16[8,4], index: 10, kind: input, shape index: {}]
  %s11 = inlined_call_operand.vmem [shape: f32[8,1], index: 11, kind: input, shape index: {}]
  %s12 = inlined_call_operand.vmem [shape: f32[2,8,256], index: 12, kind: output, shape index: {}]
  %s13 = sld [smem:[#allocation0]]
  $region81: #{convnext_block.1} parent=0
    _
  %s15 = ssub.s32 1, %s13
  %s16 = scalar_select 0, %s15, %s13
  loop: start=0, step=1, limit=4
  $region2: #{convnext_block.1} parent=0 // loop_pre_header
    _
  $region3: #{convnext_block.1} parent=0 // loop_header
    %s18 = sphi 0, %s22
    %p19 = scmp.ge.s32.totalorder %s18, 4
    %s28 = sphi 0, %s30
    %s31 = sphi 0, %s28
    %s32 = sphi 0, %s31
    %s48 = sphi 0, %s32
    %s52 = sphi 0, %s52
    %s54 = sphi 0, %s52
    %s55 = sphi 0, %s54
    %s69 = sphi 0, %s55
    %s73 = sphi 0, %s73
    %s75 = sphi 0, %s73
    %s76 = sphi 0, %s75
    %s90 = sphi 0, %s76
    %s94 = sphi 0, %s94
    %s96 = sphi 0, %s94
    %s97 = sphi 0, %s96
    %s111 = sphi 0, %s97
    %s115 = sphi 0, %s115
    %s117 = sphi 0, %s115
    %s118 = sphi 0, %s117
    %s132 = sphi 0, %s118
    %s136 = sphi 0, %s136
    %s138 = sphi 0, %s136
    %s139 = sphi 0, %s138
    %s153 = sphi 0, %s139
    %s157 = sphi 0, %s157
    %s159 = sphi 0, %s157
    %s160 = sphi 0, %s159
    %s174 = sphi 0, %s160
    %s178 = sphi 0, %s178
    %s180 = sphi 0, %s178
    %s181 = sphi 0, %s180
    %s195 = sphi 0, %s181
    %s199 = sphi 0, %s199
    %s201 = sphi 0, %s199
    %s202 = sphi 0, %s201
    %s216 = sphi 0, %s202
    %s220 = sphi 0, %s220
    %s222 = sphi 0, %s220
    %s223 = sphi 0, %s222
    %s237 = sphi 0, %s223
    %s241 = sphi 0, %s241
    %s243 = sphi 0, %s241
    %s244 = sphi 0, %s243
    %s258 = sphi 0, %s244
    %s262 = sphi 0, %s262
    %s264 = sphi 0, %s262
    %s265 = sphi 0, %s264
    %s279 = sphi 0, %s265
    %s285 = sphi 0, %s287
    %s288 = sphi 0, %s285
    %s289 = sphi 0, %s288
    %s305 = sphi 0, %s289
  $region4: #{convnext_block.1} parent=0 // loop_header_branch
    %21 = sbr.rel (%p19) target = $region8
  $region5: #{convnext_block.1} parent=0 // loop_body
    %s23 = ssub.s32 %s18, 1
    %s24 = ssub.s32 %s18, 2
    %s25 = sadd.s32 %s18, 1
    %s26 = ssub.s32 %s18, %s25
    %p27 = scmp.eq.s32.totalorder %s26, 0
    %s29 = sadd.s32 %s28, 1
    %s30 = scalar_select %p27, %s28, %s29
    %p33 = pneg %p27
    %p34 = scmp.eq.s32.totalorder %s18, 1
    %p35 = por %p33, %p34
    %p36 = scmp.ne.s32.totalorder %s28, %s31
    %p37 = scmp.eq.s32.totalorder %s18, 0
    %p38 = por %p36, %p37
    %p39 = scmp.ne.s32.totalorder %s28, %s31
    %p40 = scmp.eq.s32.totalorder %s23, 1
    %p41 = por %p39, %p40
    %p42 = scmp.ne.s32.totalorder %s31, %s32
    %p43 = scmp.eq.s32.totalorder %s23, 0
    %p44 = por %p42, %p43
    %p45 = scmp.ne.s32.totalorder %s31, %s32
    %p46 = scmp.eq.s32.totalorder %s24, 1
    %p47 = por %p45, %p46
    %p49 = scmp.ne.s32.totalorder %s32, %s48
    %p50 = scmp.eq.s32.totalorder %s24, 0
    %p51 = por %p49, %p50
    %s53 = sadd.s32 %s52, 1
    %p56 = scmp.eq.s32.totalorder %s18, 1
    %p57 = scmp.ne.s32.totalorder %s52, %s54
    %p58 = scmp.eq.s32.totalorder %s18, 0
    %p59 = por %p57, %p58
    %p60 = scmp.ne.s32.totalorder %s52, %s54
    %p61 = scmp.eq.s32.totalorder %s23, 1
    %p62 = por %p60, %p61
    %p63 = scmp.ne.s32.totalorder %s54, %s55
    %p64 = scmp.eq.s32.totalorder %s23, 0
    %p65 = por %p63, %p64
    %p66 = scmp.ne.s32.totalorder %s54, %s55
    %p67 = scmp.eq.s32.totalorder %s24, 1
    %p68 = por %p66, %p67
    %p70 = scmp.ne.s32.totalorder %s55, %s69
    %p71 = scmp.eq.s32.totalorder %s24, 0
    %p72 = por %p70, %p71
    %s74 = sadd.s32 %s73, 1
    %p77 = scmp.eq.s32.totalorder %s18, 1
    %p78 = scmp.ne.s32.totalorder %s73, %s75
    %p79 = scmp.eq.s32.totalorder %s18, 0
    %p80 = por %p78, %p79
    %p81 = scmp.ne.s32.totalorder %s73, %s75
    %p82 = scmp.eq.s32.totalorder %s23, 1
    %p83 = por %p81, %p82
    %p84 = scmp.ne.s32.totalorder %s75, %s76
    %p85 = scmp.eq.s32.totalorder %s23, 0
    %p86 = por %p84, %p85
    %p87 = scmp.ne.s32.totalorder %s75, %s76
    %p88 = scmp.eq.s32.totalorder %s24, 1
    %p89 = por %p87, %p88
    %p91 = scmp.ne.s32.totalorder %s76, %s90
    %p92 = scmp.eq.s32.totalorder %s24, 0
    %p93 = por %p91, %p92
    %s95 = sadd.s32 %s94, 1
    %p98 = scmp.eq.s32.totalorder %s18, 1
    %p99 = scmp.ne.s32.totalorder %s94, %s96
    %p100 = scmp.eq.s32.totalorder %s18, 0
    %p101 = por %p99, %p100
    %p102 = scmp.ne.s32.totalorder %s94, %s96
    %p103 = scmp.eq.s32.totalorder %s23, 1
    %p104 = por %p102, %p103
    %p105 = scmp.ne.s32.totalorder %s96, %s97
    %p106 = scmp.eq.s32.totalorder %s23, 0
    %p107 = por %p105, %p106
    %p108 = scmp.ne.s32.totalorder %s96, %s97
    %p109 = scmp.eq.s32.totalorder %s24, 1
    %p110 = por %p108, %p109
    %p112 = scmp.ne.s32.totalorder %s97, %s111
    %p113 = scmp.eq.s32.totalorder %s24, 0
    %p114 = por %p112, %p113
    %s116 = sadd.s32 %s115, 1
    %p119 = scmp.eq.s32.totalorder %s18, 1
    %p120 = scmp.ne.s32.totalorder %s115, %s117
    %p121 = scmp.eq.s32.totalorder %s18, 0
    %p122 = por %p120, %p121
    %p123 = scmp.ne.s32.totalorder %s115, %s117
    %p124 = scmp.eq.s32.totalorder %s23, 1
    %p125 = por %p123, %p124
    %p126 = scmp.ne.s32.totalorder %s117, %s118
    %p127 = scmp.eq.s32.totalorder %s23, 0
    %p128 = por %p126, %p127
    %p129 = scmp.ne.s32.totalorder %s117, %s118
    %p130 = scmp.eq.s32.totalorder %s24, 1
    %p131 = por %p129, %p130
    %p133 = scmp.ne.s32.totalorder %s118, %s132
    %p134 = scmp.eq.s32.totalorder %s24, 0
    %p135 = por %p133, %p134
    %s137 = sadd.s32 %s136, 1
    %p140 = scmp.eq.s32.totalorder %s18, 1
    %p141 = scmp.ne.s32.totalorder %s136, %s138
    %p142 = scmp.eq.s32.totalorder %s18, 0
    %p143 = por %p141, %p142
    %p144 = scmp.ne.s32.totalorder %s136, %s138
    %p145 = scmp.eq.s32.totalorder %s23, 1
    %p146 = por %p144, %p145
    %p147 = scmp.ne.s32.totalorder %s138, %s139
    %p148 = scmp.eq.s32.totalorder %s23, 0
    %p149 = por %p147, %p148
    %p150 = scmp.ne.s32.totalorder %s138, %s139
    %p151 = scmp.eq.s32.totalorder %s24, 1
    %p152 = por %p150, %p151
    %p154 = scmp.ne.s32.totalorder %s139, %s153
    %p155 = scmp.eq.s32.totalorder %s24, 0
    %p156 = por %p154, %p155
    %s158 = sadd.s32 %s157, 1
    %p161 = scmp.eq.s32.totalorder %s18, 1
    %p162 = scmp.ne.s32.totalorder %s157, %s159
    %p163 = scmp.eq.s32.totalorder %s18, 0
    %p164 = por %p162, %p163
    %p165 = scmp.ne.s32.totalorder %s157, %s159
    %p166 = scmp.eq.s32.totalorder %s23, 1
    %p167 = por %p165, %p166
    %p168 = scmp.ne.s32.totalorder %s159, %s160
    %p169 = scmp.eq.s32.totalorder %s23, 0
    %p170 = por %p168, %p169
    %p171 = scmp.ne.s32.totalorder %s159, %s160
    %p172 = scmp.eq.s32.totalorder %s24, 1
    %p173 = por %p171, %p172
    %p175 = scmp.ne.s32.totalorder %s160, %s174
    %p176 = scmp.eq.s32.totalorder %s24, 0
    %p177 = por %p175, %p176
    %s179 = sadd.s32 %s178, 1
    %p182 = scmp.eq.s32.totalorder %s18, 1
    %p183 = scmp.ne.s32.totalorder %s178, %s180
    %p184 = scmp.eq.s32.totalorder %s18, 0
    %p185 = por %p183, %p184
    %p186 = scmp.ne.s32.totalorder %s178, %s180
    %p187 = scmp.eq.s32.totalorder %s23, 1
    %p188 = por %p186, %p187
    %p189 = scmp.ne.s32.totalorder %s180, %s181
    %p190 = scmp.eq.s32.totalorder %s23, 0
    %p191 = por %p189, %p190
    %p192 = scmp.ne.s32.totalorder %s180, %s181
    %p193 = scmp.eq.s32.totalorder %s24, 1
    %p194 = por %p192, %p193
    %p196 = scmp.ne.s32.totalorder %s181, %s195
    %p197 = scmp.eq.s32.totalorder %s24, 0
    %p198 = por %p196, %p197
    %s200 = sadd.s32 %s199, 1
    %p203 = scmp.eq.s32.totalorder %s18, 1
    %p204 = scmp.ne.s32.totalorder %s199, %s201
    %p205 = scmp.eq.s32.totalorder %s18, 0
    %p206 = por %p204, %p205
    %p207 = scmp.ne.s32.totalorder %s199, %s201
    %p208 = scmp.eq.s32.totalorder %s23, 1
    %p209 = por %p207, %p208
    %p210 = scmp.ne.s32.totalorder %s201, %s202
    %p211 = scmp.eq.s32.totalorder %s23, 0
    %p212 = por %p210, %p211
    %p213 = scmp.ne.s32.totalorder %s201, %s202
    %p214 = scmp.eq.s32.totalorder %s24, 1
    %p215 = por %p213, %p214
    %p217 = scmp.ne.s32.totalorder %s202, %s216
    %p218 = scmp.eq.s32.totalorder %s24, 0
    %p219 = por %p217, %p218
    %s221 = sadd.s32 %s220, 1
    %p224 = scmp.eq.s32.totalorder %s18, 1
    %p225 = scmp.ne.s32.totalorder %s220, %s222
    %p226 = scmp.eq.s32.totalorder %s18, 0
    %p227 = por %p225, %p226
    %p228 = scmp.ne.s32.totalorder %s220, %s222
    %p229 = scmp.eq.s32.totalorder %s23, 1
    %p230 = por %p228, %p229
    %p231 = scmp.ne.s32.totalorder %s222, %s223
    %p232 = scmp.eq.s32.totalorder %s23, 0
    %p233 = por %p231, %p232
    %p234 = scmp.ne.s32.totalorder %s222, %s223
    %p235 = scmp.eq.s32.totalorder %s24, 1
    %p236 = por %p234, %p235
    %p238 = scmp.ne.s32.totalorder %s223, %s237
    %p239 = scmp.eq.s32.totalorder %s24, 0
    %p240 = por %p238, %p239
    %s242 = sadd.s32 %s241, 1
    %p245 = scmp.eq.s32.totalorder %s18, 1
    %p246 = scmp.ne.s32.totalorder %s241, %s243
    %p247 = scmp.eq.s32.totalorder %s18, 0
    %p248 = por %p246, %p247
    %p249 = scmp.ne.s32.totalorder %s241, %s243
    %p250 = scmp.eq.s32.totalorder %s23, 1
    %p251 = por %p249, %p250
    %p252 = scmp.ne.s32.totalorder %s243, %s244
    %p253 = scmp.eq.s32.totalorder %s23, 0
    %p254 = por %p252, %p253
    %p255 = scmp.ne.s32.totalorder %s243, %s244
    %p256 = scmp.eq.s32.totalorder %s24, 1
    %p257 = por %p255, %p256
    %p259 = scmp.ne.s32.totalorder %s244, %s258
    %p260 = scmp.eq.s32.totalorder %s24, 0
    %p261 = por %p259, %p260
    %s263 = sadd.s32 %s262, 1
    %p266 = scmp.eq.s32.totalorder %s18, 1
    %p267 = scmp.ne.s32.totalorder %s262, %s264
    %p268 = scmp.eq.s32.totalorder %s18, 0
    %p269 = por %p267, %p268
    %p270 = scmp.ne.s32.totalorder %s262, %s264
    %p271 = scmp.eq.s32.totalorder %s23, 1
    %p272 = por %p270, %p271
    %p273 = scmp.ne.s32.totalorder %s264, %s265
    %p274 = scmp.eq.s32.totalorder %s23, 0
    %p275 = por %p273, %p274
    %p276 = scmp.ne.s32.totalorder %s264, %s265
    %p277 = scmp.eq.s32.totalorder %s24, 1
    %p278 = por %p276, %p277
    %p280 = scmp.ne.s32.totalorder %s265, %s279
    %p281 = scmp.eq.s32.totalorder %s24, 0
    %p282 = por %p280, %p281
    %s283 = ssub.s32 %s18, %s25
    %p284 = scmp.eq.s32.totalorder %s283, 0
    %s286 = sadd.s32 %s285, 1
    %s287 = scalar_select %p284, %s285, %s286
    %p290 = pneg %p284
    %p291 = scmp.eq.s32.totalorder %s18, 1
    %p292 = por %p290, %p291
    %p293 = scmp.ne.s32.totalorder %s285, %s288
    %p294 = scmp.eq.s32.totalorder %s18, 0
    %p295 = por %p293, %p294
    %p296 = scmp.ne.s32.totalorder %s285, %s288
    %p297 = scmp.eq.s32.totalorder %s23, 1
    %p298 = por %p296, %p297
    %p299 = scmp.ne.s32.totalorder %s288, %s289
    %p300 = scmp.eq.s32.totalorder %s23, 0
    %p301 = por %p299, %p300
    %p302 = scmp.ne.s32.totalorder %s288, %s289
    %p303 = scmp.eq.s32.totalorder %s24, 1
    %p304 = por %p302, %p303
    %p306 = scmp.ne.s32.totalorder %s289, %s305
    %p307 = scmp.eq.s32.totalorder %s24, 0
    %p308 = por %p306, %p307
    %p309 = scmp.le.s32.totalorder 1, %s18
    %p310 = scmp.lt.s32.totalorder %s18, 3
    %p311 = pnand %p309, %p310
    %p312 = pneg %p311
    // Predicated region
    $region9: #{convnext_block.1} parent=5 // pred_check
      _
    $region10: #{convnext_block.1} parent=5 // pred_check_branch
      %314 = sbr.rel (%p311) target = $region12
    $region11: #{convnext_block.1} parent=5 // pred_region
      %s315 = ssub.s32 %s18, 1
      // Predicated region
      $region13: #{convnext_block.1} parent=11 // pred_check
        %p316 = pneg %p65
      $region14: #{convnext_block.1} parent=11 // pred_check_branch
        %318 = sbr.rel (%p316) target = $region16
      $region15: #{convnext_block.1} parent=11 // pred_region
        _
      $region16: #{convnext_block.1} parent=11 // pred_fallthru
        _
      // Predicated region
      $region17: #{convnext_block.1} parent=11 // pred_check
        %p319 = pneg %p86
      $region18: #{convnext_block.1} parent=11 // pred_check_branch
        %321 = sbr.rel (%p319) target = $region20
      $region19: #{convnext_block.1} parent=11 // pred_region
        _
      $region20: #{convnext_block.1} parent=11 // pred_fallthru
        _
      // Predicated region
      $region21: #{convnext_block.1} parent=11 // pred_check
        %p322 = pneg %p107
      $region22: #{convnext_block.1} parent=11 // pred_check_branch
        %324 = sbr.rel (%p322) target = $region24
      $region23: #{convnext_block.1} parent=11 // pred_region
        _
      $region24: #{convnext_block.1} parent=11 // pred_fallthru
        _
      // Predicated region
      $region25: #{convnext_block.1} parent=11 // pred_check
        %p325 = pneg %p128
      $region26: #{convnext_block.1} parent=11 // pred_check_branch
        %327 = sbr.rel (%p325) target = $region28
      $region27: #{convnext_block.1} parent=11 // pred_region
        _
      $region28: #{convnext_block.1} parent=11 // pred_fallthru
        _
      // Predicated region
      $region29: #{convnext_block.1} parent=11 // pred_check
        %p328 = pneg %p149
      $region30: #{convnext_block.1} parent=11 // pred_check_branch
        %330 = sbr.rel (%p328) target = $region32
      $region31: #{convnext_block.1} parent=11 // pred_region
        _
      $region32: #{convnext_block.1} parent=11 // pred_fallthru
        _
      // Predicated region
      $region33: #{convnext_block.1} parent=11 // pred_check
        %p331 = pneg %p170
      $region34: #{convnext_block.1} parent=11 // pred_check_branch
        %333 = sbr.rel (%p331) target = $region36
      $region35: #{convnext_block.1} parent=11 // pred_region
        _
      $region36: #{convnext_block.1} parent=11 // pred_fallthru
        _
      // Predicated region
      $region37: #{convnext_block.1} parent=11 // pred_check
        %p334 = pneg %p191
      $region38: #{convnext_block.1} parent=11 // pred_check_branch
        %336 = sbr.rel (%p334) target = $region40
      $region39: #{convnext_block.1} parent=11 // pred_region
        _
      $region40: #{convnext_block.1} parent=11 // pred_fallthru
        _
      // Predicated region
      $region41: #{convnext_block.1} parent=11 // pred_check
        %p337 = pneg %p212
      $region42: #{convnext_block.1} parent=11 // pred_check_branch
        %339 = sbr.rel (%p337) target = $region44
      $region43: #{convnext_block.1} parent=11 // pred_region
        _
      $region44: #{convnext_block.1} parent=11 // pred_fallthru
        _
      // Predicated region
      $region45: #{convnext_block.1} parent=11 // pred_check
        %p340 = pneg %p233
      $region46: #{convnext_block.1} parent=11 // pred_check_branch
        %342 = sbr.rel (%p340) target = $region48
      $region47: #{convnext_block.1} parent=11 // pred_region
        _
      $region48: #{convnext_block.1} parent=11 // pred_fallthru
        _
      // Predicated region
      $region49: #{convnext_block.1} parent=11 // pred_check
        %p343 = pneg %p254
      $region50: #{convnext_block.1} parent=11 // pred_check_branch
        %345 = sbr.rel (%p343) target = $region52
      $region51: #{convnext_block.1} parent=11 // pred_region
        _
      $region52: #{convnext_block.1} parent=11 // pred_fallthru
        _
      // Predicated region
      $region53: #{convnext_block.1} parent=11 // pred_check
        %p346 = pneg %p275
      $region54: #{convnext_block.1} parent=11 // pred_check_branch
        %348 = sbr.rel (%p346) target = $region56
      $region55: #{convnext_block.1} parent=11 // pred_region
        _
      $region56: #{convnext_block.1} parent=11 // pred_fallthru
        _
    $region12: #{convnext_block.1} parent=5 // pred_fallthru
      _
    %p349 = scmp.lt.s32.totalorder %s18, 2
    // Predicated region
    $region57: #{convnext_block.1} parent=5 // pred_check
      %p350 = pneg %p349
    $region58: #{convnext_block.1} parent=5 // pred_check_branch
      %352 = sbr.rel (%p350) target = $region60
    $region59: #{convnext_block.1} parent=5 // pred_region
      // Predicated region
      $region61: #{convnext_block.1} parent=59 // pred_check
        %p353 = pneg %p38
      $region62: #{convnext_block.1} parent=59 // pred_check_branch
        %355 = sbr.rel (%p353) target = $region64
      $region63: #{convnext_block.1} parent=59 // pred_region
        %p356 = scmp.lt.s32.totalorder %s18, 1
        %s357 = scalar_select %p356, %s18, 1
        %s358 = smul.addr %s357, 2
        %s359 = smul.addr %s358, 4
        %s360 = scalar_lea.vmem %s0, %s359
      $region64: #{convnext_block.1} parent=59 // pred_fallthru
        _
    $region60: #{convnext_block.1} parent=5 // pred_fallthru
      _
    %p361 = scmp.le.s32.totalorder 1, %s18
    %p362 = scmp.lt.s32.totalorder %s18, 3
    %p363 = pnand %p361, %p362
    %p364 = pneg %p363
    // Predicated region
    $region65: #{convnext_block.1} parent=5 // pred_check
      _
    $region66: #{convnext_block.1} parent=5 // pred_check_branch
      %366 = sbr.rel (%p363) target = $region68
    $region67: #{convnext_block.1} parent=5 // pred_region
      %s367 = ssub.s32 %s18, 1
      %p368 = scmp.lt.s32.totalorder %s23, 1
      %s369 = scalar_select %p368, %s23, 1
      %s370 = smul.addr %s369, 2
      %s371 = smul.addr %s370, 4
      %s372 = scalar_lea.vmem %s0, %s371
      %p373 = pneg %p44
      %p374 = pneg %p41
      %p375 = pneg %p65
      %p376 = pneg %p62
      %p377 = pneg %p86
      %p378 = pneg %p83
      %p379 = pneg %p107
      %p380 = pneg %p104
      %p381 = pneg %p128
      %p382 = pneg %p125
      %p383 = pneg %p149
      %p384 = pneg %p146
      %p385 = pneg %p170
      %p386 = pneg %p167
      %p387 = pneg %p191
      %p388 = pneg %p188
      %p389 = pneg %p212
      %p390 = pneg %p209
      %p391 = pneg %p233
      %p392 = pneg %p230
      %p393 = pneg %p254
      %p394 = pneg %p251
      %p395 = pneg %p275
      %p396 = pneg %p272
      %p397 = pneg %p301
      %p398 = pneg %p298
      %p399 = scmp.lt.s32.totalorder %s23, 1
      %s400 = scalar_select %p399, %s23, 1
      %s401 = smul.addr %s400, 2
      %s402 = smul.addr %s401, 8
      %s403 = scalar_lea.vmem %s12, %s402
      %p404 = scmp.lt.s32.totalorder %s23, 1
      %s405 = scalar_select %p404, %s23, 1
      %s406 = smul.addr %s405, 2
      %s407 = smul.addr %s406, 4
      %s408 = scalar_lea.vmem %s0, %s407
      %p409 = scmp.lt.s32.totalorder %s23, 1
      %s410 = scalar_select %p409, %s23, 1
      %s411 = smul.addr %s410, 2
      %s412 = smul.addr %s411, 8
      %s413 = scalar_lea.vmem %s12, %s412
      %v415 = vld [vmem:[%s408] sm:$0xff]
      %v417 = vcombine.high %v415, %v415
      %419 = vrot.lane.b32.xlu0 %v415, 51
      %v420 = vpop.permute.xlu0 %419
      %421 = vrot.lane.b32.xlu0 %v417, 51
      %v422 = vpop.permute.xlu0 %421
      %v423 = vlaneseq
      %v424 = vand.u32 %v423, 127
      %vm425 = vcmp.lt.s32.totalorder %v424, 51
      %v426 = vsel %vm425, %v420, %v422
      %v427 = vsel %vm425, %v422, %v420
      %v428 = vld [vmem:[%s2] sm:$0x3]
      %v430 = vlaneseq
      %v431 = vshrl.u32 %v430, 7
      %v432 = vsub.s32 0, %v431
      %v433 = vrot.slane %v428, %v432
      %v434 = vlaneseq
      %v435 = vshrl.u32 %v434, 7
      %v436 = vsub.s32 1, %v435
      %v437 = vrot.slane %v428, %v436
      %v440 = vmul.f32 %v427, %v433
      %v441 = vmul.f32 %v426, %v437
      %v442 = vld [vmem:[%s1] sm:$0xf]
      %444 = vset.pattern.permute.xlu0 0
      %445 = vperm.xlu0 %444, %v442
      %v446 = vpop.permute.xlu0 %445
      %v448 = vmul.f32 %v440, %v446
      %v449 = vmul.f32 %v441, %v446
      %v450 = vadd.f32 %v448, 0.0
      %v451 = vadd.f32 %v449, 0.0
      %452 = vrot.lane.b32.xlu0 %v415, 50
      %v453 = vpop.permute.xlu0 %452
      %454 = vrot.lane.b32.xlu0 %v417, 50
      %v455 = vpop.permute.xlu0 %454
      %vm456 = vcmp.lt.s32.totalorder %v424, 50
      %v457 = vsel %vm456, %v453, %v455
      %v458 = vsel %vm456, %v455, %v453
      %s459 = scalar_lea.vmem %s2, 2
      %v460 = vld [vmem:[%s459] sm:$0x3]
      %v462 = vlaneseq
      %v463 = vshrl.u32 %v462, 7
      %v464 = vsub.s32 0, %v463
      %v465 = vrot.slane %v460, %v464
      %v466 = vlaneseq
      %v467 = vshrl.u32 %v466, 7
      %v468 = vsub.s32 1, %v467
      %v469 = vrot.slane %v460, %v468
      %v472 = vmul.f32 %v458, %v465
      %v473 = vmul.f32 %v457, %v469
      %s474 = scalar_lea.vmem %s1, 4
      %v475 = vld [vmem:[%s474] sm:$0xf]
      %477 = vset.pattern.permute.xlu0 0
      %478 = vperm.xlu0 %477, %v475
      %v479 = vpop.permute.xlu0 %478
      %v481 = vmul.f32 %v472, %v479
      %v482 = vmul.f32 %v473, %v479
      %v483 = vadd.f32 %v450, %v481
      %v484 = vadd.f32 %v451, %v482
      %485 = vrot.lane.b32.xlu0 %v415, 49
      %v486 = vpop.permute.xlu0 %485
      %487 = vrot.lane.b32.xlu0 %v417, 49
      %v488 = vpop.permute.xlu0 %487
      %vm489 = vcmp.lt.s32.totalorder %v424, 49
      %v490 = vsel %vm489, %v486, %v488
      %v491 = vsel %vm489, %v488, %v486
      %s492 = scalar_lea.vmem %s2, 4
      %v493 = vld [vmem:[%s492] sm:$0x3]
      %v495 = vlaneseq
      %v496 = vshrl.u32 %v495, 7
      %v497 = vsub.s32 0, %v496
      %v498 = vrot.slane %v493, %v497
      %v499 = vlaneseq
      %v500 = vshrl.u32 %v499, 7
      %v501 = vsub.s32 1, %v500
      %v502 = vrot.slane %v493, %v501
      %v505 = vmul.f32 %v491, %v498
      %v506 = vmul.f32 %v490, %v502
      %s507 = scalar_lea.vmem %s1, 8
      %v508 = vld [vmem:[%s507] sm:$0xf]
      %510 = vset.pattern.permute.xlu0 0
      %511 = vperm.xlu0 %510, %v508
      %v512 = vpop.permute.xlu0 %511
      %v514 = vmul.f32 %v505, %v512
      %v515 = vmul.f32 %v506, %v512
      %v516 = vadd.f32 %v483, %v514
      %v517 = vadd.f32 %v484, %v515
      %518 = vrot.lane.b32.xlu0 %v415, 48
      %v519 = vpop.permute.xlu0 %518
      %520 = vrot.lane.b32.xlu0 %v417, 48
      %v521 = vpop.permute.xlu0 %520
      %vm522 = vcmp.lt.s32.totalorder %v424, 48
      %v523 = vsel %vm522, %v519, %v521
      %v524 = vsel %vm522, %v521, %v519
      %s525 = scalar_lea.vmem %s2, 6
      %v526 = vld [vmem:[%s525] sm:$0x3]
      %v528 = vlaneseq
      %v529 = vshrl.u32 %v528, 7
      %v530 = vsub.s32 0, %v529
      %v531 = vrot.slane %v526, %v530
      %v532 = vlaneseq
      %v533 = vshrl.u32 %v532, 7
      %v534 = vsub.s32 1, %v533
      %v535 = vrot.slane %v526, %v534
      %v538 = vmul.f32 %v524, %v531
      %v539 = vmul.f32 %v523, %v535
      %s540 = scalar_lea.vmem %s1, 12
      %v541 = vld [vmem:[%s540] sm:$0xf]
      %543 = vset.pattern.permute.xlu0 0
      %544 = vperm.xlu0 %543, %v541
      %v545 = vpop.permute.xlu0 %544
      %v547 = vmul.f32 %v538, %v545
      %v548 = vmul.f32 %v539, %v545
      %v549 = vadd.f32 %v516, %v547
      %v550 = vadd.f32 %v517, %v548
      %551 = vrot.lane.b32.xlu0 %v415, 47
      %v552 = vpop.permute.xlu0 %551
      %553 = vrot.lane.b32.xlu0 %v417, 47
      %v554 = vpop.permute.xlu0 %553
      %vm555 = vcmp.lt.s32.totalorder %v424, 47
      %v556 = vsel %vm555, %v552, %v554
      %v557 = vsel %vm555, %v554, %v552
      %s558 = scalar_lea.vmem %s2, 8
      %v559 = vld [vmem:[%s558] sm:$0x3]
      %v561 = vlaneseq
      %v562 = vshrl.u32 %v561, 7
      %v563 = vsub.s32 0, %v562
      %v564 = vrot.slane %v559, %v563
      %v565 = vlaneseq
      %v566 = vshrl.u32 %v565, 7
      %v567 = vsub.s32 1, %v566
      %v568 = vrot.slane %v559, %v567
      %v571 = vmul.f32 %v557, %v564
      %v572 = vmul.f32 %v556, %v568
      %s573 = scalar_lea.vmem %s1, 16
      %v574 = vld [vmem:[%s573] sm:$0xf]
      %576 = vset.pattern.permute.xlu0 0
      %577 = vperm.xlu0 %576, %v574
      %v578 = vpop.permute.xlu0 %577
      %v580 = vmul.f32 %v571, %v578
      %v581 = vmul.f32 %v572, %v578
      %v582 = vadd.f32 %v549, %v580
      %v583 = vadd.f32 %v550, %v581
      %584 = vrot.lane.b32.xlu0 %v415, 46
      %v585 = vpop.permute.xlu0 %584
      %586 = vrot.lane.b32.xlu0 %v417, 46
      %v587 = vpop.permute.xlu0 %586
      %vm588 = vcmp.lt.s32.totalorder %v424, 46
      %v589 = vsel %vm588, %v585, %v587
      %v590 = vsel %vm588, %v587, %v585
      %s591 = scalar_lea.vmem %s2, 10
      %v592 = vld [vmem:[%s591] sm:$0x3]
      %v594 = vlaneseq
      %v595 = vshrl.u32 %v594, 7
      %v596 = vsub.s32 0, %v595
      %v597 = vrot.slane %v592, %v596
      %v598 = vlaneseq
      %v599 = vshrl.u32 %v598, 7
      %v600 = vsub.s32 1, %v599
      %v601 = vrot.slane %v592, %v600
      %v604 = vmul.f32 %v590, %v597
      %v605 = vmul.f32 %v589, %v601
      %s606 = scalar_lea.vmem %s1, 20
      %v607 = vld [vmem:[%s606] sm:$0xf]
      %609 = vset.pattern.permute.xlu0 0
      %610 = vperm.xlu0 %609, %v607
      %v611 = vpop.permute.xlu0 %610
      %v613 = vmul.f32 %v604, %v611
      %v614 = vmul.f32 %v605, %v611
      %v615 = vadd.f32 %v582, %v613
      %v616 = vadd.f32 %v583, %v614
      %617 = vrot.lane.b32.xlu0 %v415, 45
      %v618 = vpop.permute.xlu0 %617
      %619 = vrot.lane.b32.xlu0 %v417, 45
      %v620 = vpop.permute.xlu0 %619
      %vm621 = vcmp.lt.s32.totalorder %v424, 45
      %v622 = vsel %vm621, %v618, %v620
      %v623 = vsel %vm621, %v620, %v618
      %s624 = scalar_lea.vmem %s2, 12
      %v625 = vld [vmem:[%s624] sm:$0x3]
      %v627 = vlaneseq
      %v628 = vshrl.u32 %v627, 7
      %v629 = vsub.s32 0, %v628
      %v630 = vrot.slane %v625, %v629
      %v631 = vlaneseq
      %v632 = vshrl.u32 %v631, 7
      %v633 = vsub.s32 1, %v632
      %v634 = vrot.slane %v625, %v633
      %v637 = vmul.f32 %v623, %v630
      %v638 = vmul.f32 %v622, %v634
      %s639 = scalar_lea.vmem %s1, 24
      %v640 = vld [vmem:[%s639] sm:$0xf]
      %642 = vset.pattern.permute.xlu0 0
      %643 = vperm.xlu0 %642, %v640
      %v644 = vpop.permute.xlu0 %643
      %v646 = vmul.f32 %v637, %v644
      %v647 = vmul.f32 %v638, %v644
      %v648 = vadd.f32 %v615, %v646
      %v649 = vadd.f32 %v616, %v647
      %650 = vrot.lane.b32.xlu0 %v415, 35
      %v651 = vpop.permute.xlu0 %650
      %652 = vrot.lane.b32.xlu0 %v417, 35
      %v653 = vpop.permute.xlu0 %652
      %vm654 = vcmp.lt.s32.totalorder %v424, 35
      %v655 = vsel %vm654, %v651, %v653
      %v656 = vsel %vm654, %v653, %v651
      %s657 = scalar_lea.vmem %s2, 14
      %v658 = vld [vmem:[%s657] sm:$0x3]
      %v660 = vlaneseq
      %v661 = vshrl.u32 %v660, 7
      %v662 = vsub.s32 0, %v661
      %v663 = vrot.slane %v658, %v662
      %v664 = vlaneseq
      %v665 = vshrl.u32 %v664, 7
      %v666 = vsub.s32 1, %v665
      %v667 = vrot.slane %v658, %v666
      %v670 = vmul.f32 %v656, %v663
      %v671 = vmul.f32 %v655, %v667
      %s672 = scalar_lea.vmem %s1, 28
      %v673 = vld [vmem:[%s672] sm:$0xf]
      %675 = vset.pattern.permute.xlu0 0
      %676 = vperm.xlu0 %675, %v673
      %v677 = vpop.permute.xlu0 %676
      %v679 = vmul.f32 %v670, %v677
      %v680 = vmul.f32 %v671, %v677
      %v681 = vadd.f32 %v648, %v679
      %v682 = vadd.f32 %v649, %v680
      %683 = vrot.lane.b32.xlu0 %v415, 34
      %v684 = vpop.permute.xlu0 %683
      %685 = vrot.lane.b32.xlu0 %v417, 34
      %v686 = vpop.permute.xlu0 %685
      %vm687 = vcmp.lt.s32.totalorder %v424, 34
      %v688 = vsel %vm687, %v684, %v686
      %v689 = vsel %vm687, %v686, %v684
      %s690 = scalar_lea.vmem %s2, 16
      %v691 = vld [vmem:[%s690] sm:$0x3]
      %v693 = vlaneseq
      %v694 = vshrl.u32 %v693, 7
      %v695 = vsub.s32 0, %v694
      %v696 = vrot.slane %v691, %v695
      %v697 = vlaneseq
      %v698 = vshrl.u32 %v697, 7
      %v699 = vsub.s32 1, %v698
      %v700 = vrot.slane %v691, %v699
      %v703 = vmul.f32 %v689, %v696
      %v704 = vmul.f32 %v688, %v700
      %s705 = scalar_lea.vmem %s1, 32
      %v706 = vld [vmem:[%s705] sm:$0xf]
      %708 = vset.pattern.permute.xlu0 0
      %709 = vperm.xlu0 %708, %v706
      %v710 = vpop.permute.xlu0 %709
      %v712 = vmul.f32 %v703, %v710
      %v713 = vmul.f32 %v704, %v710
      %v714 = vadd.f32 %v681, %v712
      %v715 = vadd.f32 %v682, %v713
      %716 = vrot.lane.b32.xlu0 %v415, 33
      %v717 = vpop.permute.xlu0 %716
      %718 = vrot.lane.b32.xlu0 %v417, 33
      %v719 = vpop.permute.xlu0 %718
      %vm720 = vcmp.lt.s32.totalorder %v424, 33
      %v721 = vsel %vm720, %v717, %v719
      %v722 = vsel %vm720, %v719, %v717
      %s723 = scalar_lea.vmem %s2, 18
      %v724 = vld [vmem:[%s723] sm:$0x3]
      %v726 = vlaneseq
      %v727 = vshrl.u32 %v726, 7
      %v728 = vsub.s32 0, %v727
      %v729 = vrot.slane %v724, %v728
      %v730 = vlaneseq
      %v731 = vshrl.u32 %v730, 7
      %v732 = vsub.s32 1, %v731
      %v733 = vrot.slane %v724, %v732
      %v736 = vmul.f32 %v722, %v729
      %v737 = vmul.f32 %v721, %v733
      %s738 = scalar_lea.vmem %s1, 36
      %v739 = vld [vmem:[%s738] sm:$0xf]
      %741 = vset.pattern.permute.xlu0 0
      %742 = vperm.xlu0 %741, %v739
      %v743 = vpop.permute.xlu0 %742
      %v745 = vmul.f32 %v736, %v743
      %v746 = vmul.f32 %v737, %v743
      %v747 = vadd.f32 %v714, %v745
      %v748 = vadd.f32 %v715, %v746
      %749 = vrot.lane.b32.xlu0 %v415, 32
      %v750 = vpop.permute.xlu0 %749
      %751 = vrot.lane.b32.xlu0 %v417, 32
      %v752 = vpop.permute.xlu0 %751
      %vm753 = vcmp.lt.s32.totalorder %v424, 32
      %v754 = vsel %vm753, %v750, %v752
      %v755 = vsel %vm753, %v752, %v750
      %s756 = scalar_lea.vmem %s2, 20
      %v757 = vld [vmem:[%s756] sm:$0x3]
      %v759 = vlaneseq
      %v760 = vshrl.u32 %v759, 7
      %v761 = vsub.s32 0, %v760
      %v762 = vrot.slane %v757, %v761
      %v763 = vlaneseq
      %v764 = vshrl.u32 %v763, 7
      %v765 = vsub.s32 1, %v764
      %v766 = vrot.slane %v757, %v765
      %v769 = vmul.f32 %v755, %v762
      %v770 = vmul.f32 %v754, %v766
      %s771 = scalar_lea.vmem %s1, 40
      %v772 = vld [vmem:[%s771] sm:$0xf]
      %774 = vset.pattern.permute.xlu0 0
      %775 = vperm.xlu0 %774, %v772
      %v776 = vpop.permute.xlu0 %775
      %v778 = vmul.f32 %v769, %v776
      %v779 = vmul.f32 %v770, %v776
      %v780 = vadd.f32 %v747, %v778
      %v781 = vadd.f32 %v748, %v779
      %782 = vrot.lane.b32.xlu0 %v415, 31
      %v783 = vpop.permute.xlu0 %782
      %784 = vrot.lane.b32.xlu0 %v417, 31
      %v785 = vpop.permute.xlu0 %784
      %vm786 = vcmp.lt.s32.totalorder %v424, 31
      %v787 = vsel %vm786, %v783, %v785
      %v788 = vsel %vm786, %v785, %v783
      %s789 = scalar_lea.vmem %s2, 22
      %v790 = vld [vmem:[%s789] sm:$0x3]
      %v792 = vlaneseq
      %v793 = vshrl.u32 %v792, 7
      %v794 = vsub.s32 0, %v793
      %v795 = vrot.slane %v790, %v794
      %v796 = vlaneseq
      %v797 = vshrl.u32 %v796, 7
      %v798 = vsub.s32 1, %v797
      %v799 = vrot.slane %v790, %v798
      %v802 = vmul.f32 %v788, %v795
      %v803 = vmul.f32 %v787, %v799
      %s804 = scalar_lea.vmem %s1, 44
      %v805 = vld [vmem:[%s804] sm:$0xf]
      %807 = vset.pattern.permute.xlu0 0
      %808 = vperm.xlu0 %807, %v805
      %v809 = vpop.permute.xlu0 %808
      %v811 = vmul.f32 %v802, %v809
      %v812 = vmul.f32 %v803, %v809
      %v813 = vadd.f32 %v780, %v811
      %v814 = vadd.f32 %v781, %v812
      %815 = vrot.lane.b32.xlu0 %v415, 30
      %v816 = vpop.permute.xlu0 %815
      %817 = vrot.lane.b32.xlu0 %v417, 30
      %v818 = vpop.permute.xlu0 %817
      %vm819 = vcmp.lt.s32.totalorder %v424, 30
      %v820 = vsel %vm819, %v816, %v818
      %v821 = vsel %vm819, %v818, %v816
      %s822 = scalar_lea.vmem %s2, 24
      %v823 = vld [vmem:[%s822] sm:$0x3]
      %v825 = vlaneseq
      %v826 = vshrl.u32 %v825, 7
      %v827 = vsub.s32 0, %v826
      %v828 = vrot.slane %v823, %v827
      %v829 = vlaneseq
      %v830 = vshrl.u32 %v829, 7
      %v831 = vsub.s32 1, %v830
      %v832 = vrot.slane %v823, %v831
      %v835 = vmul.f32 %v821, %v828
      %v836 = vmul.f32 %v820, %v832
      %s837 = scalar_lea.vmem %s1, 48
      %v838 = vld [vmem:[%s837] sm:$0xf]
      %840 = vset.pattern.permute.xlu0 0
      %841 = vperm.xlu0 %840, %v838
      %v842 = vpop.permute.xlu0 %841
      %v844 = vmul.f32 %v835, %v842
      %v845 = vmul.f32 %v836, %v842
      %v846 = vadd.f32 %v813, %v844
      %v847 = vadd.f32 %v814, %v845
      %848 = vrot.lane.b32.xlu0 %v415, 29
      %v849 = vpop.permute.xlu0 %848
      %850 = vrot.lane.b32.xlu0 %v417, 29
      %v851 = vpop.permute.xlu0 %850
      %vm852 = vcmp.lt.s32.totalorder %v424, 29
      %v853 = vsel %vm852, %v849, %v851
      %v854 = vsel %vm852, %v851, %v849
      %s855 = scalar_lea.vmem %s2, 26
      %v856 = vld [vmem:[%s855] sm:$0x3]
      %v858 = vlaneseq
      %v859 = vshrl.u32 %v858, 7
      %v860 = vsub.s32 0, %v859
      %v861 = vrot.slane %v856, %v860
      %v862 = vlaneseq
      %v863 = vshrl.u32 %v862, 7
      %v864 = vsub.s32 1, %v863
      %v865 = vrot.slane %v856, %v864
      %v868 = vmul.f32 %v854, %v861
      %v869 = vmul.f32 %v853, %v865
      %s870 = scalar_lea.vmem %s1, 52
      %v871 = vld [vmem:[%s870] sm:$0xf]
      %873 = vset.pattern.permute.xlu0 0
      %874 = vperm.xlu0 %873, %v871
      %v875 = vpop.permute.xlu0 %874
      %v877 = vmul.f32 %v868, %v875
      %v878 = vmul.f32 %v869, %v875
      %v879 = vadd.f32 %v846, %v877
      %v880 = vadd.f32 %v847, %v878
      %881 = vrot.lane.b32.xlu0 %v415, 19
      %v882 = vpop.permute.xlu0 %881
      %883 = vrot.lane.b32.xlu0 %v417, 19
      %v884 = vpop.permute.xlu0 %883
      %vm885 = vcmp.lt.s32.totalorder %v424, 19
      %v886 = vsel %vm885, %v882, %v884
      %v887 = vsel %vm885, %v884, %v882
      %s888 = scalar_lea.vmem %s2, 28
      %v889 = vld [vmem:[%s888] sm:$0x3]
      %v891 = vlaneseq
      %v892 = vshrl.u32 %v891, 7
      %v893 = vsub.s32 0, %v892
      %v894 = vrot.slane %v889, %v893
      %v895 = vlaneseq
      %v896 = vshrl.u32 %v895, 7
      %v897 = vsub.s32 1, %v896
      %v898 = vrot.slane %v889, %v897
      %v901 = vmul.f32 %v887, %v894
      %v902 = vmul.f32 %v886, %v898
      %s903 = scalar_lea.vmem %s1, 56
      %v904 = vld [vmem:[%s903] sm:$0xf]
      %906 = vset.pattern.permute.xlu0 0
      %907 = vperm.xlu0 %906, %v904
      %v908 = vpop.permute.xlu0 %907
      %v910 = vmul.f32 %v901, %v908
      %v911 = vmul.f32 %v902, %v908
      %v912 = vadd.f32 %v879, %v910
      %v913 = vadd.f32 %v880, %v911
      %914 = vrot.lane.b32.xlu0 %v415, 18
      %v915 = vpop.permute.xlu0 %914
      %916 = vrot.lane.b32.xlu0 %v417, 18
      %v917 = vpop.permute.xlu0 %916
      %vm918 = vcmp.lt.s32.totalorder %v424, 18
      %v919 = vsel %vm918, %v915, %v917
      %v920 = vsel %vm918, %v917, %v915
      %s921 = scalar_lea.vmem %s2, 30
      %v922 = vld [vmem:[%s921] sm:$0x3]
      %v924 = vlaneseq
      %v925 = vshrl.u32 %v924, 7
      %v926 = vsub.s32 0, %v925
      %v927 = vrot.slane %v922, %v926
      %v928 = vlaneseq
      %v929 = vshrl.u32 %v928, 7
      %v930 = vsub.s32 1, %v929
      %v931 = vrot.slane %v922, %v930
      %v934 = vmul.f32 %v920, %v927
      %v935 = vmul.f32 %v919, %v931
      %s936 = scalar_lea.vmem %s1, 60
      %v937 = vld [vmem:[%s936] sm:$0xf]
      %939 = vset.pattern.permute.xlu0 0
      %940 = vperm.xlu0 %939, %v937
      %v941 = vpop.permute.xlu0 %940
      %v943 = vmul.f32 %v934, %v941
      %v944 = vmul.f32 %v935, %v941
      %v945 = vadd.f32 %v912, %v943
      %v946 = vadd.f32 %v913, %v944
      %947 = vrot.lane.b32.xlu0 %v415, 17
      %v948 = vpop.permute.xlu0 %947
      %949 = vrot.lane.b32.xlu0 %v417, 17
      %v950 = vpop.permute.xlu0 %949
      %vm951 = vcmp.lt.s32.totalorder %v424, 17
      %v952 = vsel %vm951, %v948, %v950
      %v953 = vsel %vm951, %v950, %v948
      %s954 = scalar_lea.vmem %s2, 32
      %v955 = vld [vmem:[%s954] sm:$0x3]
      %v957 = vlaneseq
      %v958 = vshrl.u32 %v957, 7
      %v959 = vsub.s32 0, %v958
      %v960 = vrot.slane %v955, %v959
      %v961 = vlaneseq
      %v962 = vshrl.u32 %v961, 7
      %v963 = vsub.s32 1, %v962
      %v964 = vrot.slane %v955, %v963
      %v967 = vmul.f32 %v953, %v960
      %v968 = vmul.f32 %v952, %v964
      %s969 = scalar_lea.vmem %s1, 64
      %v970 = vld [vmem:[%s969] sm:$0xf]
      %972 = vset.pattern.permute.xlu0 0
      %973 = vperm.xlu0 %972, %v970
      %v974 = vpop.permute.xlu0 %973
      %v976 = vmul.f32 %v967, %v974
      %v977 = vmul.f32 %v968, %v974
      %v978 = vadd.f32 %v945, %v976
      %v979 = vadd.f32 %v946, %v977
      %980 = vrot.lane.b32.xlu0 %v415, 16
      %v981 = vpop.permute.xlu0 %980
      %982 = vrot.lane.b32.xlu0 %v417, 16
      %v983 = vpop.permute.xlu0 %982
      %vm984 = vcmp.lt.s32.totalorder %v424, 16
      %v985 = vsel %vm984, %v981, %v983
      %v986 = vsel %vm984, %v983, %v981
      %s987 = scalar_lea.vmem %s2, 34
      %v988 = vld [vmem:[%s987] sm:$0x3]
      %v990 = vlaneseq
      %v991 = vshrl.u32 %v990, 7
      %v992 = vsub.s32 0, %v991
      %v993 = vrot.slane %v988, %v992
      %v994 = vlaneseq
      %v995 = vshrl.u32 %v994, 7
      %v996 = vsub.s32 1, %v995
      %v997 = vrot.slane %v988, %v996
      %v1000 = vmul.f32 %v986, %v993
      %v1001 = vmul.f32 %v985, %v997
      %s1002 = scalar_lea.vmem %s1, 68
      %v1003 = vld [vmem:[%s1002] sm:$0xf]
      %1005 = vset.pattern.permute.xlu0 0
      %1006 = vperm.xlu0 %1005, %v1003
      %v1007 = vpop.permute.xlu0 %1006
      %v1009 = vmul.f32 %v1000, %v1007
      %v1010 = vmul.f32 %v1001, %v1007
      %v1011 = vadd.f32 %v978, %v1009
      %v1012 = vadd.f32 %v979, %v1010
      %1013 = vrot.lane.b32.xlu0 %v415, 15
      %v1014 = vpop.permute.xlu0 %1013
      %1015 = vrot.lane.b32.xlu0 %v417, 15
      %v1016 = vpop.permute.xlu0 %1015
      %vm1017 = vcmp.lt.s32.totalorder %v424, 15
      %v1018 = vsel %vm1017, %v1014, %v1016
      %v1019 = vsel %vm1017, %v1016, %v1014
      %s1020 = scalar_lea.vmem %s2, 36
      %v1021 = vld [vmem:[%s1020] sm:$0x3]
      %v1023 = vlaneseq
      %v1024 = vshrl.u32 %v1023, 7
      %v1025 = vsub.s32 0, %v1024
      %v1026 = vrot.slane %v1021, %v1025
      %v1027 = vlaneseq
      %v1028 = vshrl.u32 %v1027, 7
      %v1029 = vsub.s32 1, %v1028
      %v1030 = vrot.slane %v1021, %v1029
      %v1033 = vmul.f32 %v1019, %v1026
      %v1034 = vmul.f32 %v1018, %v1030
      %s1035 = scalar_lea.vmem %s1, 72
      %v1036 = vld [vmem:[%s1035] sm:$0xf]
      %1038 = vset.pattern.permute.xlu0 0
      %1039 = vperm.xlu0 %1038, %v1036
      %v1040 = vpop.permute.xlu0 %1039
      %v1042 = vmul.f32 %v1033, %v1040
      %v1043 = vmul.f32 %v1034, %v1040
      %v1044 = vadd.f32 %v1011, %v1042
      %v1045 = vadd.f32 %v1012, %v1043
      %1046 = vrot.lane.b32.xlu0 %v415, 14
      %v1047 = vpop.permute.xlu0 %1046
      %1048 = vrot.lane.b32.xlu0 %v417, 14
      %v1049 = vpop.permute.xlu0 %1048
      %vm1050 = vcmp.lt.s32.totalorder %v424, 14
      %v1051 = vsel %vm1050, %v1047, %v1049
      %v1052 = vsel %vm1050, %v1049, %v1047
      %s1053 = scalar_lea.vmem %s2, 38
      %v1054 = vld [vmem:[%s1053] sm:$0x3]
      %v1056 = vlaneseq
      %v1057 = vshrl.u32 %v1056, 7
      %v1058 = vsub.s32 0, %v1057
      %v1059 = vrot.slane %v1054, %v1058
      %v1060 = vlaneseq
      %v1061 = vshrl.u32 %v1060, 7
      %v1062 = vsub.s32 1, %v1061
      %v1063 = vrot.slane %v1054, %v1062
      %v1066 = vmul.f32 %v1052, %v1059
      %v1067 = vmul.f32 %v1051, %v1063
      %s1068 = scalar_lea.vmem %s1, 76
      %v1069 = vld [vmem:[%s1068] sm:$0xf]
      %1071 = vset.pattern.permute.xlu0 0
      %1072 = vperm.xlu0 %1071, %v1069
      %v1073 = vpop.permute.xlu0 %1072
      %v1075 = vmul.f32 %v1066, %v1073
      %v1076 = vmul.f32 %v1067, %v1073
      %v1077 = vadd.f32 %v1044, %v1075
      %v1078 = vadd.f32 %v1045, %v1076
      %1079 = vrot.lane.b32.xlu0 %v415, 13
      %v1080 = vpop.permute.xlu0 %1079
      %1081 = vrot.lane.b32.xlu0 %v417, 13
      %v1082 = vpop.permute.xlu0 %1081
      %vm1083 = vcmp.lt.s32.totalorder %v424, 13
      %v1084 = vsel %vm1083, %v1080, %v1082
      %v1085 = vsel %vm1083, %v1082, %v1080
      %s1086 = scalar_lea.vmem %s2, 40
      %v1087 = vld [vmem:[%s1086] sm:$0x3]
      %v1089 = vlaneseq
      %v1090 = vshrl.u32 %v1089, 7
      %v1091 = vsub.s32 0, %v1090
      %v1092 = vrot.slane %v1087, %v1091
      %v1093 = vlaneseq
      %v1094 = vshrl.u32 %v1093, 7
      %v1095 = vsub.s32 1, %v1094
      %v1096 = vrot.slane %v1087, %v1095
      %v1099 = vmul.f32 %v1085, %v1092
      %v1100 = vmul.f32 %v1084, %v1096
      %s1101 = scalar_lea.vmem %s1, 80
      %v1102 = vld [vmem:[%s1101] sm:$0xf]
      %1104 = vset.pattern.permute.xlu0 0
      %1105 = vperm.xlu0 %1104, %v1102
      %v1106 = vpop.permute.xlu0 %1105
      %v1108 = vmul.f32 %v1099, %v1106
      %v1109 = vmul.f32 %v1100, %v1106
      %v1110 = vadd.f32 %v1077, %v1108
      %v1111 = vadd.f32 %v1078, %v1109
      %1112 = vrot.lane.b32.xlu0 %v415, 3
      %v1113 = vpop.permute.xlu0 %1112
      %1114 = vrot.lane.b32.xlu0 %v417, 3
      %v1115 = vpop.permute.xlu0 %1114
      %vm1116 = vcmp.lt.s32.totalorder %v424, 3
      %v1117 = vsel %vm1116, %v1113, %v1115
      %v1118 = vsel %vm1116, %v1115, %v1113
      %s1119 = scalar_lea.vmem %s2, 42
      %v1120 = vld [vmem:[%s1119] sm:$0x3]
      %v1122 = vlaneseq
      %v1123 = vshrl.u32 %v1122, 7
      %v1124 = vsub.s32 0, %v1123
      %v1125 = vrot.slane %v1120, %v1124
      %v1126 = vlaneseq
      %v1127 = vshrl.u32 %v1126, 7
      %v1128 = vsub.s32 1, %v1127
      %v1129 = vrot.slane %v1120, %v1128
      %v1132 = vmul.f32 %v1118, %v1125
      %v1133 = vmul.f32 %v1117, %v1129
      %s1134 = scalar_lea.vmem %s1, 84
      %v1135 = vld [vmem:[%s1134] sm:$0xf]
      %1137 = vset.pattern.permute.xlu0 0
      %1138 = vperm.xlu0 %1137, %v1135
      %v1139 = vpop.permute.xlu0 %1138
      %v1141 = vmul.f32 %v1132, %v1139
      %v1142 = vmul.f32 %v1133, %v1139
      %v1143 = vadd.f32 %v1110, %v1141
      %v1144 = vadd.f32 %v1111, %v1142
      %1145 = vrot.lane.b32.xlu0 %v415, 2
      %v1146 = vpop.permute.xlu0 %1145
      %1147 = vrot.lane.b32.xlu0 %v417, 2
      %v1148 = vpop.permute.xlu0 %1147
      %vm1149 = vcmp.lt.s32.totalorder %v424, 2
      %v1150 = vsel %vm1149, %v1146, %v1148
      %v1151 = vsel %vm1149, %v1148, %v1146
      %s1152 = scalar_lea.vmem %s2, 44
      %v1153 = vld [vmem:[%s1152] sm:$0x3]
      %v1155 = vlaneseq
      %v1156 = vshrl.u32 %v1155, 7
      %v1157 = vsub.s32 0, %v1156
      %v1158 = vrot.slane %v1153, %v1157
      %v1159 = vlaneseq
      %v1160 = vshrl.u32 %v1159, 7
      %v1161 = vsub.s32 1, %v1160
      %v1162 = vrot.slane %v1153, %v1161
      %v1165 = vmul.f32 %v1151, %v1158
      %v1166 = vmul.f32 %v1150, %v1162
      %s1167 = scalar_lea.vmem %s1, 88
      %v1168 = vld [vmem:[%s1167] sm:$0xf]
      %1170 = vset.pattern.permute.xlu0 0
      %1171 = vperm.xlu0 %1170, %v1168
      %v1172 = vpop.permute.xlu0 %1171
      %v1174 = vmul.f32 %v1165, %v1172
      %v1175 = vmul.f32 %v1166, %v1172
      %v1176 = vadd.f32 %v1143, %v1174
      %v1177 = vadd.f32 %v1144, %v1175
      %1178 = vrot.lane.b32.xlu0 %v415, 1
      %v1179 = vpop.permute.xlu0 %1178
      %1180 = vrot.lane.b32.xlu0 %v417, 1
      %v1181 = vpop.permute.xlu0 %1180
      %vm1182 = vcmp.lt.s32.totalorder %v424, 1
      %v1183 = vsel %vm1182, %v1179, %v1181
      %v1184 = vsel %vm1182, %v1181, %v1179
      %s1185 = scalar_lea.vmem %s2, 46
      %v1186 = vld [vmem:[%s1185] sm:$0x3]
      %v1188 = vlaneseq
      %v1189 = vshrl.u32 %v1188, 7
      %v1190 = vsub.s32 0, %v1189
      %v1191 = vrot.slane %v1186, %v1190
      %v1192 = vlaneseq
      %v1193 = vshrl.u32 %v1192, 7
      %v1194 = vsub.s32 1, %v1193
      %v1195 = vrot.slane %v1186, %v1194
      %v1198 = vmul.f32 %v1184, %v1191
      %v1199 = vmul.f32 %v1183, %v1195
      %s1200 = scalar_lea.vmem %s1, 92
      %v1201 = vld [vmem:[%s1200] sm:$0xf]
      %1203 = vset.pattern.permute.xlu0 0
      %1204 = vperm.xlu0 %1203, %v1201
      %v1205 = vpop.permute.xlu0 %1204
      %v1207 = vmul.f32 %v1198, %v1205
      %v1208 = vmul.f32 %v1199, %v1205
      %v1209 = vadd.f32 %v1176, %v1207
      %v1210 = vadd.f32 %v1177, %v1208
      %s1211 = scalar_lea.vmem %s2, 48
      %v1212 = vld [vmem:[%s1211] sm:$0x3]
      %v1214 = vlaneseq
      %v1215 = vshrl.u32 %v1214, 7
      %v1216 = vsub.s32 0, %v1215
      %v1217 = vrot.slane %v1212, %v1216
      %v1218 = vlaneseq
      %v1219 = vshrl.u32 %v1218, 7
      %v1220 = vsub.s32 1, %v1219
      %v1221 = vrot.slane %v1212, %v1220
      %v1224 = vmul.f32 %v415, %v1217
      %v1225 = vmul.f32 %v417, %v1221
      %s1226 = scalar_lea.vmem %s1, 96
      %v1227 = vld [vmem:[%s1226] sm:$0xf]
      %1229 = vset.pattern.permute.xlu0 0
      %1230 = vperm.xlu0 %1229, %v1227
      %v1231 = vpop.permute.xlu0 %1230
      %v1233 = vmul.f32 %v1224, %v1231
      %v1234 = vmul.f32 %v1225, %v1231
      %v1235 = vadd.f32 %v1209, %v1233
      %v1236 = vadd.f32 %v1210, %v1234
      %1237 = vrot.lane.b32.xlu0 %v415, 127
      %v1238 = vpop.permute.xlu0 %1237
      %1239 = vrot.lane.b32.xlu0 %v417, 127
      %v1240 = vpop.permute.xlu0 %1239
      %vm1241 = vcmp.lt.s32.totalorder %v424, 127
      %v1242 = vsel %vm1241, %v1238, %v1240
      %v1243 = vsel %vm1241, %v1240, %v1238
      %s1244 = scalar_lea.vmem %s2, 50
      %v1245 = vld [vmem:[%s1244] sm:$0x3]
      %v1247 = vlaneseq
      %v1248 = vshrl.u32 %v1247, 7
      %v1249 = vsub.s32 0, %v1248
      %v1250 = vrot.slane %v1245, %v1249
      %v1251 = vlaneseq
      %v1252 = vshrl.u32 %v1251, 7
      %v1253 = vsub.s32 1, %v1252
      %v1254 = vrot.slane %v1245, %v1253
      %v1257 = vmul.f32 %v1242, %v1250
      %v1258 = vmul.f32 %v1243, %v1254
      %s1259 = scalar_lea.vmem %s1, 100
      %v1260 = vld [vmem:[%s1259] sm:$0xf]
      %1262 = vset.pattern.permute.xlu0 0
      %1263 = vperm.xlu0 %1262, %v1260
      %v1264 = vpop.permute.xlu0 %1263
      %v1266 = vmul.f32 %v1257, %v1264
      %v1267 = vmul.f32 %v1258, %v1264
      %v1268 = vadd.f32 %v1235, %v1266
      %v1269 = vadd.f32 %v1236, %v1267
      %1270 = vrot.lane.b32.xlu0 %v415, 126
      %v1271 = vpop.permute.xlu0 %1270
      %1272 = vrot.lane.b32.xlu0 %v417, 126
      %v1273 = vpop.permute.xlu0 %1272
      %vm1274 = vcmp.lt.s32.totalorder %v424, 126
      %v1275 = vsel %vm1274, %v1271, %v1273
      %v1276 = vsel %vm1274, %v1273, %v1271
      %s1277 = scalar_lea.vmem %s2, 52
      %v1278 = vld [vmem:[%s1277] sm:$0x3]
      %v1280 = vlaneseq
      %v1281 = vshrl.u32 %v1280, 7
      %v1282 = vsub.s32 0, %v1281
      %v1283 = vrot.slane %v1278, %v1282
      %v1284 = vlaneseq
      %v1285 = vshrl.u32 %v1284, 7
      %v1286 = vsub.s32 1, %v1285
      %v1287 = vrot.slane %v1278, %v1286
      %v1290 = vmul.f32 %v1275, %v1283
      %v1291 = vmul.f32 %v1276, %v1287
      %s1292 = scalar_lea.vmem %s1, 104
      %v1293 = vld [vmem:[%s1292] sm:$0xf]
      %1295 = vset.pattern.permute.xlu0 0
      %1296 = vperm.xlu0 %1295, %v1293
      %v1297 = vpop.permute.xlu0 %1296
      %v1299 = vmul.f32 %v1290, %v1297
      %v1300 = vmul.f32 %v1291, %v1297
      %v1301 = vadd.f32 %v1268, %v1299
      %v1302 = vadd.f32 %v1269, %v1300
      %1303 = vrot.lane.b32.xlu0 %v415, 125
      %v1304 = vpop.permute.xlu0 %1303
      %1305 = vrot.lane.b32.xlu0 %v417, 125
      %v1306 = vpop.permute.xlu0 %1305
      %vm1307 = vcmp.lt.s32.totalorder %v424, 125
      %v1308 = vsel %vm1307, %v1304, %v1306
      %v1309 = vsel %vm1307, %v1306, %v1304
      %s1310 = scalar_lea.vmem %s2, 54
      %v1311 = vld [vmem:[%s1310] sm:$0x3]
      %v1313 = vlaneseq
      %v1314 = vshrl.u32 %v1313, 7
      %v1315 = vsub.s32 0, %v1314
      %v1316 = vrot.slane %v1311, %v1315
      %v1317 = vlaneseq
      %v1318 = vshrl.u32 %v1317, 7
      %v1319 = vsub.s32 1, %v1318
      %v1320 = vrot.slane %v1311, %v1319
      %v1323 = vmul.f32 %v1308, %v1316
      %v1324 = vmul.f32 %v1309, %v1320
      %s1325 = scalar_lea.vmem %s1, 108
      %v1326 = vld [vmem:[%s1325] sm:$0xf]
      %1328 = vset.pattern.permute.xlu0 0
      %1329 = vperm.xlu0 %1328, %v1326
      %v1330 = vpop.permute.xlu0 %1329
      %v1332 = vmul.f32 %v1323, %v1330
      %v1333 = vmul.f32 %v1324, %v1330
      %v1334 = vadd.f32 %v1301, %v1332
      %v1335 = vadd.f32 %v1302, %v1333
      %1336 = vrot.lane.b32.xlu0 %v415, 115
      %v1337 = vpop.permute.xlu0 %1336
      %1338 = vrot.lane.b32.xlu0 %v417, 115
      %v1339 = vpop.permute.xlu0 %1338
      %vm1340 = vcmp.lt.s32.totalorder %v424, 115
      %v1341 = vsel %vm1340, %v1337, %v1339
      %v1342 = vsel %vm1340, %v1339, %v1337
      %s1343 = scalar_lea.vmem %s2, 56
      %v1344 = vld [vmem:[%s1343] sm:$0x3]
      %v1346 = vlaneseq
      %v1347 = vshrl.u32 %v1346, 7
      %v1348 = vsub.s32 0, %v1347
      %v1349 = vrot.slane %v1344, %v1348
      %v1350 = vlaneseq
      %v1351 = vshrl.u32 %v1350, 7
      %v1352 = vsub.s32 1, %v1351
      %v1353 = vrot.slane %v1344, %v1352
      %v1356 = vmul.f32 %v1341, %v1349
      %v1357 = vmul.f32 %v1342, %v1353
      %s1358 = scalar_lea.vmem %s1, 112
      %v1359 = vld [vmem:[%s1358] sm:$0xf]
      %1361 = vset.pattern.permute.xlu0 0
      %1362 = vperm.xlu0 %1361, %v1359
      %v1363 = vpop.permute.xlu0 %1362
      %v1365 = vmul.f32 %v1356, %v1363
      %v1366 = vmul.f32 %v1357, %v1363
      %v1367 = vadd.f32 %v1334, %v1365
      %v1368 = vadd.f32 %v1335, %v1366
      %1369 = vrot.lane.b32.xlu0 %v415, 114
      %v1370 = vpop.permute.xlu0 %1369
      %1371 = vrot.lane.b32.xlu0 %v417, 114
      %v1372 = vpop.permute.xlu0 %1371
      %vm1373 = vcmp.lt.s32.totalorder %v424, 114
      %v1374 = vsel %vm1373, %v1370, %v1372
      %v1375 = vsel %vm1373, %v1372, %v1370
      %s1376 = scalar_lea.vmem %s2, 58
      %v1377 = vld [vmem:[%s1376] sm:$0x3]
      %v1379 = vlaneseq
      %v1380 = vshrl.u32 %v1379, 7
      %v1381 = vsub.s32 0, %v1380
      %v1382 = vrot.slane %v1377, %v1381
      %v1383 = vlaneseq
      %v1384 = vshrl.u32 %v1383, 7
      %v1385 = vsub.s32 1, %v1384
      %v1386 = vrot.slane %v1377, %v1385
      %v1389 = vmul.f32 %v1374, %v1382
      %v1390 = vmul.f32 %v1375, %v1386
      %s1391 = scalar_lea.vmem %s1, 116
      %v1392 = vld [vmem:[%s1391] sm:$0xf]
      %1394 = vset.pattern.permute.xlu0 0
      %1395 = vperm.xlu0 %1394, %v1392
      %v1396 = vpop.permute.xlu0 %1395
      %v1398 = vmul.f32 %v1389, %v1396
      %v1399 = vmul.f32 %v1390, %v1396
      %v1400 = vadd.f32 %v1367, %v1398
      %v1401 = vadd.f32 %v1368, %v1399
      %1402 = vrot.lane.b32.xlu0 %v415, 113
      %v1403 = vpop.permute.xlu0 %1402
      %1404 = vrot.lane.b32.xlu0 %v417, 113
      %v1405 = vpop.permute.xlu0 %1404
      %vm1406 = vcmp.lt.s32.totalorder %v424, 113
      %v1407 = vsel %vm1406, %v1403, %v1405
      %v1408 = vsel %vm1406, %v1405, %v1403
      %s1409 = scalar_lea.vmem %s2, 60
      %v1410 = vld [vmem:[%s1409] sm:$0x3]
      %v1412 = vlaneseq
      %v1413 = vshrl.u32 %v1412, 7
      %v1414 = vsub.s32 0, %v1413
      %v1415 = vrot.slane %v1410, %v1414
      %v1416 = vlaneseq
      %v1417 = vshrl.u32 %v1416, 7
      %v1418 = vsub.s32 1, %v1417
      %v1419 = vrot.slane %v1410, %v1418
      %v1422 = vmul.f32 %v1407, %v1415
      %v1423 = vmul.f32 %v1408, %v1419
      %s1424 = scalar_lea.vmem %s1, 120
      %v1425 = vld [vmem:[%s1424] sm:$0xf]
      %1427 = vset.pattern.permute.xlu0 0
      %1428 = vperm.xlu0 %1427, %v1425
      %v1429 = vpop.permute.xlu0 %1428
      %v1431 = vmul.f32 %v1422, %v1429
      %v1432 = vmul.f32 %v1423, %v1429
      %v1433 = vadd.f32 %v1400, %v1431
      %v1434 = vadd.f32 %v1401, %v1432
      %1435 = vrot.lane.b32.xlu0 %v415, 112
      %v1436 = vpop.permute.xlu0 %1435
      %1437 = vrot.lane.b32.xlu0 %v417, 112
      %v1438 = vpop.permute.xlu0 %1437
      %vm1439 = vcmp.lt.s32.totalorder %v424, 112
      %v1440 = vsel %vm1439, %v1436, %v1438
      %v1441 = vsel %vm1439, %v1438, %v1436
      %s1442 = scalar_lea.vmem %s2, 62
      %v1443 = vld [vmem:[%s1442] sm:$0x3]
      %v1445 = vlaneseq
      %v1446 = vshrl.u32 %v1445, 7
      %v1447 = vsub.s32 0, %v1446
      %v1448 = vrot.slane %v1443, %v1447
      %v1449 = vlaneseq
      %v1450 = vshrl.u32 %v1449, 7
      %v1451 = vsub.s32 1, %v1450
      %v1452 = vrot.slane %v1443, %v1451
      %v1455 = vmul.f32 %v1440, %v1448
      %v1456 = vmul.f32 %v1441, %v1452
      %s1457 = scalar_lea.vmem %s1, 124
      %v1458 = vld [vmem:[%s1457] sm:$0xf]
      %1460 = vset.pattern.permute.xlu0 0
      %1461 = vperm.xlu0 %1460, %v1458
      %v1462 = vpop.permute.xlu0 %1461
      %v1464 = vmul.f32 %v1455, %v1462
      %v1465 = vmul.f32 %v1456, %v1462
      %v1466 = vadd.f32 %v1433, %v1464
      %v1467 = vadd.f32 %v1434, %v1465
      %1468 = vrot.lane.b32.xlu0 %v415, 111
      %v1469 = vpop.permute.xlu0 %1468
      %1470 = vrot.lane.b32.xlu0 %v417, 111
      %v1471 = vpop.permute.xlu0 %1470
      %vm1472 = vcmp.lt.s32.totalorder %v424, 111
      %v1473 = vsel %vm1472, %v1469, %v1471
      %v1474 = vsel %vm1472, %v1471, %v1469
      %s1475 = scalar_lea.vmem %s2, 64
      %v1476 = vld [vmem:[%s1475] sm:$0x3]
      %v1478 = vlaneseq
      %v1479 = vshrl.u32 %v1478, 7
      %v1480 = vsub.s32 0, %v1479
      %v1481 = vrot.slane %v1476, %v1480
      %v1482 = vlaneseq
      %v1483 = vshrl.u32 %v1482, 7
      %v1484 = vsub.s32 1, %v1483
      %v1485 = vrot.slane %v1476, %v1484
      %v1488 = vmul.f32 %v1473, %v1481
      %v1489 = vmul.f32 %v1474, %v1485
      %s1490 = scalar_lea.vmem %s1, 128
      %v1491 = vld [vmem:[%s1490] sm:$0xf]
      %1493 = vset.pattern.permute.xlu0 0
      %1494 = vperm.xlu0 %1493, %v1491
      %v1495 = vpop.permute.xlu0 %1494
      %v1497 = vmul.f32 %v1488, %v1495
      %v1498 = vmul.f32 %v1489, %v1495
      %v1499 = vadd.f32 %v1466, %v1497
      %v1500 = vadd.f32 %v1467, %v1498
      %1501 = vrot.lane.b32.xlu0 %v415, 110
      %v1502 = vpop.permute.xlu0 %1501
      %1503 = vrot.lane.b32.xlu0 %v417, 110
      %v1504 = vpop.permute.xlu0 %1503
      %vm1505 = vcmp.lt.s32.totalorder %v424, 110
      %v1506 = vsel %vm1505, %v1502, %v1504
      %v1507 = vsel %vm1505, %v1504, %v1502
      %s1508 = scalar_lea.vmem %s2, 66
      %v1509 = vld [vmem:[%s1508] sm:$0x3]
      %v1511 = vlaneseq
      %v1512 = vshrl.u32 %v1511, 7
      %v1513 = vsub.s32 0, %v1512
      %v1514 = vrot.slane %v1509, %v1513
      %v1515 = vlaneseq
      %v1516 = vshrl.u32 %v1515, 7
      %v1517 = vsub.s32 1, %v1516
      %v1518 = vrot.slane %v1509, %v1517
      %v1521 = vmul.f32 %v1506, %v1514
      %v1522 = vmul.f32 %v1507, %v1518
      %s1523 = scalar_lea.vmem %s1, 132
      %v1524 = vld [vmem:[%s1523] sm:$0xf]
      %1526 = vset.pattern.permute.xlu0 0
      %1527 = vperm.xlu0 %1526, %v1524
      %v1528 = vpop.permute.xlu0 %1527
      %v1530 = vmul.f32 %v1521, %v1528
      %v1531 = vmul.f32 %v1522, %v1528
      %v1532 = vadd.f32 %v1499, %v1530
      %v1533 = vadd.f32 %v1500, %v1531
      %1534 = vrot.lane.b32.xlu0 %v415, 109
      %v1535 = vpop.permute.xlu0 %1534
      %1536 = vrot.lane.b32.xlu0 %v417, 109
      %v1537 = vpop.permute.xlu0 %1536
      %vm1538 = vcmp.lt.s32.totalorder %v424, 109
      %v1539 = vsel %vm1538, %v1535, %v1537
      %v1540 = vsel %vm1538, %v1537, %v1535
      %s1541 = scalar_lea.vmem %s2, 68
      %v1542 = vld [vmem:[%s1541] sm:$0x3]
      %v1544 = vlaneseq
      %v1545 = vshrl.u32 %v1544, 7
      %v1546 = vsub.s32 0, %v1545
      %v1547 = vrot.slane %v1542, %v1546
      %v1548 = vlaneseq
      %v1549 = vshrl.u32 %v1548, 7
      %v1550 = vsub.s32 1, %v1549
      %v1551 = vrot.slane %v1542, %v1550
      %v1554 = vmul.f32 %v1539, %v1547
      %v1555 = vmul.f32 %v1540, %v1551
      %s1556 = scalar_lea.vmem %s1, 136
      %v1557 = vld [vmem:[%s1556] sm:$0xf]
      %1559 = vset.pattern.permute.xlu0 0
      %1560 = vperm.xlu0 %1559, %v1557
      %v1561 = vpop.permute.xlu0 %1560
      %v1563 = vmul.f32 %v1554, %v1561
      %v1564 = vmul.f32 %v1555, %v1561
      %v1565 = vadd.f32 %v1532, %v1563
      %v1566 = vadd.f32 %v1533, %v1564
      %1567 = vrot.lane.b32.xlu0 %v415, 99
      %v1568 = vpop.permute.xlu0 %1567
      %1569 = vrot.lane.b32.xlu0 %v417, 99
      %v1570 = vpop.permute.xlu0 %1569
      %vm1571 = vcmp.lt.s32.totalorder %v424, 99
      %v1572 = vsel %vm1571, %v1568, %v1570
      %v1573 = vsel %vm1571, %v1570, %v1568
      %s1574 = scalar_lea.vmem %s2, 70
      %v1575 = vld [vmem:[%s1574] sm:$0x3]
      %v1577 = vlaneseq
      %v1578 = vshrl.u32 %v1577, 7
      %v1579 = vsub.s32 0, %v1578
      %v1580 = vrot.slane %v1575, %v1579
      %v1581 = vlaneseq
      %v1582 = vshrl.u32 %v1581, 7
      %v1583 = vsub.s32 1, %v1582
      %v1584 = vrot.slane %v1575, %v1583
      %v1587 = vmul.f32 %v1572, %v1580
      %v1588 = vmul.f32 %v1573, %v1584
      %s1589 = scalar_lea.vmem %s1, 140
      %v1590 = vld [vmem:[%s1589] sm:$0xf]
      %1592 = vset.pattern.permute.xlu0 0
      %1593 = vperm.xlu0 %1592, %v1590
      %v1594 = vpop.permute.xlu0 %1593
      %v1596 = vmul.f32 %v1587, %v1594
      %v1597 = vmul.f32 %v1588, %v1594
      %v1598 = vadd.f32 %v1565, %v1596
      %v1599 = vadd.f32 %v1566, %v1597
      %1600 = vrot.lane.b32.xlu0 %v415, 98
      %v1601 = vpop.permute.xlu0 %1600
      %1602 = vrot.lane.b32.xlu0 %v417, 98
      %v1603 = vpop.permute.xlu0 %1602
      %vm1604 = vcmp.lt.s32.totalorder %v424, 98
      %v1605 = vsel %vm1604, %v1601, %v1603
      %v1606 = vsel %vm1604, %v1603, %v1601
      %s1607 = scalar_lea.vmem %s2, 72
      %v1608 = vld [vmem:[%s1607] sm:$0x3]
      %v1610 = vlaneseq
      %v1611 = vshrl.u32 %v1610, 7
      %v1612 = vsub.s32 0, %v1611
      %v1613 = vrot.slane %v1608, %v1612
      %v1614 = vlaneseq
      %v1615 = vshrl.u32 %v1614, 7
      %v1616 = vsub.s32 1, %v1615
      %v1617 = vrot.slane %v1608, %v1616
      %v1620 = vmul.f32 %v1605, %v1613
      %v1621 = vmul.f32 %v1606, %v1617
      %s1622 = scalar_lea.vmem %s1, 144
      %v1623 = vld [vmem:[%s1622] sm:$0xf]
      %1625 = vset.pattern.permute.xlu0 0
      %1626 = vperm.xlu0 %1625, %v1623
      %v1627 = vpop.permute.xlu0 %1626
      %v1629 = vmul.f32 %v1620, %v1627
      %v1630 = vmul.f32 %v1621, %v1627
      %v1631 = vadd.f32 %v1598, %v1629
      %v1632 = vadd.f32 %v1599, %v1630
      %1633 = vrot.lane.b32.xlu0 %v415, 97
      %v1634 = vpop.permute.xlu0 %1633
      %1635 = vrot.lane.b32.xlu0 %v417, 97
      %v1636 = vpop.permute.xlu0 %1635
      %vm1637 = vcmp.lt.s32.totalorder %v424, 97
      %v1638 = vsel %vm1637, %v1634, %v1636
      %v1639 = vsel %vm1637, %v1636, %v1634
      %s1640 = scalar_lea.vmem %s2, 74
      %v1641 = vld [vmem:[%s1640] sm:$0x3]
      %v1643 = vlaneseq
      %v1644 = vshrl.u32 %v1643, 7
      %v1645 = vsub.s32 0, %v1644
      %v1646 = vrot.slane %v1641, %v1645
      %v1647 = vlaneseq
      %v1648 = vshrl.u32 %v1647, 7
      %v1649 = vsub.s32 1, %v1648
      %v1650 = vrot.slane %v1641, %v1649
      %v1653 = vmul.f32 %v1638, %v1646
      %v1654 = vmul.f32 %v1639, %v1650
      %s1655 = scalar_lea.vmem %s1, 148
      %v1656 = vld [vmem:[%s1655] sm:$0xf]
      %1658 = vset.pattern.permute.xlu0 0
      %1659 = vperm.xlu0 %1658, %v1656
      %v1660 = vpop.permute.xlu0 %1659
      %v1662 = vmul.f32 %v1653, %v1660
      %v1663 = vmul.f32 %v1654, %v1660
      %v1664 = vadd.f32 %v1631, %v1662
      %v1665 = vadd.f32 %v1632, %v1663
      %1666 = vrot.lane.b32.xlu0 %v415, 96
      %v1667 = vpop.permute.xlu0 %1666
      %1668 = vrot.lane.b32.xlu0 %v417, 96
      %v1669 = vpop.permute.xlu0 %1668
      %vm1670 = vcmp.lt.s32.totalorder %v424, 96
      %v1671 = vsel %vm1670, %v1667, %v1669
      %v1672 = vsel %vm1670, %v1669, %v1667
      %s1673 = scalar_lea.vmem %s2, 76
      %v1674 = vld [vmem:[%s1673] sm:$0x3]
      %v1676 = vlaneseq
      %v1677 = vshrl.u32 %v1676, 7
      %v1678 = vsub.s32 0, %v1677
      %v1679 = vrot.slane %v1674, %v1678
      %v1680 = vlaneseq
      %v1681 = vshrl.u32 %v1680, 7
      %v1682 = vsub.s32 1, %v1681
      %v1683 = vrot.slane %v1674, %v1682
      %v1686 = vmul.f32 %v1671, %v1679
      %v1687 = vmul.f32 %v1672, %v1683
      %s1688 = scalar_lea.vmem %s1, 152
      %v1689 = vld [vmem:[%s1688] sm:$0xf]
      %1691 = vset.pattern.permute.xlu0 0
      %1692 = vperm.xlu0 %1691, %v1689
      %v1693 = vpop.permute.xlu0 %1692
      %v1695 = vmul.f32 %v1686, %v1693
      %v1696 = vmul.f32 %v1687, %v1693
      %v1697 = vadd.f32 %v1664, %v1695
      %v1698 = vadd.f32 %v1665, %v1696
      %1699 = vrot.lane.b32.xlu0 %v415, 95
      %v1700 = vpop.permute.xlu0 %1699
      %1701 = vrot.lane.b32.xlu0 %v417, 95
      %v1702 = vpop.permute.xlu0 %1701
      %vm1703 = vcmp.lt.s32.totalorder %v424, 95
      %v1704 = vsel %vm1703, %v1700, %v1702
      %v1705 = vsel %vm1703, %v1702, %v1700
      %s1706 = scalar_lea.vmem %s2, 78
      %v1707 = vld [vmem:[%s1706] sm:$0x3]
      %v1709 = vlaneseq
      %v1710 = vshrl.u32 %v1709, 7
      %v1711 = vsub.s32 0, %v1710
      %v1712 = vrot.slane %v1707, %v1711
      %v1713 = vlaneseq
      %v1714 = vshrl.u32 %v1713, 7
      %v1715 = vsub.s32 1, %v1714
      %v1716 = vrot.slane %v1707, %v1715
      %v1719 = vmul.f32 %v1704, %v1712
      %v1720 = vmul.f32 %v1705, %v1716
      %s1721 = scalar_lea.vmem %s1, 156
      %v1722 = vld [vmem:[%s1721] sm:$0xf]
      %1724 = vset.pattern.permute.xlu0 0
      %1725 = vperm.xlu0 %1724, %v1722
      %v1726 = vpop.permute.xlu0 %1725
      %v1728 = vmul.f32 %v1719, %v1726
      %v1729 = vmul.f32 %v1720, %v1726
      %v1730 = vadd.f32 %v1697, %v1728
      %v1731 = vadd.f32 %v1698, %v1729
      %1732 = vrot.lane.b32.xlu0 %v415, 94
      %v1733 = vpop.permute.xlu0 %1732
      %1734 = vrot.lane.b32.xlu0 %v417, 94
      %v1735 = vpop.permute.xlu0 %1734
      %vm1736 = vcmp.lt.s32.totalorder %v424, 94
      %v1737 = vsel %vm1736, %v1733, %v1735
      %v1738 = vsel %vm1736, %v1735, %v1733
      %s1739 = scalar_lea.vmem %s2, 80
      %v1740 = vld [vmem:[%s1739] sm:$0x3]
      %v1742 = vlaneseq
      %v1743 = vshrl.u32 %v1742, 7
      %v1744 = vsub.s32 0, %v1743
      %v1745 = vrot.slane %v1740, %v1744
      %v1746 = vlaneseq
      %v1747 = vshrl.u32 %v1746, 7
      %v1748 = vsub.s32 1, %v1747
      %v1749 = vrot.slane %v1740, %v1748
      %v1752 = vmul.f32 %v1737, %v1745
      %v1753 = vmul.f32 %v1738, %v1749
      %s1754 = scalar_lea.vmem %s1, 160
      %v1755 = vld [vmem:[%s1754] sm:$0xf]
      %1757 = vset.pattern.permute.xlu0 0
      %1758 = vperm.xlu0 %1757, %v1755
      %v1759 = vpop.permute.xlu0 %1758
      %v1761 = vmul.f32 %v1752, %v1759
      %v1762 = vmul.f32 %v1753, %v1759
      %v1763 = vadd.f32 %v1730, %v1761
      %v1764 = vadd.f32 %v1731, %v1762
      %1765 = vrot.lane.b32.xlu0 %v415, 93
      %v1766 = vpop.permute.xlu0 %1765
      %1767 = vrot.lane.b32.xlu0 %v417, 93
      %v1768 = vpop.permute.xlu0 %1767
      %vm1769 = vcmp.lt.s32.totalorder %v424, 93
      %v1770 = vsel %vm1769, %v1766, %v1768
      %v1771 = vsel %vm1769, %v1768, %v1766
      %s1772 = scalar_lea.vmem %s2, 82
      %v1773 = vld [vmem:[%s1772] sm:$0x3]
      %v1775 = vlaneseq
      %v1776 = vshrl.u32 %v1775, 7
      %v1777 = vsub.s32 0, %v1776
      %v1778 = vrot.slane %v1773, %v1777
      %v1779 = vlaneseq
      %v1780 = vshrl.u32 %v1779, 7
      %v1781 = vsub.s32 1, %v1780
      %v1782 = vrot.slane %v1773, %v1781
      %v1785 = vmul.f32 %v1770, %v1778
      %v1786 = vmul.f32 %v1771, %v1782
      %s1787 = scalar_lea.vmem %s1, 164
      %v1788 = vld [vmem:[%s1787] sm:$0xf]
      %1790 = vset.pattern.permute.xlu0 0
      %1791 = vperm.xlu0 %1790, %v1788
      %v1792 = vpop.permute.xlu0 %1791
      %v1794 = vmul.f32 %v1785, %v1792
      %v1795 = vmul.f32 %v1786, %v1792
      %v1796 = vadd.f32 %v1763, %v1794
      %v1797 = vadd.f32 %v1764, %v1795
      %1798 = vrot.lane.b32.xlu0 %v415, 83
      %v1799 = vpop.permute.xlu0 %1798
      %1800 = vrot.lane.b32.xlu0 %v417, 83
      %v1801 = vpop.permute.xlu0 %1800
      %vm1802 = vcmp.lt.s32.totalorder %v424, 83
      %v1803 = vsel %vm1802, %v1799, %v1801
      %v1804 = vsel %vm1802, %v1801, %v1799
      %s1805 = scalar_lea.vmem %s2, 84
      %v1806 = vld [vmem:[%s1805] sm:$0x3]
      %v1808 = vlaneseq
      %v1809 = vshrl.u32 %v1808, 7
      %v1810 = vsub.s32 0, %v1809
      %v1811 = vrot.slane %v1806, %v1810
      %v1812 = vlaneseq
      %v1813 = vshrl.u32 %v1812, 7
      %v1814 = vsub.s32 1, %v1813
      %v1815 = vrot.slane %v1806, %v1814
      %v1818 = vmul.f32 %v1803, %v1811
      %v1819 = vmul.f32 %v1804, %v1815
      %s1820 = scalar_lea.vmem %s1, 168
      %v1821 = vld [vmem:[%s1820] sm:$0xf]
      %1823 = vset.pattern.permute.xlu0 0
      %1824 = vperm.xlu0 %1823, %v1821
      %v1825 = vpop.permute.xlu0 %1824
      %v1827 = vmul.f32 %v1818, %v1825
      %v1828 = vmul.f32 %v1819, %v1825
      %v1829 = vadd.f32 %v1796, %v1827
      %v1830 = vadd.f32 %v1797, %v1828
      %1831 = vrot.lane.b32.xlu0 %v415, 82
      %v1832 = vpop.permute.xlu0 %1831
      %1833 = vrot.lane.b32.xlu0 %v417, 82
      %v1834 = vpop.permute.xlu0 %1833
      %vm1835 = vcmp.lt.s32.totalorder %v424, 82
      %v1836 = vsel %vm1835, %v1832, %v1834
      %v1837 = vsel %vm1835, %v1834, %v1832
      %s1838 = scalar_lea.vmem %s2, 86
      %v1839 = vld [vmem:[%s1838] sm:$0x3]
      %v1841 = vlaneseq
      %v1842 = vshrl.u32 %v1841, 7
      %v1843 = vsub.s32 0, %v1842
      %v1844 = vrot.slane %v1839, %v1843
      %v1845 = vlaneseq
      %v1846 = vshrl.u32 %v1845, 7
      %v1847 = vsub.s32 1, %v1846
      %v1848 = vrot.slane %v1839, %v1847
      %v1851 = vmul.f32 %v1836, %v1844
      %v1852 = vmul.f32 %v1837, %v1848
      %s1853 = scalar_lea.vmem %s1, 172
      %v1854 = vld [vmem:[%s1853] sm:$0xf]
      %1856 = vset.pattern.permute.xlu0 0
      %1857 = vperm.xlu0 %1856, %v1854
      %v1858 = vpop.permute.xlu0 %1857
      %v1860 = vmul.f32 %v1851, %v1858
      %v1861 = vmul.f32 %v1852, %v1858
      %v1862 = vadd.f32 %v1829, %v1860
      %v1863 = vadd.f32 %v1830, %v1861
      %1864 = vrot.lane.b32.xlu0 %v415, 81
      %v1865 = vpop.permute.xlu0 %1864
      %1866 = vrot.lane.b32.xlu0 %v417, 81
      %v1867 = vpop.permute.xlu0 %1866
      %vm1868 = vcmp.lt.s32.totalorder %v424, 81
      %v1869 = vsel %vm1868, %v1865, %v1867
      %v1870 = vsel %vm1868, %v1867, %v1865
      %s1871 = scalar_lea.vmem %s2, 88
      %v1872 = vld [vmem:[%s1871] sm:$0x3]
      %v1874 = vlaneseq
      %v1875 = vshrl.u32 %v1874, 7
      %v1876 = vsub.s32 0, %v1875
      %v1877 = vrot.slane %v1872, %v1876
      %v1878 = vlaneseq
      %v1879 = vshrl.u32 %v1878, 7
      %v1880 = vsub.s32 1, %v1879
      %v1881 = vrot.slane %v1872, %v1880
      %v1884 = vmul.f32 %v1869, %v1877
      %v1885 = vmul.f32 %v1870, %v1881
      %s1886 = scalar_lea.vmem %s1, 176
      %v1887 = vld [vmem:[%s1886] sm:$0xf]
      %1889 = vset.pattern.permute.xlu0 0
      %1890 = vperm.xlu0 %1889, %v1887
      %v1891 = vpop.permute.xlu0 %1890
      %v1893 = vmul.f32 %v1884, %v1891
      %v1894 = vmul.f32 %v1885, %v1891
      %v1895 = vadd.f32 %v1862, %v1893
      %v1896 = vadd.f32 %v1863, %v1894
      %1897 = vrot.lane.b32.xlu0 %v415, 80
      %v1898 = vpop.permute.xlu0 %1897
      %1899 = vrot.lane.b32.xlu0 %v417, 80
      %v1900 = vpop.permute.xlu0 %1899
      %vm1901 = vcmp.lt.s32.totalorder %v424, 80
      %v1902 = vsel %vm1901, %v1898, %v1900
      %v1903 = vsel %vm1901, %v1900, %v1898
      %s1904 = scalar_lea.vmem %s2, 90
      %v1905 = vld [vmem:[%s1904] sm:$0x3]
      %v1907 = vlaneseq
      %v1908 = vshrl.u32 %v1907, 7
      %v1909 = vsub.s32 0, %v1908
      %v1910 = vrot.slane %v1905, %v1909
      %v1911 = vlaneseq
      %v1912 = vshrl.u32 %v1911, 7
      %v1913 = vsub.s32 1, %v1912
      %v1914 = vrot.slane %v1905, %v1913
      %v1917 = vmul.f32 %v1902, %v1910
      %v1918 = vmul.f32 %v1903, %v1914
      %s1919 = scalar_lea.vmem %s1, 180
      %v1920 = vld [vmem:[%s1919] sm:$0xf]
      %1922 = vset.pattern.permute.xlu0 0
      %1923 = vperm.xlu0 %1922, %v1920
      %v1924 = vpop.permute.xlu0 %1923
      %v1926 = vmul.f32 %v1917, %v1924
      %v1927 = vmul.f32 %v1918, %v1924
      %v1928 = vadd.f32 %v1895, %v1926
      %v1929 = vadd.f32 %v1896, %v1927
      %1930 = vrot.lane.b32.xlu0 %v415, 79
      %v1931 = vpop.permute.xlu0 %1930
      %1932 = vrot.lane.b32.xlu0 %v417, 79
      %v1933 = vpop.permute.xlu0 %1932
      %vm1934 = vcmp.lt.s32.totalorder %v424, 79
      %v1935 = vsel %vm1934, %v1931, %v1933
      %v1936 = vsel %vm1934, %v1933, %v1931
      %s1937 = scalar_lea.vmem %s2, 92
      %v1938 = vld [vmem:[%s1937] sm:$0x3]
      %v1940 = vlaneseq
      %v1941 = vshrl.u32 %v1940, 7
      %v1942 = vsub.s32 0, %v1941
      %v1943 = vrot.slane %v1938, %v1942
      %v1944 = vlaneseq
      %v1945 = vshrl.u32 %v1944, 7
      %v1946 = vsub.s32 1, %v1945
      %v1947 = vrot.slane %v1938, %v1946
      %v1950 = vmul.f32 %v1935, %v1943
      %v1951 = vmul.f32 %v1936, %v1947
      %s1952 = scalar_lea.vmem %s1, 184
      %v1953 = vld [vmem:[%s1952] sm:$0xf]
      %1955 = vset.pattern.permute.xlu0 0
      %1956 = vperm.xlu0 %1955, %v1953
      %v1957 = vpop.permute.xlu0 %1956
      %v1959 = vmul.f32 %v1950, %v1957
      %v1960 = vmul.f32 %v1951, %v1957
      %v1961 = vadd.f32 %v1928, %v1959
      %v1962 = vadd.f32 %v1929, %v1960
      %1963 = vrot.lane.b32.xlu0 %v415, 78
      %v1964 = vpop.permute.xlu0 %1963
      %1965 = vrot.lane.b32.xlu0 %v417, 78
      %v1966 = vpop.permute.xlu0 %1965
      %vm1967 = vcmp.lt.s32.totalorder %v424, 78
      %v1968 = vsel %vm1967, %v1964, %v1966
      %v1969 = vsel %vm1967, %v1966, %v1964
      %s1970 = scalar_lea.vmem %s2, 94
      %v1971 = vld [vmem:[%s1970] sm:$0x3]
      %v1973 = vlaneseq
      %v1974 = vshrl.u32 %v1973, 7
      %v1975 = vsub.s32 0, %v1974
      %v1976 = vrot.slane %v1971, %v1975
      %v1977 = vlaneseq
      %v1978 = vshrl.u32 %v1977, 7
      %v1979 = vsub.s32 1, %v1978
      %v1980 = vrot.slane %v1971, %v1979
      %v1983 = vmul.f32 %v1968, %v1976
      %v1984 = vmul.f32 %v1969, %v1980
      %s1985 = scalar_lea.vmem %s1, 188
      %v1986 = vld [vmem:[%s1985] sm:$0xf]
      %1988 = vset.pattern.permute.xlu0 0
      %1989 = vperm.xlu0 %1988, %v1986
      %v1990 = vpop.permute.xlu0 %1989
      %v1992 = vmul.f32 %v1983, %v1990
      %v1993 = vmul.f32 %v1984, %v1990
      %v1994 = vadd.f32 %v1961, %v1992
      %v1995 = vadd.f32 %v1962, %v1993
      %1996 = vrot.lane.b32.xlu0 %v415, 77
      %v1997 = vpop.permute.xlu0 %1996
      %1998 = vrot.lane.b32.xlu0 %v417, 77
      %v1999 = vpop.permute.xlu0 %1998
      %vm2000 = vcmp.lt.s32.totalorder %v424, 77
      %v2001 = vsel %vm2000, %v1997, %v1999
      %v2002 = vsel %vm2000, %v1999, %v1997
      %s2003 = scalar_lea.vmem %s2, 96
      %v2004 = vld [vmem:[%s2003] sm:$0x3]
      %v2006 = vlaneseq
      %v2007 = vshrl.u32 %v2006, 7
      %v2008 = vsub.s32 0, %v2007
      %v2009 = vrot.slane %v2004, %v2008
      %v2010 = vlaneseq
      %v2011 = vshrl.u32 %v2010, 7
      %v2012 = vsub.s32 1, %v2011
      %v2013 = vrot.slane %v2004, %v2012
      %v2016 = vmul.f32 %v2001, %v2009
      %v2017 = vmul.f32 %v2002, %v2013
      %s2018 = scalar_lea.vmem %s1, 192
      %v2019 = vld [vmem:[%s2018] sm:$0xf]
      %2021 = vset.pattern.permute.xlu0 0
      %2022 = vperm.xlu0 %2021, %v2019
      %v2023 = vpop.permute.xlu0 %2022
      %v2025 = vmul.f32 %v2016, %v2023
      %v2026 = vmul.f32 %v2017, %v2023
      %v2027 = vadd.f32 %v1994, %v2025
      %v2028 = vadd.f32 %v1995, %v2026
      %v2029 = vld [vmem:[%s3] sm:$0xf]
      %2031 = vset.pattern.permute.xlu0 0
      %2032 = vperm.xlu0 %2031, %v2029
      %v2033 = vpop.permute.xlu0 %2032
      %v2035 = vadd.f32 %v2027, %v2033
      %v2036 = vadd.f32 %v2028, %v2033
      %vm2037 = vcmask 1043456
      %v2038 = vsel %vm2037, %v2035, 0.0
      %v2039 = vsel %vm2037, %v2036, 0.0
      %v2040 = vadd.f32 %v2038, %v2039
      %2041 = vadd.xlane.f32.xlu0 %v2040
      %v2042 = vpop.xlane.xlu0 %2041
      %v2043 = vrot.slane %v2042, 4
      %v2044 = vadd.f32 %v2042, %v2043
      %v2045 = vrot.slane %v2044, 2
      %v2046 = vadd.f32 %v2044, %v2045
      %v2047 = vrot.slane %v2046, 1
      %v2048 = vadd.f32 %v2046, %v2047
      %s2049 = vtos %v2048
      %v2050 = vrcp.pop 1024.0
      %s2051 = vtos %v2050
      %s2052 = smul.f32 %s2049, %s2051
      %v2053 = vstv %s2052
      %v2054 = vsub.f32 %v2035, %v2053
      %v2055 = vsub.f32 %v2036, %v2053
      %v2056 = vmul.f32 %v2054, %v2054
      %v2057 = vmul.f32 %v2055, %v2055
      %v2058 = vsel %vm2037, %v2056, 0.0
      %v2059 = vsel %vm2037, %v2057, 0.0
      %v2060 = vadd.f32 %v2058, %v2059
      %2061 = vadd.xlane.f32.xlu0 %v2060
      %v2062 = vpop.xlane.xlu0 %2061
      %v2063 = vrot.slane %v2062, 4
      %v2064 = vadd.f32 %v2062, %v2063
      %v2065 = vrot.slane %v2064, 2
      %v2066 = vadd.f32 %v2064, %v2065
      %v2067 = vrot.slane %v2066, 1
      %v2068 = vadd.f32 %v2066, %v2067
      %s2069 = vtos %v2068
      %v2070 = vrcp.pop 1024.0
      %s2071 = vtos %v2070
      %s2072 = smul.f32 %s2069, %s2071
      %s2073 = sadd.f32 %s2072, 1e-05
      %v2074 = vstv %s2073
      %v2075 = vrsqrt.pop %v2074
      %s2076 = vtos %v2075
      %v2077 = vstv %s2076
      %v2078 = vmul.f32 %v2054, %v2077
      %v2079 = vmul.f32 %v2055, %v2077
      %v2080 = vld [vmem:[%s4] sm:$0xf]
      %2082 = vset.pattern.permute.xlu0 0
      %2083 = vperm.xlu0 %2082, %v2080
      %v2084 = vpop.permute.xlu0 %2083
      %v2086 = vmul.f32 %v2078, %v2084
      %v2087 = vmul.f32 %v2079, %v2084
      %v2088 = vld [vmem:[%s5] sm:$0xf]
      %2090 = vset.pattern.permute.xlu0 0
      %2091 = vperm.xlu0 %2090, %v2088
      %v2092 = vpop.permute.xlu0 %2091
      %v2094 = vadd.f32 %v2086, %v2092
      %v2095 = vadd.f32 %v2087, %v2092
      %v2096 = vld [vmem:[%s6] sm:$0xf]
      %v2097 = vld [vmem:[%s6 + $0x4] sm:$0xf]
      %v2098 = vpack.c.bf16 %v2094, %v2094
      %v2099 = vpack.c.bf16 %v2095, %v2095
      %v2100 = vld [vmem:[%s7] sm:$0xff]
      %v2101 = vld [vmem:[%s7 + $0x8] sm:$0xff]
      %2103 = vset.pattern.permute.xlu0 0
      %2104 = vperm.xlu0 %2103, %v2100
      %v2105 = vpop.permute.xlu0 %2104
      %2108 = vset.pattern.permute.xlu0 0
      %2109 = vperm.xlu0 %2108, %v2101
      %v2110 = vpop.permute.xlu0 %2109
      %v2114 = vunpack.c.l.b16 %v2096
      %v2115 = vunpack.c.l.b16 %v2097
      %v2116 = vpack.c.b16 %v2115, %v2114
      %vm2117 = vcmask 31744
      %v2119 = vsel %vm2117, %v2116, 0
      %vm2121 = vcmask 1041408
      %v2123 = vsel %vm2121, %v2098, 0
      %v2126 = vsel %vm2121, %v2099, 0
      %2128 = vmatprep.subr.bf16.mxu0 %v2126
      %2129 = vmatpush1.bf16.msra.mxu0 %v2123
      %2130 = vmatprep.subr.bf16.mxu0 0
      %2131 = vmatpush1.bf16.msra.mxu0 0
      %2132 = vmatprep.subr.bf16.mxu0 0
      %2133 = vmatpush1.bf16.msra.mxu0 0
      %2134 = vmatprep.subr.bf16.mxu0 0
      %2135 = vmatpush1.bf16.msra.mxu0 0
      %2136 = vmatprep.subr.bf16.mxu0 0
      %2137 = vmatpush1.bf16.msra.mxu0 0
      %2138 = vmatprep.subr.bf16.mxu0 0
      %2139 = vmatpush1.bf16.msra.mxu0 0
      %2140 = vmatprep.subr.bf16.mxu0 0
      %2141 = vmatpush1.bf16.msra.mxu0 0
      %2142 = vmatprep.subr.bf16.mxu0 0
      %2143 = vmatpush1.bf16.msra.mxu0 0
      %2144 = vmatprep.subr.bf16.mxu0 0
      %2145 = vmatpush1.bf16.msra.mxu0 0
      %2146 = vmatprep.subr.bf16.mxu0 0
      %2147 = vmatpush1.bf16.msra.mxu0 0
      %2148 = vmatprep.subr.bf16.mxu0 0
      %2149 = vmatpush1.bf16.msra.mxu0 0
      %2150 = vmatprep.subr.bf16.mxu0 0
      %2151 = vmatpush1.bf16.msra.mxu0 0
      %2152 = vmatprep.subr.bf16.mxu0 0
      %2153 = vmatpush1.bf16.msra.mxu0 0
      %2154 = vmatprep.subr.bf16.mxu0 0
      %2155 = vmatpush1.bf16.msra.mxu0 0
      %2156 = vmatprep.subr.bf16.mxu0 0
      %2157 = vmatpush1.bf16.msra.mxu0 0
      %2158 = vmatprep.subr.bf16.mxu0 0
      %2159 = vmatpush1.bf16.msra.mxu0 0
      %2160 = vmatprep.mubr.bf16.mxu0 0
      %2161 = vmatmul.mubr.bf16.gmra.mrb[0].mxu0 %v2119
      %v2162 = vpop.f32.mrb[0].mxu0
      %v2163 = vadd.f32 %v2105, %v2162
      %v2164 = vpop.f32.mrb[0].mxu0
      %v2165 = vadd.f32 %v2105, %v2164
      %v2166 = vpop.f32.mrb[0].mxu0
      %v2167 = vadd.f32 %v2110, %v2166
      %v2168 = vpop.f32.mrb[0].mxu0
      %v2169 = vadd.f32 %v2110, %v2168
      %2170 = vdwg.mxu0
      %v2171 = vmul.f32 %v2163, 0.5
      %v2172 = vmul.f32 %v2165, 0.5
      %v2173 = vmul.f32 %v2167, 0.5
      %v2174 = vmul.f32 %v2169, 0.5
      %v2175 = vmul.f32 %v2163, 0.70710677
      %v2176 = vmul.f32 %v2165, 0.70710677
      %v2177 = vmul.f32 %v2167, 0.70710677
      %v2178 = vmul.f32 %v2169, 0.70710677
      %v2179 = verf.f32.pop %v2175
      %v2180 = verf.f32.pop %v2176
      %v2181 = verf.f32.pop %v2177
      %v2182 = verf.f32.pop %v2178
      %v2183 = vadd.f32 %v2179, 1.0
      %v2184 = vadd.f32 %v2180, 1.0
      %v2185 = vadd.f32 %v2181, 1.0
      %v2186 = vadd.f32 %v2182, 1.0
      %v2187 = vmul.f32 %v2171, %v2183
      %v2188 = vmul.f32 %v2172, %v2184
      %v2189 = vmul.f32 %v2173, %v2185
      %v2190 = vmul.f32 %v2174, %v2186
      %v2191 = vld [vmem:[%s8] sm:$0xf]
      %v2192 = vpack.c.bf16 %v2189, %v2187
      %v2193 = vpack.c.bf16 %v2190, %v2188
      %v2194 = vld [vmem:[%s9] sm:$0xff]
      %2196 = vset.pattern.permute.xlu0 0
      %2197 = vperm.xlu0 %2196, %v2194
      %v2198 = vpop.permute.xlu0 %2197
      %vm2200 = vcmask 130048
      %v2202 = vsel %vm2200, %v2191, 0
      %2204 = vmatprep.subr.bf16.mxu0 %v2193
      %2205 = vmatpush1.bf16.msra.mxu0 %v2192
      %2206 = vmatprep.subr.bf16.mxu0 0
      %2207 = vmatpush1.bf16.msra.mxu0 0
      %2208 = vmatprep.subr.bf16.mxu0 0
      %2209 = vmatpush1.bf16.msra.mxu0 0
      %2210 = vmatprep.subr.bf16.mxu0 0
      %2211 = vmatpush1.bf16.msra.mxu0 0
      %2212 = vmatprep.subr.bf16.mxu0 0
      %2213 = vmatpush1.bf16.msra.mxu0 0
      %2214 = vmatprep.subr.bf16.mxu0 0
      %2215 = vmatpush1.bf16.msra.mxu0 0
      %2216 = vmatprep.subr.bf16.mxu0 0
      %2217 = vmatpush1.bf16.msra.mxu0 0
      %2218 = vmatprep.subr.bf16.mxu0 0
      %2219 = vmatpush1.bf16.msra.mxu0 0
      %2220 = vmatprep.subr.bf16.mxu0 0
      %2221 = vmatpush1.bf16.msra.mxu0 0
      %2222 = vmatprep.subr.bf16.mxu0 0
      %2223 = vmatpush1.bf16.msra.mxu0 0
      %2224 = vmatprep.subr.bf16.mxu0 0
      %2225 = vmatpush1.bf16.msra.mxu0 0
      %2226 = vmatprep.subr.bf16.mxu0 0
      %2227 = vmatpush1.bf16.msra.mxu0 0
      %2228 = vmatprep.subr.bf16.mxu0 0
      %2229 = vmatpush1.bf16.msra.mxu0 0
      %2230 = vmatprep.subr.bf16.mxu0 0
      %2231 = vmatpush1.bf16.msra.mxu0 0
      %2232 = vmatprep.subr.bf16.mxu0 0
      %2233 = vmatpush1.bf16.msra.mxu0 0
      %2234 = vmatprep.subr.bf16.mxu0 0
      %2235 = vmatpush1.bf16.msra.mxu0 0
      %2236 = vmatprep.mubr.bf16.mxu0 0
      %2237 = vmatmul.mubr.bf16.gmra.mrb[0].mxu0 %v2202
      %v2238 = vpop.f32.mrb[0].mxu0
      %v2239 = vadd.f32 %v2198, %v2238
      %v2240 = vpop.f32.mrb[0].mxu0
      %v2241 = vadd.f32 %v2198, %v2240
      %v2242 = vpop.f32.mrb[0].mxu0
      %v2243 = vpop.f32.mrb[0].mxu0
      %2244 = vdwg.mxu0
      %v2245 = vld [vmem:[%s10] sm:$0xf]
      %v2246 = vpack.c.bf16 %v415, %v415
      %v2247 = vpack.c.bf16 %v417, %v417
      %v2248 = vld [vmem:[%s11] sm:$0xff]
      %2250 = vset.pattern.permute.xlu0 0
      %2251 = vperm.xlu0 %2250, %v2248
      %v2252 = vpop.permute.xlu0 %2251
      %v2255 = vsel %vm2117, %v2245, 0
      %v2258 = vsel %vm2121, %v2246, 0
      %v2261 = vsel %vm2121, %v2247, 0
      %2263 = vmatprep.subr.bf16.mxu0 %v2261
      %2264 = vmatpush1.bf16.msra.mxu0 %v2258
      %2265 = vmatprep.subr.bf16.mxu0 0
      %2266 = vmatpush1.bf16.msra.mxu0 0
      %2267 = vmatprep.subr.bf16.mxu0 0
      %2268 = vmatpush1.bf16.msra.mxu0 0
      %2269 = vmatprep.subr.bf16.mxu0 0
      %2270 = vmatpush1.bf16.msra.mxu0 0
      %2271 = vmatprep.subr.bf16.mxu0 0
      %2272 = vmatpush1.bf16.msra.mxu0 0
      %2273 = vmatprep.subr.bf16.mxu0 0
      %2274 = vmatpush1.bf16.msra.mxu0 0
      %2275 = vmatprep.subr.bf16.mxu0 0
      %2276 = vmatpush1.bf16.msra.mxu0 0
      %2277 = vmatprep.subr.bf16.mxu0 0
      %2278 = vmatpush1.bf16.msra.mxu0 0
      %2279 = vmatprep.subr.bf16.mxu0 0
      %2280 = vmatpush1.bf16.msra.mxu0 0
      %2281 = vmatprep.subr.bf16.mxu0 0
      %2282 = vmatpush1.bf16.msra.mxu0 0
      %2283 = vmatprep.subr.bf16.mxu0 0
      %2284 = vmatpush1.bf16.msra.mxu0 0
      %2285 = vmatprep.subr.bf16.mxu0 0
      %2286 = vmatpush1.bf16.msra.mxu0 0
      %2287 = vmatprep.subr.bf16.mxu0 0
      %2288 = vmatpush1.bf16.msra.mxu0 0
      %2289 = vmatprep.subr.bf16.mxu0 0
      %2290 = vmatpush1.bf16.msra.mxu0 0
      %2291 = vmatprep.subr.bf16.mxu0 0
      %2292 = vmatpush1.bf16.msra.mxu0 0
      %2293 = vmatprep.subr.bf16.mxu0 0
      %2294 = vmatpush1.bf16.msra.mxu0 0
      %2295 = vmatprep.mubr.bf16.mxu0 0
      %2296 = vmatmul.mubr.bf16.gmra.mrb[0].mxu0 %v2255
      %v2297 = vpop.f32.mrb[0].mxu0
      %v2298 = vadd.f32 %v2252, %v2297
      %v2299 = vpop.f32.mrb[0].mxu0
      %v2300 = vadd.f32 %v2252, %v2299
      %v2301 = vpop.f32.mrb[0].mxu0
      %v2302 = vpop.f32.mrb[0].mxu0
      %2303 = vdwg.mxu0
      %v2304 = vadd.f32 %v2239, %v2298
      %v2305 = vadd.f32 %v2241, %v2300
      %2306 = vst [vmem:[%s413] sm:$0xff] %v2304
      %2307 = vst [vmem:[%s413 + $0x8] sm:$0xff] %v2305
      %p2308 = scmp.lt.s32.totalorder %s23, 1
      %s2309 = scalar_select %p2308, %s23, 1
      %s2310 = smul.addr %s2309, 2
      %s2311 = smul.addr %s2310, 8
      %s2312 = scalar_lea.vmem %s12, %s2311
      // Predicated region
      $region69: #{convnext_block.1} parent=67 // pred_check
        %p2313 = pneg %p298
      $region70: #{convnext_block.1} parent=67 // pred_check_branch
        %2315 = sbr.rel (%p2313) target = $region72
      $region71: #{convnext_block.1} parent=67 // pred_region
        _
      $region72: #{convnext_block.1} parent=67 // pred_fallthru
        _
    $region68: #{convnext_block.1} parent=5 // pred_fallthru
      _
    %p2316 = scmp.le.s32.totalorder 2, %s18
    // Predicated region
    $region73: #{convnext_block.1} parent=5 // pred_check
      %p2317 = pneg %p2316
    $region74: #{convnext_block.1} parent=5 // pred_check_branch
      %2319 = sbr.rel (%p2317) target = $region76
    $region75: #{convnext_block.1} parent=5 // pred_region
      %s2320 = ssub.s32 %s18, 2
      // Predicated region
      $region77: #{convnext_block.1} parent=75 // pred_check
        %p2321 = pneg %p304
      $region78: #{convnext_block.1} parent=75 // pred_check_branch
        %2323 = sbr.rel (%p2321) target = $region80
      $region79: #{convnext_block.1} parent=75 // pred_region
        %p2324 = scmp.lt.s32.totalorder %s24, 1
        %s2325 = scalar_select %p2324, %s24, 1
        %s2326 = smul.addr %s2325, 2
        %s2327 = smul.addr %s2326, 8
        %s2328 = scalar_lea.vmem %s12, %s2327
      $region80: #{convnext_block.1} parent=75 // pred_fallthru
        _
    $region76: #{convnext_block.1} parent=5 // pred_fallthru
      _
  $region6: #{convnext_block.1} parent=0 // loop_footer
    %s22 = sadd.s32 1, %s18
  $region7: #{convnext_block.1} parent=0 // loop_footer_branch
    %17 = sbr.rel target = $region3
  $region8: #{convnext_block.1} parent=0 // loop_exit
    _

</llo_original>
